<compile_context>
chip_gen: v6e
topology: v6e:2x2x1
jax: 0.10.0
libtpu: 0.0.40
codegen_flags: <defaults>
</compile_context>

<pallas_src>
from functools import partial

import jax
import jax.numpy as jnp
from jax.experimental import pallas as pl
from jax.experimental.pallas import tpu as pltpu


def _relu(x):
    return jnp.maximum(x, 0.0)


# ---------------------------------------------------------------------------
# Fused kernel: STN (conv stack + max + fc head) -> trans fold -> feat stack + max
# ---------------------------------------------------------------------------
def fused_kernel(x_ref,
                 sw1, sb1, sw2, sb2, sw3, sb3,          # STN conv1..3 (BN folded)
                 fw1, fb1, fw2, fb2, fw3p, fb3p,        # STN fc1/fc2 (bf16) + fc3 lane-padded (iden in bias)
                 wfold, bfold,                          # fc3(+iden) pre-combined with feat conv1 weight
                 cb1, cw2, cb2, cw3, cb3,               # feat conv stack (conv1 weight lives in wfold)
                 trans_ref, gfeat_ref):
    Bt = x_ref.shape[1] // 3
    Npad = x_ref.shape[2]

    # ---- one small input transpose: (Bt*3, Npad) -> (Npad, Bt*3) points-major ----
    xc = x_ref[0]                               # (Bt*3, Npad) f32
    xT = jnp.transpose(xc)                      # (Npad, Bt*3): column 3b+k = sample b, channel k

    w1r = [sw1[k:k + 1, :] for k in range(3)]   # (1, 64) weight rows, hoisted out of the loop

    # ---- STN conv1 (K=3) as VPU broadcast MACs per sample, stacked points-major ----
    h = jnp.concatenate(
        [xT[:, 3 * b + 0:3 * b + 1] * w1r[0]
         + xT[:, 3 * b + 1:3 * b + 2] * w1r[1]
         + xT[:, 3 * b + 2:3 * b + 3] * w1r[2] for b in range(Bt)], axis=0)   # (Bt*Npad, 64)
    h = _relu(h + sb1[...])

    # ---- STN conv2/conv3: tall bf16 matmuls, f32 accumulation ----
    h = _relu(jnp.dot(h.astype(jnp.bfloat16), sw2[...],
                      preferred_element_type=jnp.float32) + sb2[...])         # (Bt*Npad, 128)
    h = _relu(jnp.dot(h.astype(jnp.bfloat16), sw3[...],
                      preferred_element_type=jnp.float32) + sb3[...])         # (Bt*Npad, 256)

    # ---- per-sample max over points (Npad % 8 == 0 -> clean sublane reduction) ----
    g = jnp.max(h.reshape(Bt, Npad, 256), axis=1)                             # (Bt, 256)

    # ---- STN fc head (fc1/fc2 bf16, fc3 f32) ----
    t = _relu(jnp.dot(g.astype(jnp.bfloat16), fw1[...],
                      preferred_element_type=jnp.float32) + fb1[...])         # (Bt, 128)
    t = _relu(jnp.dot(t.astype(jnp.bfloat16), fw2[...],
                      preferred_element_type=jnp.float32) + fb2[...])         # (Bt, 64)

    # trans output: lane-dense (Bt, 128); fc3 zero-padded to 128 cols, identity in bias.
    trans_ref[0] = jnp.dot(t, fw3p[...], preferred_element_type=jnp.float32) + fb3p[...]

    # trans folded into feat conv1:  m_all[b, 64*k + c] = (trans_b @ C1w)[k, c]
    m_all = jnp.dot(t, wfold[...], preferred_element_type=jnp.float32) + bfold[...]   # (Bt, 192)

    # ---- feat conv1 with trans folded in: z_b = X_b @ (trans_b @ C1w), via MACs ----
    h = jnp.concatenate(
        [xT[:, 3 * b + 0:3 * b + 1] * m_all[b:b + 1, 0:64]
         + xT[:, 3 * b + 1:3 * b + 2] * m_all[b:b + 1, 64:128]
         + xT[:, 3 * b + 2:3 * b + 3] * m_all[b:b + 1, 128:192] for b in range(Bt)],
        axis=0)                                                               # (Bt*Npad, 64)
    h = _relu(h + cb1[...])

    # ---- feat conv2/conv3 (bn3: no relu) ----
    h = _relu(jnp.dot(h.astype(jnp.bfloat16), cw2[...],
                      preferred_element_type=jnp.float32) + cb2[...])         # (Bt*Npad, 128)
    h = jnp.dot(h.astype(jnp.bfloat16), cw3[...],
                preferred_element_type=jnp.float32) + cb3[...]                # (Bt*Npad, 256)

    gfeat_ref[0] = jnp.max(h.reshape(Bt, Npad, 256), axis=1)                  # (Bt, 256)


# ---------------------------------------------------------------------------
# pallas_call wrapper
# ---------------------------------------------------------------------------
def _param_specs(params):
    # Weights/biases: full-array blocks, constant index map (kept resident across steps).
    return [pl.BlockSpec(p.shape, lambda i: (0, 0)) for p in params]


def pointnet_call(xg, params, Bt):
    G, Bt3, Npad = xg.shape
    return pl.pallas_call(
        fused_kernel,
        out_shape=(jax.ShapeDtypeStruct((G, Bt, 128), jnp.float32),   # trans (lane-dense slab)
                   jax.ShapeDtypeStruct((G, Bt, 256), jnp.float32)),  # global feature
        grid_spec=pltpu.PrefetchScalarGridSpec(
            num_scalar_prefetch=0, grid=(G,),
            in_specs=[pl.BlockSpec((1, Bt3, Npad), lambda i: (i, 0, 0))] + _param_specs(params),
            out_specs=[pl.BlockSpec((1, Bt, 128), lambda i: (i, 0, 0)),
                       pl.BlockSpec((1, Bt, 256), lambda i: (i, 0, 0))]),
        compiler_params=pltpu.CompilerParams(
            dimension_semantics=("parallel",),
            vmem_limit_bytes=40 * 1024 * 1024),
    )(xg, *params)


# ---------------------------------------------------------------------------
# Batch-tile heuristic (chip-aware: only require >=2 grid steps on multi-TC chips)
# ---------------------------------------------------------------------------
def _num_tensorcores():
    # Best-effort; only tunes a heuristic. Falls back to 1 (v5e/v6e behavior).
    try:
        info = pltpu.get_tpu_info()
        for attr in ("num_cores", "core_count", "num_tensorcores", "tensorcores_per_chip"):
            v = getattr(info, attr, None)
            if isinstance(v, int) and v > 0:
                return v
    except Exception:
        pass
    try:
        v = getattr(jax.devices()[0], "num_cores", None)
        if isinstance(v, int) and v > 0:
            return v
    except Exception:
        pass
    return 1


def _pick_bt(B, Npad, max_rows=2048):
    # Maximize Bt*Npad (amortize per-step overhead, fill the 256-wide MXU) under a
    # live-activation row cap; Bt must divide B. On multi-TC chips (v7x) prefer
    # >= num_cores grid steps so the "parallel" batch axis uses every TensorCore.
    divs = [d for d in range(1, B + 1) if B % d == 0 and d * Npad <= max_rows]
    if not divs:
        return 1
    ncores = _num_tensorcores()
    if ncores > 1:
        multi = [d for d in divs if B // d >= ncores]
        if multi:
            return max(multi)
    return max(divs)


# ---------------------------------------------------------------------------
# Parameter setup (deterministic) + BN folding (eval-mode BN, PyTorch defaults)
# ---------------------------------------------------------------------------
def _fold_bn(w_io, b_row, gamma, beta, mean, var, eps=1e-5):
    scale = gamma / jnp.sqrt(var + eps)
    return w_io * scale[None, :], (b_row - mean[None, :]) * scale[None, :] + beta[None, :]


def _bn_defaults(c):
    return (jnp.ones((c,), jnp.float32), jnp.zeros((c,), jnp.float32),
            jnp.zeros((c,), jnp.float32), jnp.ones((c,), jnp.float32))


def _linear(key, cin, cout):
    kw, kb = jax.random.split(key)
    w = jax.random.normal(kw, (cin, cout), jnp.float32) * (1.0 / jnp.sqrt(cin))
    b = jax.random.normal(kb, (1, cout), jnp.float32) * 0.01
    return w, b


def init_params(key):
    ks = jax.random.split(key, 9)

    def conv_bn(k, cin, cout):
        w, b = _linear(k, cin, cout)
        return _fold_bn(w, b, *_bn_defaults(cout))

    # ---- STN3d: conv1/bn1, conv2/bn2, conv3/bn3, fc1/bn4, fc2/bn5, fc3 ----
    w1, b1 = conv_bn(ks[0], 3, 64)
    w2, b2 = conv_bn(ks[1], 64, 128)
    w3, b3 = conv_bn(ks[2], 128, 256)
    f1w, f1b = conv_bn(ks[3], 256, 128)
    f2w, f2b = conv_bn(ks[4], 128, 64)
    f3w, f3b = _linear(ks[5], 64, 9)
    # ---- PointNetfeat: conv1/bn1, conv2/bn2, conv3/bn3 ----
    c1w, c1b = conv_bn(ks[6], 3, 64)
    c2w, c2b = conv_bn(ks[7], 64, 128)
    c3w, c3b = conv_bn(ks[8], 128, 256)

    iden = jnp.eye(3, dtype=jnp.float32).reshape(1, 9)
    # fc3 lane-padded to 128 output lanes, identity baked into the bias.
    f3w_pad = jnp.zeros((64, 128), jnp.float32).at[:, :9].set(f3w)
    f3b_pad = jnp.zeros((1, 128), jnp.float32).at[:, :9].set(f3b + iden)
    # Pre-combine fc3(+iden) with the BN-folded feat conv1 weight so the kernel gets
    # M_b = trans_b @ C1w directly:  m_all[b, 64k+c] = sum_j trans[b,k,j] * c1w[j,c].
    wfold = jnp.einsum('dkj,jc->dkc', f3w.reshape(64, 3, 3), c1w).reshape(64, 192)
    bfold = jnp.einsum('kj,jc->kc', (f3b + iden).reshape(3, 3), c1w).reshape(1, 192)

    kernel_params = [
        w1, b1,                                    # STN conv1 (K=3 -> VPU MACs), f32
        w2.astype(jnp.bfloat16), b2,               # STN conv2
        w3.astype(jnp.bfloat16), b3,               # STN conv3
        f1w.astype(jnp.bfloat16), f1b,             # STN fc1
        f2w.astype(jnp.bfloat16), f2b,             # STN fc2
        f3w_pad, f3b_pad,                          # STN fc3 (f32, lane-dense, iden in bias)
        wfold, bfold,                              # trans -> feat conv1 fold (f32)
        c1b,                                       # feat conv1 bias (weight lives in wfold)
        c2w.astype(jnp.bfloat16), c2b,             # feat conv2
        c3w.astype(jnp.bfloat16), c3b,             # feat conv3 (bn3, no relu)
    ]
    ref_params = dict(sw1=w1, sb1=b1, sw2=w2, sb2=b2, sw3=w3, sb3=b3,
                      fw1=f1w, fb1=f1b, fw2=f2w, fb2=f2b, fw3=f3w, fb3=f3b,
                      cw1=c1w, cb1=c1b, cw2=c2w, cb2=c2b, cw3=c3w, cb3=c3b)
    return kernel_params, ref_params


# ---------------------------------------------------------------------------
# Full forward (global_feat=True): returns (global_feature (B,256), trans (B,3,3))
# ---------------------------------------------------------------------------
def pointnetfeat_forward(x, kernel_params):
    # x: (B, 3, N) exactly like the PyTorch module input (no wrapper transpose).
    B, C, N = x.shape
    Npad = ((N + 127) // 128) * 128
    if Npad != N:
        # Edge-replicate the last point: duplicates give duplicate per-point
        # features, so both per-sample maxes are exactly unchanged (safe even
        # for the non-ReLU'd bn3 output).
        x = jnp.pad(x, ((0, 0), (0, 0), (0, Npad - N)), mode='edge')
    Bt = _pick_bt(B, Npad)
    xg = x.reshape(B // Bt, Bt * 3, Npad)                  # free row-major reshape -> dense DMA blocks
    trans_pad, gfeat = pointnet_call(xg, kernel_params, Bt)
    trans = trans_pad.reshape(B, 128)[:, :9].reshape(B, 3, 3)
    return gfeat.reshape(B, 256), trans


# ---------------------------------------------------------------------------
# Pure-JAX reference (same folded-BN weights, f32) for a tolerance check
# ---------------------------------------------------------------------------
def reference_forward(x, rp):
    B = x.shape[0]
    xt = jnp.transpose(x, (0, 2, 1))                                   # (B, N, 3)

    def layer(h, w, b, relu=True):
        h = jnp.einsum('bnc,cd->bnd', h, w) + b
        return jnp.maximum(h, 0.0) if relu else h

    h = layer(xt, rp['sw1'], rp['sb1'])
    h = layer(h, rp['sw2'], rp['sb2'])
    h = layer(h, rp['sw3'], rp['sb3'])
    g = jnp.max(h, axis=1)                                             # (B, 256)
    t = jnp.maximum(g @ rp['fw1'] + rp['fb1'], 0.0)
    t = jnp.maximum(t @ rp['fw2'] + rp['fb2'], 0.0)
    trans = (t @ rp['fw3'] + rp['fb3']
             + jnp.eye(3, dtype=jnp.float32).reshape(1, 9)).reshape(B, 3, 3)

    y = jnp.einsum('bnk,bkj->bnj', xt, trans)                          # bmm(x^T, trans)
    h = layer(y, rp['cw1'], rp['cb1'])
    h = layer(h, rp['cw2'], rp['cb2'])
    h = layer(h, rp['cw3'], rp['cb3'], relu=False)
    return jnp.max(h, axis=1), trans


if __name__ == "__main__":
    key = jax.random.PRNGKey(0)
    kx, kp = jax.random.split(key)
    B, N = 2, 128
    x = jax.random.normal(kx, (B, 3, N), jnp.float32)
    kernel_params, ref_params = init_params(kp)

    fwd = jax.jit(partial(pointnetfeat_forward, kernel_params=kernel_params))
    gfeat, trans = fwd(x)
    jax.block_until_ready((gfeat, trans))
    assert gfeat.shape == (B, 256) and gfeat.dtype == jnp.float32
    assert trans.shape == (B, 3, 3) and trans.dtype == jnp.float32

    # Loose-tolerance check vs. the f32 reference (kernel uses bf16 MXU layers
    # with f32 accumulation).
    gref, tref = reference_forward(x, ref_params)
    g_err = float(jnp.max(jnp.abs(gfeat - gref)))
    t_err = float(jnp.max(jnp.abs(trans - tref)))
    g_tol = 0.1 + 0.05 * float(jnp.max(jnp.abs(gref)))
    t_tol = 0.1 + 0.05 * float(jnp.max(jnp.abs(tref)))
    assert g_err < g_tol, ("gfeat mismatch", g_err, g_tol)
    assert t_err < t_tol, ("trans mismatch", t_err, t_tol)
    print("KERNEL_OK")
</pallas_src>

<mosaic_0001>
module attributes {stable_mosaic.version = 11 : i64} {
  func.func @fused_kernel(%arg0: i32, %arg1: memref<1x6x128xf32, #tpu.memory_space<vmem>>, %arg2: memref<3x64xf32, #tpu.memory_space<vmem>>, %arg3: memref<1x64xf32, #tpu.memory_space<vmem>>, %arg4: memref<64x128xbf16, #tpu.memory_space<vmem>>, %arg5: memref<1x128xf32, #tpu.memory_space<vmem>>, %arg6: memref<128x256xbf16, #tpu.memory_space<vmem>>, %arg7: memref<1x256xf32, #tpu.memory_space<vmem>>, %arg8: memref<256x128xbf16, #tpu.memory_space<vmem>>, %arg9: memref<1x128xf32, #tpu.memory_space<vmem>>, %arg10: memref<128x64xbf16, #tpu.memory_space<vmem>>, %arg11: memref<1x64xf32, #tpu.memory_space<vmem>>, %arg12: memref<64x128xf32, #tpu.memory_space<vmem>>, %arg13: memref<1x128xf32, #tpu.memory_space<vmem>>, %arg14: memref<64x192xf32, #tpu.memory_space<vmem>>, %arg15: memref<1x192xf32, #tpu.memory_space<vmem>>, %arg16: memref<1x64xf32, #tpu.memory_space<vmem>>, %arg17: memref<64x128xbf16, #tpu.memory_space<vmem>>, %arg18: memref<1x128xf32, #tpu.memory_space<vmem>>, %arg19: memref<128x256xbf16, #tpu.memory_space<vmem>>, %arg20: memref<1x256xf32, #tpu.memory_space<vmem>>, %arg21: memref<1x2x128xf32, #tpu.memory_space<vmem>>, %arg22: memref<1x2x256xf32, #tpu.memory_space<vmem>>) attributes {dimension_semantics = [#tpu.dimension_semantics<parallel>], iteration_bounds = array<i64: 1>, scalar_prefetch = 0 : i64, scratch_operands = 0 : i64, tpu.core_type = #tpu.core_type<tc>, window_params = [{transform_indices = @transform_0, window_bounds = array<i64: 1, 6, 128>}, {pipeline_mode = #tpu.pipeline_mode<synchronous>, transform_indices = @transform_1, window_bounds = array<i64: 3, 64>}, {pipeline_mode = #tpu.pipeline_mode<synchronous>, transform_indices = @transform_2, window_bounds = array<i64: 1, 64>}, {pipeline_mode = #tpu.pipeline_mode<synchronous>, transform_indices = @transform_3, window_bounds = array<i64: 64, 128>}, {pipeline_mode = #tpu.pipeline_mode<synchronous>, transform_indices = @transform_4, window_bounds = array<i64: 1, 128>}, {pipeline_mode = #tpu.pipeline_mode<synchronous>, transform_indices = @transform_5, window_bounds = array<i64: 128, 256>}, {pipeline_mode = #tpu.pipeline_mode<synchronous>, transform_indices = @transform_6, window_bounds = array<i64: 1, 256>}, {pipeline_mode = #tpu.pipeline_mode<synchronous>, transform_indices = @transform_7, window_bounds = array<i64: 256, 128>}, {pipeline_mode = #tpu.pipeline_mode<synchronous>, transform_indices = @transform_8, window_bounds = array<i64: 1, 128>}, {pipeline_mode = #tpu.pipeline_mode<synchronous>, transform_indices = @transform_9, window_bounds = array<i64: 128, 64>}, {pipeline_mode = #tpu.pipeline_mode<synchronous>, transform_indices = @transform_10, window_bounds = array<i64: 1, 64>}, {pipeline_mode = #tpu.pipeline_mode<synchronous>, transform_indices = @transform_11, window_bounds = array<i64: 64, 128>}, {pipeline_mode = #tpu.pipeline_mode<synchronous>, transform_indices = @transform_12, window_bounds = array<i64: 1, 128>}, {pipeline_mode = #tpu.pipeline_mode<synchronous>, transform_indices = @transform_13, window_bounds = array<i64: 64, 192>}, {pipeline_mode = #tpu.pipeline_mode<synchronous>, transform_indices = @transform_14, window_bounds = array<i64: 1, 192>}, {pipeline_mode = #tpu.pipeline_mode<synchronous>, transform_indices = @transform_15, window_bounds = array<i64: 1, 64>}, {pipeline_mode = #tpu.pipeline_mode<synchronous>, transform_indices = @transform_16, window_bounds = array<i64: 64, 128>}, {pipeline_mode = #tpu.pipeline_mode<synchronous>, transform_indices = @transform_17, window_bounds = array<i64: 1, 128>}, {pipeline_mode = #tpu.pipeline_mode<synchronous>, transform_indices = @transform_18, window_bounds = array<i64: 128, 256>}, {pipeline_mode = #tpu.pipeline_mode<synchronous>, transform_indices = @transform_19, window_bounds = array<i64: 1, 256>}, {transform_indices = @transform_20, window_bounds = array<i64: 1, 2, 128>}, {transform_indices = @transform_21, window_bounds = array<i64: 1, 2, 256>}]} {
    %c0 = arith.constant 0 : index
    %c0_0 = arith.constant 0 : index
    %c0_1 = arith.constant 0 : index
    %0 = vector.load %arg1[%c0, %c0_0, %c0_1] : memref<1x6x128xf32, #tpu.memory_space<vmem>>, vector<1x6x128xf32>
    %1 = vector.shape_cast %0 : vector<1x6x128xf32> to vector<6x128xf32>
    %2 = tpu.transpose %1, [1, 0] : vector<6x128xf32> -> vector<128x6xf32>
    %c0_2 = arith.constant 0 : index
    %c0_3 = arith.constant 0 : index
    %3 = vector.load %arg2[%c0_2, %c0_3] : memref<3x64xf32, #tpu.memory_space<vmem>>, vector<1x64xf32>
    %c1 = arith.constant 1 : index
    %c0_4 = arith.constant 0 : index
    %4 = vector.load %arg2[%c1, %c0_4] : memref<3x64xf32, #tpu.memory_space<vmem>>, vector<1x64xf32>
    %c2 = arith.constant 2 : index
    %c0_5 = arith.constant 0 : index
    %5 = vector.load %arg2[%c2, %c0_5] : memref<3x64xf32, #tpu.memory_space<vmem>>, vector<1x64xf32>
    %6 = vector.extract_strided_slice %2 {offsets = [0, 0], sizes = [128, 1], strides = [1, 1]} : vector<128x6xf32> to vector<128x1xf32>
    %7 = vector.broadcast %6 : vector<128x1xf32> to vector<128x64xf32>
    %8 = vector.broadcast %3 : vector<1x64xf32> to vector<128x64xf32>
    %9 = arith.mulf %7, %8 : vector<128x64xf32>
    %10 = vector.extract_strided_slice %2 {offsets = [0, 1], sizes = [128, 1], strides = [1, 1]} : vector<128x6xf32> to vector<128x1xf32>
    %11 = vector.broadcast %10 : vector<128x1xf32> to vector<128x64xf32>
    %12 = vector.broadcast %4 : vector<1x64xf32> to vector<128x64xf32>
    %13 = arith.mulf %11, %12 : vector<128x64xf32>
    %14 = arith.addf %9, %13 : vector<128x64xf32>
    %15 = vector.extract_strided_slice %2 {offsets = [0, 2], sizes = [128, 1], strides = [1, 1]} : vector<128x6xf32> to vector<128x1xf32>
    %16 = vector.broadcast %15 : vector<128x1xf32> to vector<128x64xf32>
    %17 = vector.broadcast %5 : vector<1x64xf32> to vector<128x64xf32>
    %18 = arith.mulf %16, %17 : vector<128x64xf32>
    %19 = arith.addf %14, %18 : vector<128x64xf32>
    %20 = vector.extract_strided_slice %2 {offsets = [0, 3], sizes = [128, 1], strides = [1, 1]} : vector<128x6xf32> to vector<128x1xf32>
    %21 = vector.broadcast %20 : vector<128x1xf32> to vector<128x64xf32>
    %22 = vector.broadcast %3 : vector<1x64xf32> to vector<128x64xf32>
    %23 = arith.mulf %21, %22 : vector<128x64xf32>
    %24 = vector.extract_strided_slice %2 {offsets = [0, 4], sizes = [128, 1], strides = [1, 1]} : vector<128x6xf32> to vector<128x1xf32>
    %25 = vector.broadcast %24 : vector<128x1xf32> to vector<128x64xf32>
    %26 = vector.broadcast %4 : vector<1x64xf32> to vector<128x64xf32>
    %27 = arith.mulf %25, %26 : vector<128x64xf32>
    %28 = arith.addf %23, %27 : vector<128x64xf32>
    %29 = vector.extract_strided_slice %2 {offsets = [0, 5], sizes = [128, 1], strides = [1, 1]} : vector<128x6xf32> to vector<128x1xf32>
    %30 = vector.broadcast %29 : vector<128x1xf32> to vector<128x64xf32>
    %31 = vector.broadcast %5 : vector<1x64xf32> to vector<128x64xf32>
    %32 = arith.mulf %30, %31 : vector<128x64xf32>
    %33 = arith.addf %28, %32 : vector<128x64xf32>
    %34 = tpu.concatenate %19, %33 in 0 : vector<128x64xf32>, vector<128x64xf32> -> vector<256x64xf32>
    %c0_6 = arith.constant 0 : index
    %c0_7 = arith.constant 0 : index
    %35 = vector.load %arg3[%c0_6, %c0_7] : memref<1x64xf32, #tpu.memory_space<vmem>>, vector<1x64xf32>
    %36 = vector.broadcast %35 : vector<1x64xf32> to vector<256x64xf32>
    %37 = arith.addf %34, %36 : vector<256x64xf32>
    %cst = arith.constant 0.000000e+00 : f32
    %38 = vector.broadcast %cst : f32 to vector<256x64xf32>
    %39 = arith.maximumf %37, %38 : vector<256x64xf32>
    %40 = arith.truncf %39 : vector<256x64xf32> to vector<256x64xbf16>
    %c0_8 = arith.constant 0 : index
    %c0_9 = arith.constant 0 : index
    %41 = vector.load %arg4[%c0_8, %c0_9] : memref<64x128xbf16, #tpu.memory_space<vmem>>, vector<64x128xbf16>
    %cst_10 = arith.constant dense<0.000000e+00> : vector<256x128xf32>
    %42 = tpu.matmul %40, %41, %cst_10 {dimension_numbers = #tpu.dot_dimension_numbers<[1], [0], [0], [1], [0, 0, 1, 1], [], []>} : vector<256x64xbf16>, vector<64x128xbf16>, vector<256x128xf32> -> vector<256x128xf32>
    %c0_11 = arith.constant 0 : index
    %c0_12 = arith.constant 0 : index
    %43 = vector.load %arg5[%c0_11, %c0_12] : memref<1x128xf32, #tpu.memory_space<vmem>>, vector<1x128xf32>
    %44 = vector.broadcast %43 : vector<1x128xf32> to vector<256x128xf32>
    %45 = arith.addf %42, %44 : vector<256x128xf32>
    %cst_13 = arith.constant 0.000000e+00 : f32
    %46 = vector.broadcast %cst_13 : f32 to vector<256x128xf32>
    %47 = arith.maximumf %45, %46 : vector<256x128xf32>
    %48 = arith.truncf %47 : vector<256x128xf32> to vector<256x128xbf16>
    %c0_14 = arith.constant 0 : index
    %c0_15 = arith.constant 0 : index
    %49 = vector.load %arg6[%c0_14, %c0_15] : memref<128x256xbf16, #tpu.memory_space<vmem>>, vector<128x256xbf16>
    %cst_16 = arith.constant dense<0.000000e+00> : vector<256x256xf32>
    %50 = tpu.matmul %48, %49, %cst_16 {dimension_numbers = #tpu.dot_dimension_numbers<[1], [0], [0], [1], [0, 0, 1, 1], [], []>} : vector<256x128xbf16>, vector<128x256xbf16>, vector<256x256xf32> -> vector<256x256xf32>
    %c0_17 = arith.constant 0 : index
    %c0_18 = arith.constant 0 : index
    %51 = vector.load %arg7[%c0_17, %c0_18] : memref<1x256xf32, #tpu.memory_space<vmem>>, vector<1x256xf32>
    %52 = vector.broadcast %51 : vector<1x256xf32> to vector<256x256xf32>
    %53 = arith.addf %50, %52 : vector<256x256xf32>
    %cst_19 = arith.constant 0.000000e+00 : f32
    %54 = vector.broadcast %cst_19 : f32 to vector<256x256xf32>
    %55 = arith.maximumf %53, %54 : vector<256x256xf32>
    %56 = vector.shape_cast %55 : vector<256x256xf32> to vector<2x128x256xf32>
    %cst_20 = arith.constant dense<0xFF800000> : vector<2x256xf32>
    %57 = vector.multi_reduction <maximumf>, %56, %cst_20 [1] : vector<2x128x256xf32> to vector<2x256xf32>
    %58 = arith.truncf %57 : vector<2x256xf32> to vector<2x256xbf16>
    %c0_21 = arith.constant 0 : index
    %c0_22 = arith.constant 0 : index
    %59 = vector.load %arg8[%c0_21, %c0_22] : memref<256x128xbf16, #tpu.memory_space<vmem>>, vector<256x128xbf16>
    %cst_23 = arith.constant dense<0.000000e+00> : vector<2x128xf32>
    %60 = tpu.matmul %58, %59, %cst_23 {dimension_numbers = #tpu.dot_dimension_numbers<[1], [0], [0], [1], [0, 0, 1, 1], [], []>} : vector<2x256xbf16>, vector<256x128xbf16>, vector<2x128xf32> -> vector<2x128xf32>
    %c0_24 = arith.constant 0 : index
    %c0_25 = arith.constant 0 : index
    %61 = vector.load %arg9[%c0_24, %c0_25] : memref<1x128xf32, #tpu.memory_space<vmem>>, vector<1x128xf32>
    %62 = vector.broadcast %61 : vector<1x128xf32> to vector<2x128xf32>
    %63 = arith.addf %60, %62 : vector<2x128xf32>
    %cst_26 = arith.constant 0.000000e+00 : f32
    %64 = vector.broadcast %cst_26 : f32 to vector<2x128xf32>
    %65 = arith.maximumf %63, %64 : vector<2x128xf32>
    %66 = arith.truncf %65 : vector<2x128xf32> to vector<2x128xbf16>
    %c0_27 = arith.constant 0 : index
    %c0_28 = arith.constant 0 : index
    %67 = vector.load %arg10[%c0_27, %c0_28] : memref<128x64xbf16, #tpu.memory_space<vmem>>, vector<128x64xbf16>
    %cst_29 = arith.constant dense<0.000000e+00> : vector<2x64xf32>
    %68 = tpu.matmul %66, %67, %cst_29 {dimension_numbers = #tpu.dot_dimension_numbers<[1], [0], [0], [1], [0, 0, 1, 1], [], []>} : vector<2x128xbf16>, vector<128x64xbf16>, vector<2x64xf32> -> vector<2x64xf32>
    %c0_30 = arith.constant 0 : index
    %c0_31 = arith.constant 0 : index
    %69 = vector.load %arg11[%c0_30, %c0_31] : memref<1x64xf32, #tpu.memory_space<vmem>>, vector<1x64xf32>
    %70 = vector.broadcast %69 : vector<1x64xf32> to vector<2x64xf32>
    %71 = arith.addf %68, %70 : vector<2x64xf32>
    %cst_32 = arith.constant 0.000000e+00 : f32
    %72 = vector.broadcast %cst_32 : f32 to vector<2x64xf32>
    %73 = arith.maximumf %71, %72 : vector<2x64xf32>
    %c0_33 = arith.constant 0 : index
    %c0_34 = arith.constant 0 : index
    %74 = vector.load %arg12[%c0_33, %c0_34] : memref<64x128xf32, #tpu.memory_space<vmem>>, vector<64x128xf32>
    %cst_35 = arith.constant dense<0.000000e+00> : vector<2x128xf32>
    %75 = tpu.matmul %73, %74, %cst_35 {dimension_numbers = #tpu.dot_dimension_numbers<[1], [0], [0], [1], [0, 0, 1, 1], [], []>} : vector<2x64xf32>, vector<64x128xf32>, vector<2x128xf32> -> vector<2x128xf32>
    %c0_36 = arith.constant 0 : index
    %c0_37 = arith.constant 0 : index
    %76 = vector.load %arg13[%c0_36, %c0_37] : memref<1x128xf32, #tpu.memory_space<vmem>>, vector<1x128xf32>
    %77 = vector.broadcast %76 : vector<1x128xf32> to vector<2x128xf32>
    %78 = arith.addf %75, %77 : vector<2x128xf32>
    %c0_38 = arith.constant 0 : index
    %c0_39 = arith.constant 0 : index
    %c0_40 = arith.constant 0 : index
    %79 = vector.load %arg21[%c0_38, %c0_39, %c0_40] : memref<1x2x128xf32, #tpu.memory_space<vmem>>, vector<1x2x128xf32>
    %80 = vector.shape_cast %79 : vector<1x2x128xf32> to vector<2x128xf32>
    %81 = vector.shape_cast %78 : vector<2x128xf32> to vector<1x2x128xf32>
    tpu.vector_store %arg21[%c0_38, %c0_39, %c0_40], %81 {strides = array<i32>} : memref<1x2x128xf32, #tpu.memory_space<vmem>>, vector<1x2x128xf32>,
    %c0_41 = arith.constant 0 : index
    %c0_42 = arith.constant 0 : index
    %82 = vector.load %arg14[%c0_41, %c0_42] : memref<64x192xf32, #tpu.memory_space<vmem>>, vector<64x192xf32>
    %cst_43 = arith.constant dense<0.000000e+00> : vector<2x192xf32>
    %83 = tpu.matmul %73, %82, %cst_43 {dimension_numbers = #tpu.dot_dimension_numbers<[1], [0], [0], [1], [0, 0, 1, 1], [], []>} : vector<2x64xf32>, vector<64x192xf32>, vector<2x192xf32> -> vector<2x192xf32>
    %c0_44 = arith.constant 0 : index
    %c0_45 = arith.constant 0 : index
    %84 = vector.load %arg15[%c0_44, %c0_45] : memref<1x192xf32, #tpu.memory_space<vmem>>, vector<1x192xf32>
    %85 = vector.broadcast %84 : vector<1x192xf32> to vector<2x192xf32>
    %86 = arith.addf %83, %85 : vector<2x192xf32>
    %87 = vector.extract_strided_slice %2 {offsets = [0, 0], sizes = [128, 1], strides = [1, 1]} : vector<128x6xf32> to vector<128x1xf32>
    %88 = vector.extract_strided_slice %86 {offsets = [0, 0], sizes = [1, 64], strides = [1, 1]} : vector<2x192xf32> to vector<1x64xf32>
    %89 = vector.broadcast %87 : vector<128x1xf32> to vector<128x64xf32>
    %90 = vector.broadcast %88 : vector<1x64xf32> to vector<128x64xf32>
    %91 = arith.mulf %89, %90 : vector<128x64xf32>
    %92 = vector.extract_strided_slice %2 {offsets = [0, 1], sizes = [128, 1], strides = [1, 1]} : vector<128x6xf32> to vector<128x1xf32>
    %93 = vector.extract_strided_slice %86 {offsets = [0, 64], sizes = [1, 64], strides = [1, 1]} : vector<2x192xf32> to vector<1x64xf32>
    %94 = vector.broadcast %92 : vector<128x1xf32> to vector<128x64xf32>
    %95 = vector.broadcast %93 : vector<1x64xf32> to vector<128x64xf32>
    %96 = arith.mulf %94, %95 : vector<128x64xf32>
    %97 = arith.addf %91, %96 : vector<128x64xf32>
    %98 = vector.extract_strided_slice %2 {offsets = [0, 2], sizes = [128, 1], strides = [1, 1]} : vector<128x6xf32> to vector<128x1xf32>
    %99 = vector.extract_strided_slice %86 {offsets = [0, 128], sizes = [1, 64], strides = [1, 1]} : vector<2x192xf32> to vector<1x64xf32>
    %100 = vector.broadcast %98 : vector<128x1xf32> to vector<128x64xf32>
    %101 = vector.broadcast %99 : vector<1x64xf32> to vector<128x64xf32>
    %102 = arith.mulf %100, %101 : vector<128x64xf32>
    %103 = arith.addf %97, %102 : vector<128x64xf32>
    %104 = vector.extract_strided_slice %2 {offsets = [0, 3], sizes = [128, 1], strides = [1, 1]} : vector<128x6xf32> to vector<128x1xf32>
    %105 = vector.extract_strided_slice %86 {offsets = [1, 0], sizes = [1, 64], strides = [1, 1]} : vector<2x192xf32> to vector<1x64xf32>
    %106 = vector.broadcast %104 : vector<128x1xf32> to vector<128x64xf32>
    %107 = vector.broadcast %105 : vector<1x64xf32> to vector<128x64xf32>
    %108 = arith.mulf %106, %107 : vector<128x64xf32>
    %109 = vector.extract_strided_slice %2 {offsets = [0, 4], sizes = [128, 1], strides = [1, 1]} : vector<128x6xf32> to vector<128x1xf32>
    %110 = vector.extract_strided_slice %86 {offsets = [1, 64], sizes = [1, 64], strides = [1, 1]} : vector<2x192xf32> to vector<1x64xf32>
    %111 = vector.broadcast %109 : vector<128x1xf32> to vector<128x64xf32>
    %112 = vector.broadcast %110 : vector<1x64xf32> to vector<128x64xf32>
    %113 = arith.mulf %111, %112 : vector<128x64xf32>
    %114 = arith.addf %108, %113 : vector<128x64xf32>
    %115 = vector.extract_strided_slice %2 {offsets = [0, 5], sizes = [128, 1], strides = [1, 1]} : vector<128x6xf32> to vector<128x1xf32>
    %116 = vector.extract_strided_slice %86 {offsets = [1, 128], sizes = [1, 64], strides = [1, 1]} : vector<2x192xf32> to vector<1x64xf32>
    %117 = vector.broadcast %115 : vector<128x1xf32> to vector<128x64xf32>
    %118 = vector.broadcast %116 : vector<1x64xf32> to vector<128x64xf32>
    %119 = arith.mulf %117, %118 : vector<128x64xf32>
    %120 = arith.addf %114, %119 : vector<128x64xf32>
    %121 = tpu.concatenate %103, %120 in 0 : vector<128x64xf32>, vector<128x64xf32> -> vector<256x64xf32>
    %c0_46 = arith.constant 0 : index
    %c0_47 = arith.constant 0 : index
    %122 = vector.load %arg16[%c0_46, %c0_47] : memref<1x64xf32, #tpu.memory_space<vmem>>, vector<1x64xf32>
    %123 = vector.broadcast %122 : vector<1x64xf32> to vector<256x64xf32>
    %124 = arith.addf %121, %123 : vector<256x64xf32>
    %cst_48 = arith.constant 0.000000e+00 : f32
    %125 = vector.broadcast %cst_48 : f32 to vector<256x64xf32>
    %126 = arith.maximumf %124, %125 : vector<256x64xf32>
    %127 = arith.truncf %126 : vector<256x64xf32> to vector<256x64xbf16>
    %c0_49 = arith.constant 0 : index
    %c0_50 = arith.constant 0 : index
    %128 = vector.load %arg17[%c0_49, %c0_50] : memref<64x128xbf16, #tpu.memory_space<vmem>>, vector<64x128xbf16>
    %cst_51 = arith.constant dense<0.000000e+00> : vector<256x128xf32>
    %129 = tpu.matmul %127, %128, %cst_51 {dimension_numbers = #tpu.dot_dimension_numbers<[1], [0], [0], [1], [0, 0, 1, 1], [], []>} : vector<256x64xbf16>, vector<64x128xbf16>, vector<256x128xf32> -> vector<256x128xf32>
    %c0_52 = arith.constant 0 : index
    %c0_53 = arith.constant 0 : index
    %130 = vector.load %arg18[%c0_52, %c0_53] : memref<1x128xf32, #tpu.memory_space<vmem>>, vector<1x128xf32>
    %131 = vector.broadcast %130 : vector<1x128xf32> to vector<256x128xf32>
    %132 = arith.addf %129, %131 : vector<256x128xf32>
    %cst_54 = arith.constant 0.000000e+00 : f32
    %133 = vector.broadcast %cst_54 : f32 to vector<256x128xf32>
    %134 = arith.maximumf %132, %133 : vector<256x128xf32>
    %135 = arith.truncf %134 : vector<256x128xf32> to vector<256x128xbf16>
    %c0_55 = arith.constant 0 : index
    %c0_56 = arith.constant 0 : index
    %136 = vector.load %arg19[%c0_55, %c0_56] : memref<128x256xbf16, #tpu.memory_space<vmem>>, vector<128x256xbf16>
    %cst_57 = arith.constant dense<0.000000e+00> : vector<256x256xf32>
    %137 = tpu.matmul %135, %136, %cst_57 {dimension_numbers = #tpu.dot_dimension_numbers<[1], [0], [0], [1], [0, 0, 1, 1], [], []>} : vector<256x128xbf16>, vector<128x256xbf16>, vector<256x256xf32> -> vector<256x256xf32>
    %c0_58 = arith.constant 0 : index
    %c0_59 = arith.constant 0 : index
    %138 = vector.load %arg20[%c0_58, %c0_59] : memref<1x256xf32, #tpu.memory_space<vmem>>, vector<1x256xf32>
    %139 = vector.broadcast %138 : vector<1x256xf32> to vector<256x256xf32>
    %140 = arith.addf %137, %139 : vector<256x256xf32>
    %141 = vector.shape_cast %140 : vector<256x256xf32> to vector<2x128x256xf32>
    %cst_60 = arith.constant dense<0xFF800000> : vector<2x256xf32>
    %142 = vector.multi_reduction <maximumf>, %141, %cst_60 [1] : vector<2x128x256xf32> to vector<2x256xf32>
    %c0_61 = arith.constant 0 : index
    %c0_62 = arith.constant 0 : index
    %c0_63 = arith.constant 0 : index
    %143 = vector.load %arg22[%c0_61, %c0_62, %c0_63] : memref<1x2x256xf32, #tpu.memory_space<vmem>>, vector<1x2x256xf32>
    %144 = vector.shape_cast %143 : vector<1x2x256xf32> to vector<2x256xf32>
    %145 = vector.shape_cast %142 : vector<2x256xf32> to vector<1x2x256xf32>
    tpu.vector_store %arg22[%c0_61, %c0_62, %c0_63], %145 {strides = array<i32>} : memref<1x2x256xf32, #tpu.memory_space<vmem>>, vector<1x2x256xf32>,
    return
  }
  func.func @transform_0(%arg0: i32) -> (i32, i32, i32) {
    %c0_i32 = arith.constant 0 : i32
    %c0_i32_0 = arith.constant 0 : i32
    %c0_i32_1 = arith.constant 0 : i32
    return %arg0, %c0_i32, %c0_i32_0 : i32, i32, i32
  }
  func.func @transform_1(%arg0: i32) -> (i32, i32) {
    %c0_i32 = arith.constant 0 : i32
    %c0_i32_0 = arith.constant 0 : i32
    %c0_i32_1 = arith.constant 0 : i32
    return %c0_i32, %c0_i32_0 : i32, i32
  }
  func.func @transform_2(%arg0: i32) -> (i32, i32) {
    %c0_i32 = arith.constant 0 : i32
    %c0_i32_0 = arith.constant 0 : i32
    %c0_i32_1 = arith.constant 0 : i32
    return %c0_i32, %c0_i32_0 : i32, i32
  }
  func.func @transform_3(%arg0: i32) -> (i32, i32) {
    %c0_i32 = arith.constant 0 : i32
    %c0_i32_0 = arith.constant 0 : i32
    %c0_i32_1 = arith.constant 0 : i32
    return %c0_i32, %c0_i32_0 : i32, i32
  }
  func.func @transform_4(%arg0: i32) -> (i32, i32) {
    %c0_i32 = arith.constant 0 : i32
    %c0_i32_0 = arith.constant 0 : i32
    %c0_i32_1 = arith.constant 0 : i32
    return %c0_i32, %c0_i32_0 : i32, i32
  }
  func.func @transform_5(%arg0: i32) -> (i32, i32) {
    %c0_i32 = arith.constant 0 : i32
    %c0_i32_0 = arith.constant 0 : i32
    %c0_i32_1 = arith.constant 0 : i32
    return %c0_i32, %c0_i32_0 : i32, i32
  }
  func.func @transform_6(%arg0: i32) -> (i32, i32) {
    %c0_i32 = arith.constant 0 : i32
    %c0_i32_0 = arith.constant 0 : i32
    %c0_i32_1 = arith.constant 0 : i32
    return %c0_i32, %c0_i32_0 : i32, i32
  }
  func.func @transform_7(%arg0: i32) -> (i32, i32) {
    %c0_i32 = arith.constant 0 : i32
    %c0_i32_0 = arith.constant 0 : i32
    %c0_i32_1 = arith.constant 0 : i32
    return %c0_i32, %c0_i32_0 : i32, i32
  }
  func.func @transform_8(%arg0: i32) -> (i32, i32) {
    %c0_i32 = arith.constant 0 : i32
    %c0_i32_0 = arith.constant 0 : i32
    %c0_i32_1 = arith.constant 0 : i32
    return %c0_i32, %c0_i32_0 : i32, i32
  }
  func.func @transform_9(%arg0: i32) -> (i32, i32) {
    %c0_i32 = arith.constant 0 : i32
    %c0_i32_0 = arith.constant 0 : i32
    %c0_i32_1 = arith.constant 0 : i32
    return %c0_i32, %c0_i32_0 : i32, i32
  }
  func.func @transform_10(%arg0: i32) -> (i32, i32) {
    %c0_i32 = arith.constant 0 : i32
    %c0_i32_0 = arith.constant 0 : i32
    %c0_i32_1 = arith.constant 0 : i32
    return %c0_i32, %c0_i32_0 : i32, i32
  }
  func.func @transform_11(%arg0: i32) -> (i32, i32) {
    %c0_i32 = arith.constant 0 : i32
    %c0_i32_0 = arith.constant 0 : i32
    %c0_i32_1 = arith.constant 0 : i32
    return %c0_i32, %c0_i32_0 : i32, i32
  }
  func.func @transform_12(%arg0: i32) -> (i32, i32) {
    %c0_i32 = arith.constant 0 : i32
    %c0_i32_0 = arith.constant 0 : i32
    %c0_i32_1 = arith.constant 0 : i32
    return %c0_i32, %c0_i32_0 : i32, i32
  }
  func.func @transform_13(%arg0: i32) -> (i32, i32) {
    %c0_i32 = arith.constant 0 : i32
    %c0_i32_0 = arith.constant 0 : i32
    %c0_i32_1 = arith.constant 0 : i32
    return %c0_i32, %c0_i32_0 : i32, i32
  }
  func.func @transform_14(%arg0: i32) -> (i32, i32) {
    %c0_i32 = arith.constant 0 : i32
    %c0_i32_0 = arith.constant 0 : i32
    %c0_i32_1 = arith.constant 0 : i32
    return %c0_i32, %c0_i32_0 : i32, i32
  }
  func.func @transform_15(%arg0: i32) -> (i32, i32) {
    %c0_i32 = arith.constant 0 : i32
    %c0_i32_0 = arith.constant 0 : i32
    %c0_i32_1 = arith.constant 0 : i32
    return %c0_i32, %c0_i32_0 : i32, i32
  }
  func.func @transform_16(%arg0: i32) -> (i32, i32) {
    %c0_i32 = arith.constant 0 : i32
    %c0_i32_0 = arith.constant 0 : i32
    %c0_i32_1 = arith.constant 0 : i32
    return %c0_i32, %c0_i32_0 : i32, i32
  }
  func.func @transform_17(%arg0: i32) -> (i32, i32) {
    %c0_i32 = arith.constant 0 : i32
    %c0_i32_0 = arith.constant 0 : i32
    %c0_i32_1 = arith.constant 0 : i32
    return %c0_i32, %c0_i32_0 : i32, i32
  }
  func.func @transform_18(%arg0: i32) -> (i32, i32) {
    %c0_i32 = arith.constant 0 : i32
    %c0_i32_0 = arith.constant 0 : i32
    %c0_i32_1 = arith.constant 0 : i32
    return %c0_i32, %c0_i32_0 : i32, i32
  }
  func.func @transform_19(%arg0: i32) -> (i32, i32) {
    %c0_i32 = arith.constant 0 : i32
    %c0_i32_0 = arith.constant 0 : i32
    %c0_i32_1 = arith.constant 0 : i32
    return %c0_i32, %c0_i32_0 : i32, i32
  }
  func.func @transform_20(%arg0: i32) -> (i32, i32, i32) {
    %c0_i32 = arith.constant 0 : i32
    %c0_i32_0 = arith.constant 0 : i32
    %c0_i32_1 = arith.constant 0 : i32
    return %arg0, %c0_i32, %c0_i32_0 : i32, i32, i32
  }
  func.func @transform_21(%arg0: i32) -> (i32, i32, i32) {
    %c0_i32 = arith.constant 0 : i32
    %c0_i32_0 = arith.constant 0 : i32
    %c0_i32_1 = arith.constant 0 : i32
    return %arg0, %c0_i32, %c0_i32_0 : i32, i32, i32
  }
}

</mosaic_0001>

<llo_original>
// kernel: pointnetfeat_forward.1
$region0: #{pointnetfeat_forward.1}
  #allocation0 [shape = 'u32[]', space=smem, size = 0x4, offset = 0x4, fixed_abs, tag = 'smem constant byte address 0x4 - core index']
  #allocation1 [shape = 'u32[144,128]{1,0:T(1,128)}', space=vmem, size = 0x12000, scoped, tag = 'internal scratch']
  %s0 = inlined_call_operand.vmem [shape: f32[1,6,128], index: 0, kind: input, shape index: {}]
  %s1 = inlined_call_operand.vmem [shape: f32[3,64], index: 1, kind: input, shape index: {}]
  %s2 = inlined_call_operand.vmem [shape: f32[1,64], index: 2, kind: input, shape index: {}]
  %s3 = inlined_call_operand.hbm [shape: bf16[64,128], index: 3, kind: input, shape index: {}]
  %s4 = inlined_call_operand.vmem [shape: f32[1,128], index: 4, kind: input, shape index: {}]
  %s5 = inlined_call_operand.hbm [shape: bf16[128,256], index: 5, kind: input, shape index: {}]
  %s6 = inlined_call_operand.vmem [shape: f32[1,256], index: 6, kind: input, shape index: {}]
  %s7 = inlined_call_operand.hbm [shape: bf16[256,128], index: 7, kind: input, shape index: {}]
  %s8 = inlined_call_operand.vmem [shape: f32[1,128], index: 8, kind: input, shape index: {}]
  %s9 = inlined_call_operand.hbm [shape: bf16[128,64], index: 9, kind: input, shape index: {}]
  %s10 = inlined_call_operand.vmem [shape: f32[1,64], index: 10, kind: input, shape index: {}]
  %s11 = inlined_call_operand.hbm [shape: f32[64,128], index: 11, kind: input, shape index: {}]
  %s12 = inlined_call_operand.vmem [shape: f32[1,128], index: 12, kind: input, shape index: {}]
  %s13 = inlined_call_operand.hbm [shape: f32[64,192], index: 13, kind: input, shape index: {}]
  %s14 = inlined_call_operand.vmem [shape: f32[1,192], index: 14, kind: input, shape index: {}]
  %s15 = inlined_call_operand.vmem [shape: f32[1,64], index: 15, kind: input, shape index: {}]
  %s16 = inlined_call_operand.vmem [shape: bf16[64,128], index: 16, kind: input, shape index: {}]
  %s17 = inlined_call_operand.vmem [shape: f32[1,128], index: 17, kind: input, shape index: {}]
  %s18 = inlined_call_operand.hbm [shape: bf16[128,256], index: 18, kind: input, shape index: {}]
  %s19 = inlined_call_operand.vmem [shape: f32[1,256], index: 19, kind: input, shape index: {}]
  %s20 = inlined_call_operand.vmem [shape: f32[1,2,128], index: 20, kind: output, shape index: {0}]
  %s21 = inlined_call_operand.hbm [shape: f32[1,2,256], index: 21, kind: output, shape index: {1}]
  %22 = xla_tuple %s20, %s21
  %s23 = sld [smem:[#allocation0]]
  $region126: #{pointnetfeat_forward.1} parent=0
    _
  %s25 = ssub.s32 1, %s23
  %s26 = scalar_select 0, %s25, %s23
  $region1: #{pointnetfeat_forward.1} parent=0
    #allocation2 [shape = 'u8[16384]{0}', space=vmem, size = 0x4000, scoped, tag = 'input window, operand 3, single buffered']
    #allocation3 [shape = 's32[1]{0}', space=sflag, size = 0x4, scoped, tag = 'scoped memory for pointnetfeat_forward.1']
    #allocation4 [shape = 's32[1]{0}', space=sflag, size = 0x4, scoped, tag = 'scoped memory for pointnetfeat_forward.1']
    #allocation5 [shape = 'u8[65536]{0}', space=vmem, size = 0x10000, scoped, tag = 'input window, operand 5, single buffered']
    #allocation6 [shape = 's32[1]{0}', space=sflag, size = 0x4, scoped, tag = 'scoped memory for pointnetfeat_forward.1']
    #allocation7 [shape = 'u8[65536]{0}', space=vmem, size = 0x10000, scoped, tag = 'input window, operand 7, single buffered']
    #allocation8 [shape = 'u8[32768]{0}', space=vmem, size = 0x8000, scoped, tag = 'input window, operand 9, single buffered']
    #allocation9 [shape = 's32[1]{0}', space=sflag, size = 0x4, scoped, tag = 'scoped memory for pointnetfeat_forward.1']
    #allocation10 [shape = 'u8[32768]{0}', space=vmem, size = 0x8000, scoped, tag = 'input window, operand 11, single buffered']
    #allocation11 [shape = 'u8[65536]{0}', space=vmem, size = 0x10000, scoped, tag = 'input window, operand 13, single buffered']
    #allocation12 [shape = 's32[1]{0}', space=sflag, size = 0x4, scoped, tag = 'scoped memory for pointnetfeat_forward.1']
    #allocation13 [shape = 'u8[65536]{0}', space=vmem, size = 0x10000, scoped, tag = 'input window, operand 18, single buffered']
    #allocation14 [shape = 'u8[2048]{0}', space=vmem, size = 0x800, scoped, tag = 'output window, operand 1, single buffered']
    %27 = vsyncpa [#allocation3], 0
    %28 = vsyncpa [#allocation6], 0
    %29 = vsyncpa [#allocation9], 0
    %30 = vsyncpa [#allocation12], 0
    %31 = vsyncpa [#allocation4], 0
    // Predicated region
    $region2: #{pointnetfeat_forward.1} parent=1 // pred_check
      _
    $region3: #{pointnetfeat_forward.1} parent=1 // pred_check_branch
      %33 = sbr.rel (0) target = $region5
    $region4: #{pointnetfeat_forward.1} parent=1 // pred_region
      _
    $region5: #{pointnetfeat_forward.1} parent=1 // pred_fallthru
      _
    // Predicated region
    $region6: #{pointnetfeat_forward.1} parent=1 // pred_check
      _
    $region7: #{pointnetfeat_forward.1} parent=1 // pred_check_branch
      %35 = sbr.rel (0) target = $region9
    $region8: #{pointnetfeat_forward.1} parent=1 // pred_region
      _
    $region9: #{pointnetfeat_forward.1} parent=1 // pred_fallthru
      _
    // Predicated region
    $region10: #{pointnetfeat_forward.1} parent=1 // pred_check
      _
    $region11: #{pointnetfeat_forward.1} parent=1 // pred_check_branch
      %37 = sbr.rel (0) target = $region13
    $region12: #{pointnetfeat_forward.1} parent=1 // pred_region
      _
    $region13: #{pointnetfeat_forward.1} parent=1 // pred_fallthru
      _
    // Predicated region
    $region14: #{pointnetfeat_forward.1} parent=1 // pred_check
      _
    $region15: #{pointnetfeat_forward.1} parent=1 // pred_check_branch
      %39 = sbr.rel (0) target = $region17
    $region16: #{pointnetfeat_forward.1} parent=1 // pred_region
      %s41 = ssub.s32 512, 512
      %42 = vsyncadd [#allocation3], %s41
      %s43 = sshll.u32 [#allocation2], 4
      %s44 = int_to_ptr.vmem [resolvable:$true] %s43
      %49 = dma.hbm_to_vmem [thread:$0]  %s3, 512, %s44, [#allocation3], 64, 64, 4
    $region17: #{pointnetfeat_forward.1} parent=1 // pred_fallthru
      _
    // Predicated region
    $region18: #{pointnetfeat_forward.1} parent=1 // pred_check
      _
    $region19: #{pointnetfeat_forward.1} parent=1 // pred_check_branch
      %51 = sbr.rel (0) target = $region21
    $region20: #{pointnetfeat_forward.1} parent=1 // pred_region
      _
    $region21: #{pointnetfeat_forward.1} parent=1 // pred_fallthru
      _
    // Predicated region
    $region22: #{pointnetfeat_forward.1} parent=1 // pred_check
      _
    $region23: #{pointnetfeat_forward.1} parent=1 // pred_check_branch
      %53 = sbr.rel (0) target = $region25
    $region24: #{pointnetfeat_forward.1} parent=1 // pred_region
      %s55 = ssub.s32 2048, 2048
      %56 = vsyncadd [#allocation6], %s55
      %s57 = sshll.u32 [#allocation5], 4
      %s58 = int_to_ptr.vmem [resolvable:$true] %s57
      %63 = dma.hbm_to_vmem [thread:$0]  %s5, 2048, %s58, [#allocation6], 128, 128, 8
    $region25: #{pointnetfeat_forward.1} parent=1 // pred_fallthru
      _
    // Predicated region
    $region26: #{pointnetfeat_forward.1} parent=1 // pred_check
      _
    $region27: #{pointnetfeat_forward.1} parent=1 // pred_check_branch
      %65 = sbr.rel (0) target = $region29
    $region28: #{pointnetfeat_forward.1} parent=1 // pred_region
      _
    $region29: #{pointnetfeat_forward.1} parent=1 // pred_fallthru
      _
    // Predicated region
    $region30: #{pointnetfeat_forward.1} parent=1 // pred_check
      _
    $region31: #{pointnetfeat_forward.1} parent=1 // pred_check_branch
      %67 = sbr.rel (0) target = $region33
    $region32: #{pointnetfeat_forward.1} parent=1 // pred_region
      %s69 = ssub.s32 2048, 2048
      %70 = vsyncadd [#allocation6], %s69
      %s71 = sshll.u32 [#allocation7], 4
      %s72 = int_to_ptr.vmem [resolvable:$true] %s71
      %77 = dma.hbm_to_vmem [thread:$0]  %s7, 2048, %s72, [#allocation6], 64, 64, 4
    $region33: #{pointnetfeat_forward.1} parent=1 // pred_fallthru
      _
    // Predicated region
    $region34: #{pointnetfeat_forward.1} parent=1 // pred_check
      _
    $region35: #{pointnetfeat_forward.1} parent=1 // pred_check_branch
      %79 = sbr.rel (0) target = $region37
    $region36: #{pointnetfeat_forward.1} parent=1 // pred_region
      _
    $region37: #{pointnetfeat_forward.1} parent=1 // pred_fallthru
      _
    // Predicated region
    $region38: #{pointnetfeat_forward.1} parent=1 // pred_check
      _
    $region39: #{pointnetfeat_forward.1} parent=1 // pred_check_branch
      %81 = sbr.rel (0) target = $region41
    $region40: #{pointnetfeat_forward.1} parent=1 // pred_region
      %s83 = ssub.s32 1024, 1024
      %84 = vsyncadd [#allocation9], %s83
      %s85 = sshll.u32 [#allocation8], 4
      %s86 = int_to_ptr.vmem [resolvable:$true] %s85
      %91 = dma.hbm_to_vmem [thread:$0]  %s9, 1024, %s86, [#allocation9], 64, 64, 4
    $region41: #{pointnetfeat_forward.1} parent=1 // pred_fallthru
      _
    // Predicated region
    $region42: #{pointnetfeat_forward.1} parent=1 // pred_check
      _
    $region43: #{pointnetfeat_forward.1} parent=1 // pred_check_branch
      %93 = sbr.rel (0) target = $region45
    $region44: #{pointnetfeat_forward.1} parent=1 // pred_region
      _
    $region45: #{pointnetfeat_forward.1} parent=1 // pred_fallthru
      _
    // Predicated region
    $region46: #{pointnetfeat_forward.1} parent=1 // pred_check
      _
    $region47: #{pointnetfeat_forward.1} parent=1 // pred_check_branch
      %95 = sbr.rel (0) target = $region49
    $region48: #{pointnetfeat_forward.1} parent=1 // pred_region
      %s97 = ssub.s32 1024, 1024
      %98 = vsyncadd [#allocation9], %s97
      %s99 = sshll.u32 [#allocation10], 4
      %s100 = int_to_ptr.vmem [resolvable:$true] %s99
      %105 = dma.hbm_to_vmem [thread:$0]  %s11, 1024, %s100, [#allocation9], 128, 128, 8
    $region49: #{pointnetfeat_forward.1} parent=1 // pred_fallthru
      _
    // Predicated region
    $region50: #{pointnetfeat_forward.1} parent=1 // pred_check
      _
    $region51: #{pointnetfeat_forward.1} parent=1 // pred_check_branch
      %107 = sbr.rel (0) target = $region53
    $region52: #{pointnetfeat_forward.1} parent=1 // pred_region
      _
    $region53: #{pointnetfeat_forward.1} parent=1 // pred_fallthru
      _
    // Predicated region
    $region54: #{pointnetfeat_forward.1} parent=1 // pred_check
      _
    $region55: #{pointnetfeat_forward.1} parent=1 // pred_check_branch
      %109 = sbr.rel (0) target = $region57
    $region56: #{pointnetfeat_forward.1} parent=1 // pred_region
      %s111 = ssub.s32 2048, 2048
      %112 = vsyncadd [#allocation12], %s111
      %s113 = sshll.u32 [#allocation11], 4
      %s114 = int_to_ptr.vmem [resolvable:$true] %s113
      %119 = dma.hbm_to_vmem [thread:$0]  %s13, 2048, %s114, [#allocation12], 256, 256, 16
    $region57: #{pointnetfeat_forward.1} parent=1 // pred_fallthru
      _
    // Predicated region
    $region58: #{pointnetfeat_forward.1} parent=1 // pred_check
      _
    $region59: #{pointnetfeat_forward.1} parent=1 // pred_check_branch
      %121 = sbr.rel (0) target = $region61
    $region60: #{pointnetfeat_forward.1} parent=1 // pred_region
      _
    $region61: #{pointnetfeat_forward.1} parent=1 // pred_fallthru
      _
    // Predicated region
    $region62: #{pointnetfeat_forward.1} parent=1 // pred_check
      _
    $region63: #{pointnetfeat_forward.1} parent=1 // pred_check_branch
      %123 = sbr.rel (0) target = $region65
    $region64: #{pointnetfeat_forward.1} parent=1 // pred_region
      _
    $region65: #{pointnetfeat_forward.1} parent=1 // pred_fallthru
      _
    // Predicated region
    $region66: #{pointnetfeat_forward.1} parent=1 // pred_check
      _
    $region67: #{pointnetfeat_forward.1} parent=1 // pred_check_branch
      %125 = sbr.rel (0) target = $region69
    $region68: #{pointnetfeat_forward.1} parent=1 // pred_region
      _
    $region69: #{pointnetfeat_forward.1} parent=1 // pred_fallthru
      _
    // Predicated region
    $region70: #{pointnetfeat_forward.1} parent=1 // pred_check
      _
    $region71: #{pointnetfeat_forward.1} parent=1 // pred_check_branch
      %127 = sbr.rel (0) target = $region73
    $region72: #{pointnetfeat_forward.1} parent=1 // pred_region
      _
    $region73: #{pointnetfeat_forward.1} parent=1 // pred_fallthru
      _
    // Predicated region
    $region74: #{pointnetfeat_forward.1} parent=1 // pred_check
      _
    $region75: #{pointnetfeat_forward.1} parent=1 // pred_check_branch
      %129 = sbr.rel (0) target = $region77
    $region76: #{pointnetfeat_forward.1} parent=1 // pred_region
      %s131 = ssub.s32 2048, 2048
      %132 = vsyncadd [#allocation12], %s131
      %s133 = sshll.u32 [#allocation13], 4
      %s134 = int_to_ptr.vmem [resolvable:$true] %s133
      %139 = dma.hbm_to_vmem [thread:$0]  %s18, 2048, %s134, [#allocation12], 128, 128, 8
    $region77: #{pointnetfeat_forward.1} parent=1 // pred_fallthru
      _
    // Predicated region
    $region78: #{pointnetfeat_forward.1} parent=1 // pred_check
      _
    $region79: #{pointnetfeat_forward.1} parent=1 // pred_check_branch
      %141 = sbr.rel (0) target = $region81
    $region80: #{pointnetfeat_forward.1} parent=1 // pred_region
      _
    $region81: #{pointnetfeat_forward.1} parent=1 // pred_fallthru
      _
    // Predicated region
    $region82: #{pointnetfeat_forward.1} parent=1 // pred_check
      _
    $region83: #{pointnetfeat_forward.1} parent=1 // pred_check_branch
      %143 = sbr.rel (0) target = $region85
    $region84: #{pointnetfeat_forward.1} parent=1 // pred_region
      %144 = dma.done [#allocation3], 512
    $region85: #{pointnetfeat_forward.1} parent=1 // pred_fallthru
      _
    // Predicated region
    $region86: #{pointnetfeat_forward.1} parent=1 // pred_check
      _
    $region87: #{pointnetfeat_forward.1} parent=1 // pred_check_branch
      %146 = sbr.rel (0) target = $region89
    $region88: #{pointnetfeat_forward.1} parent=1 // pred_region
      %147 = dma.done [#allocation6], 2048
    $region89: #{pointnetfeat_forward.1} parent=1 // pred_fallthru
      _
    // Predicated region
    $region90: #{pointnetfeat_forward.1} parent=1 // pred_check
      _
    $region91: #{pointnetfeat_forward.1} parent=1 // pred_check_branch
      %149 = sbr.rel (0) target = $region93
    $region92: #{pointnetfeat_forward.1} parent=1 // pred_region
      %150 = dma.done [#allocation6], 2048
    $region93: #{pointnetfeat_forward.1} parent=1 // pred_fallthru
      _
    // Predicated region
    $region94: #{pointnetfeat_forward.1} parent=1 // pred_check
      _
    $region95: #{pointnetfeat_forward.1} parent=1 // pred_check_branch
      %152 = sbr.rel (0) target = $region97
    $region96: #{pointnetfeat_forward.1} parent=1 // pred_region
      %153 = dma.done [#allocation9], 1024
    $region97: #{pointnetfeat_forward.1} parent=1 // pred_fallthru
      _
    // Predicated region
    $region98: #{pointnetfeat_forward.1} parent=1 // pred_check
      _
    $region99: #{pointnetfeat_forward.1} parent=1 // pred_check_branch
      %155 = sbr.rel (0) target = $region101
    $region100: #{pointnetfeat_forward.1} parent=1 // pred_region
      %156 = dma.done [#allocation9], 1024
    $region101: #{pointnetfeat_forward.1} parent=1 // pred_fallthru
      _
    // Predicated region
    $region102: #{pointnetfeat_forward.1} parent=1 // pred_check
      _
    $region103: #{pointnetfeat_forward.1} parent=1 // pred_check_branch
      %158 = sbr.rel (0) target = $region105
    $region104: #{pointnetfeat_forward.1} parent=1 // pred_region
      %159 = dma.done [#allocation12], 2048
    $region105: #{pointnetfeat_forward.1} parent=1 // pred_fallthru
      _
    // Predicated region
    $region106: #{pointnetfeat_forward.1} parent=1 // pred_check
      _
    $region107: #{pointnetfeat_forward.1} parent=1 // pred_check_branch
      %161 = sbr.rel (0) target = $region109
    $region108: #{pointnetfeat_forward.1} parent=1 // pred_region
      %162 = dma.done [#allocation12], 2048
    $region109: #{pointnetfeat_forward.1} parent=1 // pred_fallthru
      _
    %v164 = vld [vmem:[%s0] sm:$0x3f]
    %165 = vxpose.xlu0.b32.start [1/16] %v164, 128
    %166 = vxpose.xlu0.b32.cont [2/16] 0.0, 128
    %167 = vxpose.xlu0.b32.cont [3/16] 0.0, 128
    %168 = vxpose.xlu0.b32.cont [4/16] 0.0, 128
    %169 = vxpose.xlu0.b32.cont [5/16] 0.0, 128
    %170 = vxpose.xlu0.b32.cont [6/16] 0.0, 128
    %171 = vxpose.xlu0.b32.cont [7/16] 0.0, 128
    %172 = vxpose.xlu0.b32.cont [8/16] 0.0, 128
    %173 = vxpose.xlu0.b32.cont [9/16] 0.0, 128
    %174 = vxpose.xlu0.b32.cont [10/16] 0.0, 128
    %175 = vxpose.xlu0.b32.cont [11/16] 0.0, 128
    %176 = vxpose.xlu0.b32.cont [12/16] 0.0, 128
    %177 = vxpose.xlu0.b32.cont [13/16] 0.0, 128
    %178 = vxpose.xlu0.b32.cont [14/16] 0.0, 128
    %179 = vxpose.xlu0.b32.cont [15/16] 0.0, 128
    %180 = vxpose.xlu0.b32.end [16/16] 0.0, 128
    %v181 = vpop.trf.xlu0
    %v182 = vpop.trf.xlu0
    %v183 = vpop.trf.xlu0
    %v184 = vpop.trf.xlu0
    %v185 = vpop.trf.xlu0
    %v186 = vpop.trf.xlu0
    %v187 = vpop.trf.xlu0
    %v188 = vpop.trf.xlu0
    %v189 = vpop.trf.xlu0
    %v190 = vpop.trf.xlu0
    %v191 = vpop.trf.xlu0
    %v192 = vpop.trf.xlu0
    %v193 = vpop.trf.xlu0
    %v194 = vpop.trf.xlu0
    %v195 = vpop.trf.xlu0
    %v196 = vpop.trf.xlu0
    %v197 = vld [vmem:[%s1] sm:$0x1]
    %v198 = vld [vmem:[%s1 + $0x1] sm:$0x1]
    %v199 = vld [vmem:[%s1 + $0x2] sm:$0x1]
    %201 = vset.pattern.permute.xlu0 0
    %202 = vperm.xlu0 %201, %v181
    %v203 = vpop.permute.xlu0 %202
    %206 = vset.pattern.permute.xlu0 0
    %207 = vperm.xlu0 %206, %v182
    %v208 = vpop.permute.xlu0 %207
    %211 = vset.pattern.permute.xlu0 0
    %212 = vperm.xlu0 %211, %v183
    %v213 = vpop.permute.xlu0 %212
    %216 = vset.pattern.permute.xlu0 0
    %217 = vperm.xlu0 %216, %v184
    %v218 = vpop.permute.xlu0 %217
    %221 = vset.pattern.permute.xlu0 0
    %222 = vperm.xlu0 %221, %v185
    %v223 = vpop.permute.xlu0 %222
    %226 = vset.pattern.permute.xlu0 0
    %227 = vperm.xlu0 %226, %v186
    %v228 = vpop.permute.xlu0 %227
    %231 = vset.pattern.permute.xlu0 0
    %232 = vperm.xlu0 %231, %v187
    %v233 = vpop.permute.xlu0 %232
    %236 = vset.pattern.permute.xlu0 0
    %237 = vperm.xlu0 %236, %v188
    %v238 = vpop.permute.xlu0 %237
    %241 = vset.pattern.permute.xlu0 0
    %242 = vperm.xlu0 %241, %v189
    %v243 = vpop.permute.xlu0 %242
    %246 = vset.pattern.permute.xlu0 0
    %247 = vperm.xlu0 %246, %v190
    %v248 = vpop.permute.xlu0 %247
    %251 = vset.pattern.permute.xlu0 0
    %252 = vperm.xlu0 %251, %v191
    %v253 = vpop.permute.xlu0 %252
    %256 = vset.pattern.permute.xlu0 0
    %257 = vperm.xlu0 %256, %v192
    %v258 = vpop.permute.xlu0 %257
    %261 = vset.pattern.permute.xlu0 0
    %262 = vperm.xlu0 %261, %v193
    %v263 = vpop.permute.xlu0 %262
    %266 = vset.pattern.permute.xlu0 0
    %267 = vperm.xlu0 %266, %v194
    %v268 = vpop.permute.xlu0 %267
    %271 = vset.pattern.permute.xlu0 0
    %272 = vperm.xlu0 %271, %v195
    %v273 = vpop.permute.xlu0 %272
    %276 = vset.pattern.permute.xlu0 0
    %277 = vperm.xlu0 %276, %v196
    %v278 = vpop.permute.xlu0 %277
    %v280 = vlaneseq
    %v281 = vshrl.u32 %v280, 7
    %v282 = vsub.s32 0, %v281
    %v283 = vrot.slane %v197, %v282
    %v284 = vmul.f32 %v203, %v283
    %v285 = vmul.f32 %v208, %v283
    %v286 = vmul.f32 %v213, %v283
    %v287 = vmul.f32 %v218, %v283
    %v288 = vmul.f32 %v223, %v283
    %v289 = vmul.f32 %v228, %v283
    %v290 = vmul.f32 %v233, %v283
    %v291 = vmul.f32 %v238, %v283
    %v292 = vmul.f32 %v243, %v283
    %v293 = vmul.f32 %v248, %v283
    %v294 = vmul.f32 %v253, %v283
    %v295 = vmul.f32 %v258, %v283
    %v296 = vmul.f32 %v263, %v283
    %v297 = vmul.f32 %v268, %v283
    %v298 = vmul.f32 %v273, %v283
    %v299 = vmul.f32 %v278, %v283
    %300 = vset.pattern.permute.xlu0 1
    %301 = vperm.xlu0 %300, %v181
    %v302 = vpop.permute.xlu0 %301
    %304 = vset.pattern.permute.xlu0 1
    %305 = vperm.xlu0 %304, %v182
    %v306 = vpop.permute.xlu0 %305
    %308 = vset.pattern.permute.xlu0 1
    %309 = vperm.xlu0 %308, %v183
    %v310 = vpop.permute.xlu0 %309
    %312 = vset.pattern.permute.xlu0 1
    %313 = vperm.xlu0 %312, %v184
    %v314 = vpop.permute.xlu0 %313
    %316 = vset.pattern.permute.xlu0 1
    %317 = vperm.xlu0 %316, %v185
    %v318 = vpop.permute.xlu0 %317
    %320 = vset.pattern.permute.xlu0 1
    %321 = vperm.xlu0 %320, %v186
    %v322 = vpop.permute.xlu0 %321
    %324 = vset.pattern.permute.xlu0 1
    %325 = vperm.xlu0 %324, %v187
    %v326 = vpop.permute.xlu0 %325
    %328 = vset.pattern.permute.xlu0 1
    %329 = vperm.xlu0 %328, %v188
    %v330 = vpop.permute.xlu0 %329
    %332 = vset.pattern.permute.xlu0 1
    %333 = vperm.xlu0 %332, %v189
    %v334 = vpop.permute.xlu0 %333
    %336 = vset.pattern.permute.xlu0 1
    %337 = vperm.xlu0 %336, %v190
    %v338 = vpop.permute.xlu0 %337
    %340 = vset.pattern.permute.xlu0 1
    %341 = vperm.xlu0 %340, %v191
    %v342 = vpop.permute.xlu0 %341
    %344 = vset.pattern.permute.xlu0 1
    %345 = vperm.xlu0 %344, %v192
    %v346 = vpop.permute.xlu0 %345
    %348 = vset.pattern.permute.xlu0 1
    %349 = vperm.xlu0 %348, %v193
    %v350 = vpop.permute.xlu0 %349
    %352 = vset.pattern.permute.xlu0 1
    %353 = vperm.xlu0 %352, %v194
    %v354 = vpop.permute.xlu0 %353
    %356 = vset.pattern.permute.xlu0 1
    %357 = vperm.xlu0 %356, %v195
    %v358 = vpop.permute.xlu0 %357
    %360 = vset.pattern.permute.xlu0 1
    %361 = vperm.xlu0 %360, %v196
    %v362 = vpop.permute.xlu0 %361
    %v364 = vlaneseq
    %v365 = vshrl.u32 %v364, 7
    %v366 = vsub.s32 0, %v365
    %v367 = vrot.slane %v198, %v366
    %v368 = vmul.f32 %v302, %v367
    %v369 = vmul.f32 %v306, %v367
    %v370 = vmul.f32 %v310, %v367
    %v371 = vmul.f32 %v314, %v367
    %v372 = vmul.f32 %v318, %v367
    %v373 = vmul.f32 %v322, %v367
    %v374 = vmul.f32 %v326, %v367
    %v375 = vmul.f32 %v330, %v367
    %v376 = vmul.f32 %v334, %v367
    %v377 = vmul.f32 %v338, %v367
    %v378 = vmul.f32 %v342, %v367
    %v379 = vmul.f32 %v346, %v367
    %v380 = vmul.f32 %v350, %v367
    %v381 = vmul.f32 %v354, %v367
    %v382 = vmul.f32 %v358, %v367
    %v383 = vmul.f32 %v362, %v367
    %v384 = vadd.f32 %v284, %v368
    %v385 = vadd.f32 %v285, %v369
    %v386 = vadd.f32 %v286, %v370
    %v387 = vadd.f32 %v287, %v371
    %v388 = vadd.f32 %v288, %v372
    %v389 = vadd.f32 %v289, %v373
    %v390 = vadd.f32 %v290, %v374
    %v391 = vadd.f32 %v291, %v375
    %v392 = vadd.f32 %v292, %v376
    %v393 = vadd.f32 %v293, %v377
    %v394 = vadd.f32 %v294, %v378
    %v395 = vadd.f32 %v295, %v379
    %v396 = vadd.f32 %v296, %v380
    %v397 = vadd.f32 %v297, %v381
    %v398 = vadd.f32 %v298, %v382
    %v399 = vadd.f32 %v299, %v383
    %400 = vset.pattern.permute.xlu0 2
    %401 = vperm.xlu0 %400, %v181
    %v402 = vpop.permute.xlu0 %401
    %404 = vset.pattern.permute.xlu0 2
    %405 = vperm.xlu0 %404, %v182
    %v406 = vpop.permute.xlu0 %405
    %408 = vset.pattern.permute.xlu0 2
    %409 = vperm.xlu0 %408, %v183
    %v410 = vpop.permute.xlu0 %409
    %412 = vset.pattern.permute.xlu0 2
    %413 = vperm.xlu0 %412, %v184
    %v414 = vpop.permute.xlu0 %413
    %416 = vset.pattern.permute.xlu0 2
    %417 = vperm.xlu0 %416, %v185
    %v418 = vpop.permute.xlu0 %417
    %420 = vset.pattern.permute.xlu0 2
    %421 = vperm.xlu0 %420, %v186
    %v422 = vpop.permute.xlu0 %421
    %424 = vset.pattern.permute.xlu0 2
    %425 = vperm.xlu0 %424, %v187
    %v426 = vpop.permute.xlu0 %425
    %428 = vset.pattern.permute.xlu0 2
    %429 = vperm.xlu0 %428, %v188
    %v430 = vpop.permute.xlu0 %429
    %432 = vset.pattern.permute.xlu0 2
    %433 = vperm.xlu0 %432, %v189
    %v434 = vpop.permute.xlu0 %433
    %436 = vset.pattern.permute.xlu0 2
    %437 = vperm.xlu0 %436, %v190
    %v438 = vpop.permute.xlu0 %437
    %440 = vset.pattern.permute.xlu0 2
    %441 = vperm.xlu0 %440, %v191
    %v442 = vpop.permute.xlu0 %441
    %444 = vset.pattern.permute.xlu0 2
    %445 = vperm.xlu0 %444, %v192
    %v446 = vpop.permute.xlu0 %445
    %448 = vset.pattern.permute.xlu0 2
    %449 = vperm.xlu0 %448, %v193
    %v450 = vpop.permute.xlu0 %449
    %452 = vset.pattern.permute.xlu0 2
    %453 = vperm.xlu0 %452, %v194
    %v454 = vpop.permute.xlu0 %453
    %456 = vset.pattern.permute.xlu0 2
    %457 = vperm.xlu0 %456, %v195
    %v458 = vpop.permute.xlu0 %457
    %460 = vset.pattern.permute.xlu0 2
    %461 = vperm.xlu0 %460, %v196
    %v462 = vpop.permute.xlu0 %461
    %v464 = vlaneseq
    %v465 = vshrl.u32 %v464, 7
    %v466 = vsub.s32 0, %v465
    %v467 = vrot.slane %v199, %v466
    %v468 = vmul.f32 %v402, %v467
    %v469 = vmul.f32 %v406, %v467
    %v470 = vmul.f32 %v410, %v467
    %v471 = vmul.f32 %v414, %v467
    %v472 = vmul.f32 %v418, %v467
    %v473 = vmul.f32 %v422, %v467
    %v474 = vmul.f32 %v426, %v467
    %v475 = vmul.f32 %v430, %v467
    %v476 = vmul.f32 %v434, %v467
    %v477 = vmul.f32 %v438, %v467
    %v478 = vmul.f32 %v442, %v467
    %v479 = vmul.f32 %v446, %v467
    %v480 = vmul.f32 %v450, %v467
    %v481 = vmul.f32 %v454, %v467
    %v482 = vmul.f32 %v458, %v467
    %v483 = vmul.f32 %v462, %v467
    %v484 = vadd.f32 %v384, %v468
    %v485 = vadd.f32 %v385, %v469
    %v486 = vadd.f32 %v386, %v470
    %v487 = vadd.f32 %v387, %v471
    %v488 = vadd.f32 %v388, %v472
    %v489 = vadd.f32 %v389, %v473
    %v490 = vadd.f32 %v390, %v474
    %v491 = vadd.f32 %v391, %v475
    %v492 = vadd.f32 %v392, %v476
    %v493 = vadd.f32 %v393, %v477
    %v494 = vadd.f32 %v394, %v478
    %v495 = vadd.f32 %v395, %v479
    %v496 = vadd.f32 %v396, %v480
    %v497 = vadd.f32 %v397, %v481
    %v498 = vadd.f32 %v398, %v482
    %v499 = vadd.f32 %v399, %v483
    %500 = vset.pattern.permute.xlu0 3
    %501 = vperm.xlu0 %500, %v181
    %v502 = vpop.permute.xlu0 %501
    %504 = vset.pattern.permute.xlu0 3
    %505 = vperm.xlu0 %504, %v182
    %v506 = vpop.permute.xlu0 %505
    %508 = vset.pattern.permute.xlu0 3
    %509 = vperm.xlu0 %508, %v183
    %v510 = vpop.permute.xlu0 %509
    %512 = vset.pattern.permute.xlu0 3
    %513 = vperm.xlu0 %512, %v184
    %v514 = vpop.permute.xlu0 %513
    %516 = vset.pattern.permute.xlu0 3
    %517 = vperm.xlu0 %516, %v185
    %v518 = vpop.permute.xlu0 %517
    %520 = vset.pattern.permute.xlu0 3
    %521 = vperm.xlu0 %520, %v186
    %v522 = vpop.permute.xlu0 %521
    %524 = vset.pattern.permute.xlu0 3
    %525 = vperm.xlu0 %524, %v187
    %v526 = vpop.permute.xlu0 %525
    %528 = vset.pattern.permute.xlu0 3
    %529 = vperm.xlu0 %528, %v188
    %v530 = vpop.permute.xlu0 %529
    %532 = vset.pattern.permute.xlu0 3
    %533 = vperm.xlu0 %532, %v189
    %v534 = vpop.permute.xlu0 %533
    %536 = vset.pattern.permute.xlu0 3
    %537 = vperm.xlu0 %536, %v190
    %v538 = vpop.permute.xlu0 %537
    %540 = vset.pattern.permute.xlu0 3
    %541 = vperm.xlu0 %540, %v191
    %v542 = vpop.permute.xlu0 %541
    %544 = vset.pattern.permute.xlu0 3
    %545 = vperm.xlu0 %544, %v192
    %v546 = vpop.permute.xlu0 %545
    %548 = vset.pattern.permute.xlu0 3
    %549 = vperm.xlu0 %548, %v193
    %v550 = vpop.permute.xlu0 %549
    %552 = vset.pattern.permute.xlu0 3
    %553 = vperm.xlu0 %552, %v194
    %v554 = vpop.permute.xlu0 %553
    %556 = vset.pattern.permute.xlu0 3
    %557 = vperm.xlu0 %556, %v195
    %v558 = vpop.permute.xlu0 %557
    %560 = vset.pattern.permute.xlu0 3
    %561 = vperm.xlu0 %560, %v196
    %v562 = vpop.permute.xlu0 %561
    %v564 = vmul.f32 %v502, %v283
    %v565 = vmul.f32 %v506, %v283
    %v566 = vmul.f32 %v510, %v283
    %v567 = vmul.f32 %v514, %v283
    %v568 = vmul.f32 %v518, %v283
    %v569 = vmul.f32 %v522, %v283
    %v570 = vmul.f32 %v526, %v283
    %v571 = vmul.f32 %v530, %v283
    %v572 = vmul.f32 %v534, %v283
    %v573 = vmul.f32 %v538, %v283
    %v574 = vmul.f32 %v542, %v283
    %v575 = vmul.f32 %v546, %v283
    %v576 = vmul.f32 %v550, %v283
    %v577 = vmul.f32 %v554, %v283
    %v578 = vmul.f32 %v558, %v283
    %v579 = vmul.f32 %v562, %v283
    %580 = vset.pattern.permute.xlu0 4
    %581 = vperm.xlu0 %580, %v181
    %v582 = vpop.permute.xlu0 %581
    %584 = vset.pattern.permute.xlu0 4
    %585 = vperm.xlu0 %584, %v182
    %v586 = vpop.permute.xlu0 %585
    %588 = vset.pattern.permute.xlu0 4
    %589 = vperm.xlu0 %588, %v183
    %v590 = vpop.permute.xlu0 %589
    %592 = vset.pattern.permute.xlu0 4
    %593 = vperm.xlu0 %592, %v184
    %v594 = vpop.permute.xlu0 %593
    %596 = vset.pattern.permute.xlu0 4
    %597 = vperm.xlu0 %596, %v185
    %v598 = vpop.permute.xlu0 %597
    %600 = vset.pattern.permute.xlu0 4
    %601 = vperm.xlu0 %600, %v186
    %v602 = vpop.permute.xlu0 %601
    %604 = vset.pattern.permute.xlu0 4
    %605 = vperm.xlu0 %604, %v187
    %v606 = vpop.permute.xlu0 %605
    %608 = vset.pattern.permute.xlu0 4
    %609 = vperm.xlu0 %608, %v188
    %v610 = vpop.permute.xlu0 %609
    %612 = vset.pattern.permute.xlu0 4
    %613 = vperm.xlu0 %612, %v189
    %v614 = vpop.permute.xlu0 %613
    %616 = vset.pattern.permute.xlu0 4
    %617 = vperm.xlu0 %616, %v190
    %v618 = vpop.permute.xlu0 %617
    %620 = vset.pattern.permute.xlu0 4
    %621 = vperm.xlu0 %620, %v191
    %v622 = vpop.permute.xlu0 %621
    %624 = vset.pattern.permute.xlu0 4
    %625 = vperm.xlu0 %624, %v192
    %v626 = vpop.permute.xlu0 %625
    %628 = vset.pattern.permute.xlu0 4
    %629 = vperm.xlu0 %628, %v193
    %v630 = vpop.permute.xlu0 %629
    %632 = vset.pattern.permute.xlu0 4
    %633 = vperm.xlu0 %632, %v194
    %v634 = vpop.permute.xlu0 %633
    %636 = vset.pattern.permute.xlu0 4
    %637 = vperm.xlu0 %636, %v195
    %v638 = vpop.permute.xlu0 %637
    %640 = vset.pattern.permute.xlu0 4
    %641 = vperm.xlu0 %640, %v196
    %v642 = vpop.permute.xlu0 %641
    %v644 = vmul.f32 %v582, %v367
    %v645 = vmul.f32 %v586, %v367
    %v646 = vmul.f32 %v590, %v367
    %v647 = vmul.f32 %v594, %v367
    %v648 = vmul.f32 %v598, %v367
    %v649 = vmul.f32 %v602, %v367
    %v650 = vmul.f32 %v606, %v367
    %v651 = vmul.f32 %v610, %v367
    %v652 = vmul.f32 %v614, %v367
    %v653 = vmul.f32 %v618, %v367
    %v654 = vmul.f32 %v622, %v367
    %v655 = vmul.f32 %v626, %v367
    %v656 = vmul.f32 %v630, %v367
    %v657 = vmul.f32 %v634, %v367
    %v658 = vmul.f32 %v638, %v367
    %v659 = vmul.f32 %v642, %v367
    %v660 = vadd.f32 %v564, %v644
    %v661 = vadd.f32 %v565, %v645
    %v662 = vadd.f32 %v566, %v646
    %v663 = vadd.f32 %v567, %v647
    %v664 = vadd.f32 %v568, %v648
    %v665 = vadd.f32 %v569, %v649
    %v666 = vadd.f32 %v570, %v650
    %v667 = vadd.f32 %v571, %v651
    %v668 = vadd.f32 %v572, %v652
    %v669 = vadd.f32 %v573, %v653
    %v670 = vadd.f32 %v574, %v654
    %v671 = vadd.f32 %v575, %v655
    %v672 = vadd.f32 %v576, %v656
    %v673 = vadd.f32 %v577, %v657
    %v674 = vadd.f32 %v578, %v658
    %v675 = vadd.f32 %v579, %v659
    %676 = vset.pattern.permute.xlu0 5
    %677 = vperm.xlu0 %676, %v181
    %v678 = vpop.permute.xlu0 %677
    %680 = vset.pattern.permute.xlu0 5
    %681 = vperm.xlu0 %680, %v182
    %v682 = vpop.permute.xlu0 %681
    %684 = vset.pattern.permute.xlu0 5
    %685 = vperm.xlu0 %684, %v183
    %v686 = vpop.permute.xlu0 %685
    %688 = vset.pattern.permute.xlu0 5
    %689 = vperm.xlu0 %688, %v184
    %v690 = vpop.permute.xlu0 %689
    %692 = vset.pattern.permute.xlu0 5
    %693 = vperm.xlu0 %692, %v185
    %v694 = vpop.permute.xlu0 %693
    %696 = vset.pattern.permute.xlu0 5
    %697 = vperm.xlu0 %696, %v186
    %v698 = vpop.permute.xlu0 %697
    %700 = vset.pattern.permute.xlu0 5
    %701 = vperm.xlu0 %700, %v187
    %v702 = vpop.permute.xlu0 %701
    %704 = vset.pattern.permute.xlu0 5
    %705 = vperm.xlu0 %704, %v188
    %v706 = vpop.permute.xlu0 %705
    %708 = vset.pattern.permute.xlu0 5
    %709 = vperm.xlu0 %708, %v189
    %v710 = vpop.permute.xlu0 %709
    %712 = vset.pattern.permute.xlu0 5
    %713 = vperm.xlu0 %712, %v190
    %v714 = vpop.permute.xlu0 %713
    %716 = vset.pattern.permute.xlu0 5
    %717 = vperm.xlu0 %716, %v191
    %v718 = vpop.permute.xlu0 %717
    %720 = vset.pattern.permute.xlu0 5
    %721 = vperm.xlu0 %720, %v192
    %v722 = vpop.permute.xlu0 %721
    %724 = vset.pattern.permute.xlu0 5
    %725 = vperm.xlu0 %724, %v193
    %v726 = vpop.permute.xlu0 %725
    %728 = vset.pattern.permute.xlu0 5
    %729 = vperm.xlu0 %728, %v194
    %v730 = vpop.permute.xlu0 %729
    %732 = vset.pattern.permute.xlu0 5
    %733 = vperm.xlu0 %732, %v195
    %v734 = vpop.permute.xlu0 %733
    %736 = vset.pattern.permute.xlu0 5
    %737 = vperm.xlu0 %736, %v196
    %v738 = vpop.permute.xlu0 %737
    %v740 = vmul.f32 %v678, %v467
    %v741 = vmul.f32 %v682, %v467
    %v742 = vmul.f32 %v686, %v467
    %v743 = vmul.f32 %v690, %v467
    %v744 = vmul.f32 %v694, %v467
    %v745 = vmul.f32 %v698, %v467
    %v746 = vmul.f32 %v702, %v467
    %v747 = vmul.f32 %v706, %v467
    %v748 = vmul.f32 %v710, %v467
    %v749 = vmul.f32 %v714, %v467
    %v750 = vmul.f32 %v718, %v467
    %v751 = vmul.f32 %v722, %v467
    %v752 = vmul.f32 %v726, %v467
    %v753 = vmul.f32 %v730, %v467
    %v754 = vmul.f32 %v734, %v467
    %v755 = vmul.f32 %v738, %v467
    %v756 = vadd.f32 %v660, %v740
    %v757 = vadd.f32 %v661, %v741
    %v758 = vadd.f32 %v662, %v742
    %v759 = vadd.f32 %v663, %v743
    %v760 = vadd.f32 %v664, %v744
    %v761 = vadd.f32 %v665, %v745
    %v762 = vadd.f32 %v666, %v746
    %v763 = vadd.f32 %v667, %v747
    %v764 = vadd.f32 %v668, %v748
    %v765 = vadd.f32 %v669, %v749
    %v766 = vadd.f32 %v670, %v750
    %v767 = vadd.f32 %v671, %v751
    %v768 = vadd.f32 %v672, %v752
    %v769 = vadd.f32 %v673, %v753
    %v770 = vadd.f32 %v674, %v754
    %v771 = vadd.f32 %v675, %v755
    %v772 = vld [vmem:[%s2] sm:$0x1]
    %v774 = vlaneseq
    %v775 = vshrl.u32 %v774, 7
    %v776 = vsub.s32 0, %v775
    %v777 = vrot.slane %v772, %v776
    %v779 = vadd.f32 %v484, %v777
    %v780 = vadd.f32 %v485, %v777
    %v781 = vadd.f32 %v486, %v777
    %v782 = vadd.f32 %v487, %v777
    %v783 = vadd.f32 %v488, %v777
    %v784 = vadd.f32 %v489, %v777
    %v785 = vadd.f32 %v490, %v777
    %v786 = vadd.f32 %v491, %v777
    %v787 = vadd.f32 %v492, %v777
    %v788 = vadd.f32 %v493, %v777
    %v789 = vadd.f32 %v494, %v777
    %v790 = vadd.f32 %v495, %v777
    %v791 = vadd.f32 %v496, %v777
    %v792 = vadd.f32 %v497, %v777
    %v793 = vadd.f32 %v498, %v777
    %v794 = vadd.f32 %v499, %v777
    %v795 = vadd.f32 %v756, %v777
    %v796 = vadd.f32 %v757, %v777
    %v797 = vadd.f32 %v758, %v777
    %v798 = vadd.f32 %v759, %v777
    %v799 = vadd.f32 %v760, %v777
    %v800 = vadd.f32 %v761, %v777
    %v801 = vadd.f32 %v762, %v777
    %v802 = vadd.f32 %v763, %v777
    %v803 = vadd.f32 %v764, %v777
    %v804 = vadd.f32 %v765, %v777
    %v805 = vadd.f32 %v766, %v777
    %v806 = vadd.f32 %v767, %v777
    %v807 = vadd.f32 %v768, %v777
    %v808 = vadd.f32 %v769, %v777
    %v809 = vadd.f32 %v770, %v777
    %v810 = vadd.f32 %v771, %v777
    %v811 = vmax.f32 %v779, 0.0
    %v812 = vmax.f32 %v780, 0.0
    %v813 = vmax.f32 %v781, 0.0
    %v814 = vmax.f32 %v782, 0.0
    %v815 = vmax.f32 %v783, 0.0
    %v816 = vmax.f32 %v784, 0.0
    %v817 = vmax.f32 %v785, 0.0
    %v818 = vmax.f32 %v786, 0.0
    %v819 = vmax.f32 %v787, 0.0
    %v820 = vmax.f32 %v788, 0.0
    %v821 = vmax.f32 %v789, 0.0
    %v822 = vmax.f32 %v790, 0.0
    %v823 = vmax.f32 %v791, 0.0
    %v824 = vmax.f32 %v792, 0.0
    %v825 = vmax.f32 %v793, 0.0
    %v826 = vmax.f32 %v794, 0.0
    %v827 = vmax.f32 %v795, 0.0
    %v828 = vmax.f32 %v796, 0.0
    %v829 = vmax.f32 %v797, 0.0
    %v830 = vmax.f32 %v798, 0.0
    %v831 = vmax.f32 %v799, 0.0
    %v832 = vmax.f32 %v800, 0.0
    %v833 = vmax.f32 %v801, 0.0
    %v834 = vmax.f32 %v802, 0.0
    %v835 = vmax.f32 %v803, 0.0
    %v836 = vmax.f32 %v804, 0.0
    %v837 = vmax.f32 %v805, 0.0
    %v838 = vmax.f32 %v806, 0.0
    %v839 = vmax.f32 %v807, 0.0
    %v840 = vmax.f32 %v808, 0.0
    %v841 = vmax.f32 %v809, 0.0
    %v842 = vmax.f32 %v810, 0.0
    %v843 = vpack.c.bf16 %v812, %v811
    %v844 = vpack.c.bf16 %v814, %v813
    %v845 = vpack.c.bf16 %v816, %v815
    %v846 = vpack.c.bf16 %v818, %v817
    %v847 = vpack.c.bf16 %v820, %v819
    %v848 = vpack.c.bf16 %v822, %v821
    %v849 = vpack.c.bf16 %v824, %v823
    %v850 = vpack.c.bf16 %v826, %v825
    %v851 = vpack.c.bf16 %v828, %v827
    %v852 = vpack.c.bf16 %v830, %v829
    %v853 = vpack.c.bf16 %v832, %v831
    %v854 = vpack.c.bf16 %v834, %v833
    %v855 = vpack.c.bf16 %v836, %v835
    %v856 = vpack.c.bf16 %v838, %v837
    %v857 = vpack.c.bf16 %v840, %v839
    %v858 = vpack.c.bf16 %v842, %v841
    %v859 = vld [vmem:[#allocation2] sm:$0xf]
    %v860 = vld [vmem:[#allocation2 + $0x4] sm:$0xf]
    %v861 = vld [vmem:[#allocation2 + $0x8] sm:$0xf]
    %v862 = vld [vmem:[#allocation2 + $0xc] sm:$0xf]
    %v863 = vld [vmem:[#allocation2 + $0x10] sm:$0xf]
    %v864 = vld [vmem:[#allocation2 + $0x14] sm:$0xf]
    %v865 = vld [vmem:[#allocation2 + $0x18] sm:$0xf]
    %v866 = vld [vmem:[#allocation2 + $0x1c] sm:$0xf]
    %v867 = vld [vmem:[%s4] sm:$0x1]
    %v869 = vlaneseq
    %v870 = vshrl.u32 %v869, 7
    %v871 = vsub.s32 0, %v870
    %v872 = vrot.slane %v867, %v871
    %v882 = vunpack.c.l.b16 %v859
    %v883 = vunpack.c.l.b16 %v860
    %v884 = vunpack.c.l.b16 %v861
    %v885 = vunpack.c.l.b16 %v862
    %v886 = vunpack.c.l.b16 %v863
    %v887 = vunpack.c.l.b16 %v864
    %v888 = vunpack.c.l.b16 %v865
    %v889 = vunpack.c.l.b16 %v866
    %v890 = vpack.c.b16 %v883, %v882
    %v891 = vpack.c.b16 %v885, %v884
    %v892 = vpack.c.b16 %v887, %v886
    %v893 = vpack.c.b16 %v889, %v888
    %vm898 = vcmask 523264
    %v900 = vsel %vm898, %v843, 0
    %v903 = vsel %vm898, %v844, 0
    %v906 = vsel %vm898, %v845, 0
    %v909 = vsel %vm898, %v846, 0
    %v912 = vsel %vm898, %v847, 0
    %v915 = vsel %vm898, %v848, 0
    %v918 = vsel %vm898, %v849, 0
    %v921 = vsel %vm898, %v850, 0
    %v924 = vsel %vm898, %v851, 0
    %v927 = vsel %vm898, %v852, 0
    %v930 = vsel %vm898, %v853, 0
    %v933 = vsel %vm898, %v854, 0
    %v936 = vsel %vm898, %v855, 0
    %v939 = vsel %vm898, %v856, 0
    %v942 = vsel %vm898, %v857, 0
    %v945 = vsel %vm898, %v858, 0
    %947 = vmatprep.subr.bf16.mxu0 0
    %948 = vmatpush1.bf16.msra.mxu0 0
    %949 = vmatprep.subr.bf16.mxu0 0
    %950 = vmatpush1.bf16.msra.mxu0 0
    %951 = vmatprep.subr.bf16.mxu0 0
    %952 = vmatpush1.bf16.msra.mxu0 0
    %953 = vmatprep.subr.bf16.mxu0 0
    %954 = vmatpush1.bf16.msra.mxu0 0
    %955 = vmatprep.subr.bf16.mxu0 0
    %956 = vmatpush1.bf16.msra.mxu0 %v893
    %957 = vmatprep.subr.bf16.mxu0 0
    %958 = vmatpush1.bf16.msra.mxu0 %v892
    %959 = vmatprep.subr.bf16.mxu0 0
    %960 = vmatpush1.bf16.msra.mxu0 %v891
    %961 = vmatprep.subr.bf16.mxu0 0
    %962 = vmatpush1.bf16.msra.mxu0 %v890
    %963 = vmatprep.subr.bf16.mxu0 0
    %964 = vmatpush2.bf16.msra.mxu0 0
    %965 = vmatprep.subr.bf16.mxu0 0
    %966 = vmatpush2.bf16.msra.mxu0 0
    %967 = vmatprep.subr.bf16.mxu0 0
    %968 = vmatpush2.bf16.msra.mxu0 0
    %969 = vmatprep.subr.bf16.mxu0 0
    %970 = vmatpush2.bf16.msra.mxu0 0
    %971 = vmatprep.subr.bf16.mxu0 0
    %972 = vmatpush2.bf16.msra.mxu0 0
    %973 = vmatprep.subr.bf16.mxu0 0
    %974 = vmatpush2.bf16.msra.mxu0 0
    %975 = vmatprep.subr.bf16.mxu0 0
    %976 = vmatpush2.bf16.msra.mxu0 0
    %977 = vmatprep.subr.bf16.mxu0 0
    %978 = vmatpush2.bf16.msra.mxu0 0
    %979 = vmatprep.mubr.bf16.mxu0 0
    %980 = vmatmul.mubr.bf16.gmra.mxu0 %v900
    %v981 = vpop.f32.mrf.mxu0
    %v982 = vadd.f32 %v872, %v981
    %v983 = vpop.f32.mrf.mxu0
    %v984 = vpop.f32.mrf.mxu0
    %v985 = vadd.f32 %v872, %v984
    %v986 = vpop.f32.mrf.mxu0
    %987 = vmatprep.mubr.bf16.mxu0 0
    %988 = vmatmul.mubr.bf16.gmra.mxu0 %v903
    %v989 = vpop.f32.mrf.mxu0
    %v990 = vadd.f32 %v872, %v989
    %v991 = vpop.f32.mrf.mxu0
    %v992 = vpop.f32.mrf.mxu0
    %v993 = vadd.f32 %v872, %v992
    %v994 = vpop.f32.mrf.mxu0
    %995 = vmatprep.mubr.bf16.mxu0 0
    %996 = vmatmul.mubr.bf16.gmra.mxu0 %v906
    %v997 = vpop.f32.mrf.mxu0
    %v998 = vadd.f32 %v872, %v997
    %v999 = vpop.f32.mrf.mxu0
    %v1000 = vpop.f32.mrf.mxu0
    %v1001 = vadd.f32 %v872, %v1000
    %v1002 = vpop.f32.mrf.mxu0
    %1003 = vmatprep.mubr.bf16.mxu0 0
    %1004 = vmatmul.mubr.bf16.gmra.mxu0 %v909
    %v1005 = vpop.f32.mrf.mxu0
    %v1006 = vadd.f32 %v872, %v1005
    %v1007 = vpop.f32.mrf.mxu0
    %v1008 = vpop.f32.mrf.mxu0
    %v1009 = vadd.f32 %v872, %v1008
    %v1010 = vpop.f32.mrf.mxu0
    %1011 = vmatprep.mubr.bf16.mxu0 0
    %1012 = vmatmul.mubr.bf16.gmra.mxu0 %v912
    %v1013 = vpop.f32.mrf.mxu0
    %v1014 = vadd.f32 %v872, %v1013
    %v1015 = vpop.f32.mrf.mxu0
    %v1016 = vpop.f32.mrf.mxu0
    %v1017 = vadd.f32 %v872, %v1016
    %v1018 = vpop.f32.mrf.mxu0
    %1019 = vmatprep.mubr.bf16.mxu0 0
    %1020 = vmatmul.mubr.bf16.gmra.mxu0 %v915
    %v1021 = vpop.f32.mrf.mxu0
    %v1022 = vadd.f32 %v872, %v1021
    %v1023 = vpop.f32.mrf.mxu0
    %v1024 = vpop.f32.mrf.mxu0
    %v1025 = vadd.f32 %v872, %v1024
    %v1026 = vpop.f32.mrf.mxu0
    %1027 = vmatprep.mubr.bf16.mxu0 0
    %1028 = vmatmul.mubr.bf16.gmra.mxu0 %v918
    %v1029 = vpop.f32.mrf.mxu0
    %v1030 = vadd.f32 %v872, %v1029
    %v1031 = vpop.f32.mrf.mxu0
    %v1032 = vpop.f32.mrf.mxu0
    %v1033 = vadd.f32 %v872, %v1032
    %v1034 = vpop.f32.mrf.mxu0
    %1035 = vmatprep.mubr.bf16.mxu0 0
    %1036 = vmatmul.mubr.bf16.gmra.mxu0 %v921
    %v1037 = vpop.f32.mrf.mxu0
    %v1038 = vadd.f32 %v872, %v1037
    %v1039 = vpop.f32.mrf.mxu0
    %v1040 = vpop.f32.mrf.mxu0
    %v1041 = vadd.f32 %v872, %v1040
    %v1042 = vpop.f32.mrf.mxu0
    %1043 = vmatprep.mubr.bf16.mxu0 0
    %1044 = vmatmul.mubr.bf16.gmra.mxu0 %v924
    %v1045 = vpop.f32.mrf.mxu0
    %v1046 = vadd.f32 %v872, %v1045
    %v1047 = vpop.f32.mrf.mxu0
    %v1048 = vpop.f32.mrf.mxu0
    %v1049 = vadd.f32 %v872, %v1048
    %v1050 = vpop.f32.mrf.mxu0
    %1051 = vmatprep.mubr.bf16.mxu0 0
    %1052 = vmatmul.mubr.bf16.gmra.mxu0 %v927
    %v1053 = vpop.f32.mrf.mxu0
    %v1054 = vadd.f32 %v872, %v1053
    %v1055 = vpop.f32.mrf.mxu0
    %v1056 = vpop.f32.mrf.mxu0
    %v1057 = vadd.f32 %v872, %v1056
    %v1058 = vpop.f32.mrf.mxu0
    %1059 = vmatprep.mubr.bf16.mxu0 0
    %1060 = vmatmul.mubr.bf16.gmra.mxu0 %v930
    %v1061 = vpop.f32.mrf.mxu0
    %v1062 = vadd.f32 %v872, %v1061
    %v1063 = vpop.f32.mrf.mxu0
    %v1064 = vpop.f32.mrf.mxu0
    %v1065 = vadd.f32 %v872, %v1064
    %v1066 = vpop.f32.mrf.mxu0
    %1067 = vmatprep.mubr.bf16.mxu0 0
    %1068 = vmatmul.mubr.bf16.gmra.mxu0 %v933
    %v1069 = vpop.f32.mrf.mxu0
    %v1070 = vadd.f32 %v872, %v1069
    %v1071 = vpop.f32.mrf.mxu0
    %v1072 = vpop.f32.mrf.mxu0
    %v1073 = vadd.f32 %v872, %v1072
    %v1074 = vpop.f32.mrf.mxu0
    %1075 = vmatprep.mubr.bf16.mxu0 0
    %1076 = vmatmul.mubr.bf16.gmra.mxu0 %v936
    %v1077 = vpop.f32.mrf.mxu0
    %v1078 = vadd.f32 %v872, %v1077
    %v1079 = vpop.f32.mrf.mxu0
    %v1080 = vpop.f32.mrf.mxu0
    %v1081 = vadd.f32 %v872, %v1080
    %v1082 = vpop.f32.mrf.mxu0
    %1083 = vmatprep.mubr.bf16.mxu0 0
    %1084 = vmatmul.mubr.bf16.gmra.mxu0 %v939
    %v1085 = vpop.f32.mrf.mxu0
    %v1086 = vadd.f32 %v872, %v1085
    %v1087 = vpop.f32.mrf.mxu0
    %v1088 = vpop.f32.mrf.mxu0
    %v1089 = vadd.f32 %v872, %v1088
    %v1090 = vpop.f32.mrf.mxu0
    %1091 = vmatprep.mubr.bf16.mxu0 0
    %1092 = vmatmul.mubr.bf16.gmra.mxu0 %v942
    %v1093 = vpop.f32.mrf.mxu0
    %v1094 = vadd.f32 %v872, %v1093
    %v1095 = vpop.f32.mrf.mxu0
    %v1096 = vpop.f32.mrf.mxu0
    %v1097 = vadd.f32 %v872, %v1096
    %v1098 = vpop.f32.mrf.mxu0
    %1099 = vmatprep.mubr.bf16.mxu0 0
    %1100 = vmatmul.mubr.bf16.gmra.mxu0 %v945
    %v1101 = vpop.f32.mrf.mxu0
    %v1102 = vadd.f32 %v872, %v1101
    %v1103 = vpop.f32.mrf.mxu0
    %v1104 = vpop.f32.mrf.mxu0
    %v1105 = vadd.f32 %v872, %v1104
    %v1106 = vpop.f32.mrf.mxu0
    %1107 = vdwg.mxu0
    %v1108 = vmax.f32 %v982, 0.0
    %v1109 = vmax.f32 %v985, 0.0
    %v1110 = vmax.f32 %v990, 0.0
    %v1111 = vmax.f32 %v993, 0.0
    %v1112 = vmax.f32 %v998, 0.0
    %v1113 = vmax.f32 %v1001, 0.0
    %v1114 = vmax.f32 %v1006, 0.0
    %v1115 = vmax.f32 %v1009, 0.0
    %v1116 = vmax.f32 %v1014, 0.0
    %v1117 = vmax.f32 %v1017, 0.0
    %v1118 = vmax.f32 %v1022, 0.0
    %v1119 = vmax.f32 %v1025, 0.0
    %v1120 = vmax.f32 %v1030, 0.0
    %v1121 = vmax.f32 %v1033, 0.0
    %v1122 = vmax.f32 %v1038, 0.0
    %v1123 = vmax.f32 %v1041, 0.0
    %v1124 = vmax.f32 %v1046, 0.0
    %v1125 = vmax.f32 %v1049, 0.0
    %v1126 = vmax.f32 %v1054, 0.0
    %v1127 = vmax.f32 %v1057, 0.0
    %v1128 = vmax.f32 %v1062, 0.0
    %v1129 = vmax.f32 %v1065, 0.0
    %v1130 = vmax.f32 %v1070, 0.0
    %v1131 = vmax.f32 %v1073, 0.0
    %v1132 = vmax.f32 %v1078, 0.0
    %v1133 = vmax.f32 %v1081, 0.0
    %v1134 = vmax.f32 %v1086, 0.0
    %v1135 = vmax.f32 %v1089, 0.0
    %v1136 = vmax.f32 %v1094, 0.0
    %v1137 = vmax.f32 %v1097, 0.0
    %v1138 = vmax.f32 %v1102, 0.0
    %v1139 = vmax.f32 %v1105, 0.0
    %v1140 = vpack.c.bf16 %v1109, %v1108
    %v1141 = vpack.c.bf16 %v1111, %v1110
    %v1142 = vpack.c.bf16 %v1113, %v1112
    %v1143 = vpack.c.bf16 %v1115, %v1114
    %v1144 = vpack.c.bf16 %v1117, %v1116
    %v1145 = vpack.c.bf16 %v1119, %v1118
    %v1146 = vpack.c.bf16 %v1121, %v1120
    %v1147 = vpack.c.bf16 %v1123, %v1122
    %v1148 = vpack.c.bf16 %v1125, %v1124
    %v1149 = vpack.c.bf16 %v1127, %v1126
    %v1150 = vpack.c.bf16 %v1129, %v1128
    %v1151 = vpack.c.bf16 %v1131, %v1130
    %v1152 = vpack.c.bf16 %v1133, %v1132
    %v1153 = vpack.c.bf16 %v1135, %v1134
    %v1154 = vpack.c.bf16 %v1137, %v1136
    %v1155 = vpack.c.bf16 %v1139, %v1138
    %v1156 = vld [vmem:[#allocation5] sm:$0xff]
    %v1157 = vld [vmem:[#allocation5 + $0x8] sm:$0xff]
    %v1158 = vld [vmem:[#allocation5 + $0x10] sm:$0xff]
    %v1159 = vld [vmem:[#allocation5 + $0x18] sm:$0xff]
    %v1160 = vld [vmem:[#allocation5 + $0x20] sm:$0xff]
    %v1161 = vld [vmem:[#allocation5 + $0x28] sm:$0xff]
    %v1162 = vld [vmem:[#allocation5 + $0x30] sm:$0xff]
    %v1163 = vld [vmem:[#allocation5 + $0x38] sm:$0xff]
    %v1164 = vld [vmem:[#allocation5 + $0x40] sm:$0xff]
    %v1165 = vld [vmem:[#allocation5 + $0x48] sm:$0xff]
    %v1166 = vld [vmem:[#allocation5 + $0x50] sm:$0xff]
    %v1167 = vld [vmem:[#allocation5 + $0x58] sm:$0xff]
    %v1168 = vld [vmem:[#allocation5 + $0x60] sm:$0xff]
    %v1169 = vld [vmem:[#allocation5 + $0x68] sm:$0xff]
    %v1170 = vld [vmem:[#allocation5 + $0x70] sm:$0xff]
    %v1171 = vld [vmem:[#allocation5 + $0x78] sm:$0xff]
    %v1172 = vld [vmem:[%s6] sm:$0x3]
    %v1174 = vlaneseq
    %v1175 = vshrl.u32 %v1174, 7
    %v1176 = vsub.s32 0, %v1175
    %v1177 = vrot.slane %v1172, %v1176
    %v1178 = vlaneseq
    %v1179 = vshrl.u32 %v1178, 7
    %v1180 = vsub.s32 1, %v1179
    %v1181 = vrot.slane %v1172, %v1180
    %v1200 = vunpack.c.l.b16 %v1156
    %v1201 = vunpack.c.h.b16 %v1156
    %v1202 = vunpack.c.l.b16 %v1157
    %v1203 = vunpack.c.h.b16 %v1157
    %v1204 = vunpack.c.l.b16 %v1158
    %v1205 = vunpack.c.h.b16 %v1158
    %v1206 = vunpack.c.l.b16 %v1159
    %v1207 = vunpack.c.h.b16 %v1159
    %v1208 = vunpack.c.l.b16 %v1160
    %v1209 = vunpack.c.h.b16 %v1160
    %v1210 = vunpack.c.l.b16 %v1161
    %v1211 = vunpack.c.h.b16 %v1161
    %v1212 = vunpack.c.l.b16 %v1162
    %v1213 = vunpack.c.h.b16 %v1162
    %v1214 = vunpack.c.l.b16 %v1163
    %v1215 = vunpack.c.h.b16 %v1163
    %v1216 = vunpack.c.l.b16 %v1164
    %v1217 = vunpack.c.h.b16 %v1164
    %v1218 = vunpack.c.l.b16 %v1165
    %v1219 = vunpack.c.h.b16 %v1165
    %v1220 = vunpack.c.l.b16 %v1166
    %v1221 = vunpack.c.h.b16 %v1166
    %v1222 = vunpack.c.l.b16 %v1167
    %v1223 = vunpack.c.h.b16 %v1167
    %v1224 = vunpack.c.l.b16 %v1168
    %v1225 = vunpack.c.h.b16 %v1168
    %v1226 = vunpack.c.l.b16 %v1169
    %v1227 = vunpack.c.h.b16 %v1169
    %v1228 = vunpack.c.l.b16 %v1170
    %v1229 = vunpack.c.h.b16 %v1170
    %v1230 = vunpack.c.l.b16 %v1171
    %v1231 = vunpack.c.h.b16 %v1171
    %v1232 = vpack.c.b16 %v1202, %v1200
    %v1233 = vpack.c.b16 %v1203, %v1201
    %v1234 = vpack.c.b16 %v1206, %v1204
    %v1235 = vpack.c.b16 %v1207, %v1205
    %v1236 = vpack.c.b16 %v1210, %v1208
    %v1237 = vpack.c.b16 %v1211, %v1209
    %v1238 = vpack.c.b16 %v1214, %v1212
    %v1239 = vpack.c.b16 %v1215, %v1213
    %v1240 = vpack.c.b16 %v1218, %v1216
    %v1241 = vpack.c.b16 %v1219, %v1217
    %v1242 = vpack.c.b16 %v1222, %v1220
    %v1243 = vpack.c.b16 %v1223, %v1221
    %v1244 = vpack.c.b16 %v1226, %v1224
    %v1245 = vpack.c.b16 %v1227, %v1225
    %v1246 = vpack.c.b16 %v1230, %v1228
    %v1247 = vpack.c.b16 %v1231, %v1229
    %1264 = vmatprep.subr.bf16.mxu0 %v1247
    %1265 = vmatpush1.bf16.msra.mxu0 %v1246
    %1266 = vmatprep.subr.bf16.mxu0 %v1245
    %1267 = vmatpush1.bf16.msra.mxu0 %v1244
    %1268 = vmatprep.subr.bf16.mxu0 %v1243
    %1269 = vmatpush1.bf16.msra.mxu0 %v1242
    %1270 = vmatprep.subr.bf16.mxu0 %v1241
    %1271 = vmatpush1.bf16.msra.mxu0 %v1240
    %1272 = vmatprep.subr.bf16.mxu0 %v1239
    %1273 = vmatpush1.bf16.msra.mxu0 %v1238
    %1274 = vmatprep.subr.bf16.mxu0 %v1237
    %1275 = vmatpush1.bf16.msra.mxu0 %v1236
    %1276 = vmatprep.subr.bf16.mxu0 %v1235
    %1277 = vmatpush1.bf16.msra.mxu0 %v1234
    %1278 = vmatprep.subr.bf16.mxu0 %v1233
    %1279 = vmatpush1.bf16.msra.mxu0 %v1232
    %1280 = vmatprep.subr.bf16.mxu0 0
    %1281 = vmatpush2.bf16.msra.mxu0 0
    %1282 = vmatprep.subr.bf16.mxu0 0
    %1283 = vmatpush2.bf16.msra.mxu0 0
    %1284 = vmatprep.subr.bf16.mxu0 0
    %1285 = vmatpush2.bf16.msra.mxu0 0
    %1286 = vmatprep.subr.bf16.mxu0 0
    %1287 = vmatpush2.bf16.msra.mxu0 0
    %1288 = vmatprep.subr.bf16.mxu0 0
    %1289 = vmatpush2.bf16.msra.mxu0 0
    %1290 = vmatprep.subr.bf16.mxu0 0
    %1291 = vmatpush2.bf16.msra.mxu0 0
    %1292 = vmatprep.subr.bf16.mxu0 0
    %1293 = vmatpush2.bf16.msra.mxu0 0
    %1294 = vmatprep.subr.bf16.mxu0 0
    %1295 = vmatpush2.bf16.msra.mxu0 0
    %1296 = vmatprep.mubr.bf16.mxu0 0
    %1297 = vmatmul.mubr.bf16.gmra.mxu0 %v1140
    %v1298 = vpop.f32.mrf.mxu0
    %v1299 = vadd.f32 %v1177, %v1298
    %v1300 = vpop.f32.mrf.mxu0
    %v1301 = vadd.f32 %v1181, %v1300
    %v1302 = vpop.f32.mrf.mxu0
    %v1303 = vadd.f32 %v1177, %v1302
    %v1304 = vpop.f32.mrf.mxu0
    %v1305 = vadd.f32 %v1181, %v1304
    %1306 = vmatprep.mubr.bf16.mxu0 0
    %1307 = vmatmul.mubr.bf16.gmra.mxu0 %v1141
    %v1308 = vpop.f32.mrf.mxu0
    %v1309 = vadd.f32 %v1177, %v1308
    %v1310 = vpop.f32.mrf.mxu0
    %v1311 = vadd.f32 %v1181, %v1310
    %v1312 = vpop.f32.mrf.mxu0
    %v1313 = vadd.f32 %v1177, %v1312
    %v1314 = vpop.f32.mrf.mxu0
    %v1315 = vadd.f32 %v1181, %v1314
    %1316 = vmatprep.mubr.bf16.mxu0 0
    %1317 = vmatmul.mubr.bf16.gmra.mxu0 %v1142
    %v1318 = vpop.f32.mrf.mxu0
    %v1319 = vadd.f32 %v1177, %v1318
    %v1320 = vpop.f32.mrf.mxu0
    %v1321 = vadd.f32 %v1181, %v1320
    %v1322 = vpop.f32.mrf.mxu0
    %v1323 = vadd.f32 %v1177, %v1322
    %v1324 = vpop.f32.mrf.mxu0
    %v1325 = vadd.f32 %v1181, %v1324
    %1326 = vmatprep.mubr.bf16.mxu0 0
    %1327 = vmatmul.mubr.bf16.gmra.mxu0 %v1143
    %v1328 = vpop.f32.mrf.mxu0
    %v1329 = vadd.f32 %v1177, %v1328
    %v1330 = vpop.f32.mrf.mxu0
    %v1331 = vadd.f32 %v1181, %v1330
    %v1332 = vpop.f32.mrf.mxu0
    %v1333 = vadd.f32 %v1177, %v1332
    %v1334 = vpop.f32.mrf.mxu0
    %v1335 = vadd.f32 %v1181, %v1334
    %1336 = vmatprep.mubr.bf16.mxu0 0
    %1337 = vmatmul.mubr.bf16.gmra.mxu0 %v1144
    %v1338 = vpop.f32.mrf.mxu0
    %v1339 = vadd.f32 %v1177, %v1338
    %v1340 = vpop.f32.mrf.mxu0
    %v1341 = vadd.f32 %v1181, %v1340
    %v1342 = vpop.f32.mrf.mxu0
    %v1343 = vadd.f32 %v1177, %v1342
    %v1344 = vpop.f32.mrf.mxu0
    %v1345 = vadd.f32 %v1181, %v1344
    %1346 = vmatprep.mubr.bf16.mxu0 0
    %1347 = vmatmul.mubr.bf16.gmra.mxu0 %v1145
    %v1348 = vpop.f32.mrf.mxu0
    %v1349 = vadd.f32 %v1177, %v1348
    %v1350 = vpop.f32.mrf.mxu0
    %v1351 = vadd.f32 %v1181, %v1350
    %v1352 = vpop.f32.mrf.mxu0
    %v1353 = vadd.f32 %v1177, %v1352
    %v1354 = vpop.f32.mrf.mxu0
    %v1355 = vadd.f32 %v1181, %v1354
    %1356 = vmatprep.mubr.bf16.mxu0 0
    %1357 = vmatmul.mubr.bf16.gmra.mxu0 %v1146
    %v1358 = vpop.f32.mrf.mxu0
    %v1359 = vadd.f32 %v1177, %v1358
    %v1360 = vpop.f32.mrf.mxu0
    %v1361 = vadd.f32 %v1181, %v1360
    %v1362 = vpop.f32.mrf.mxu0
    %v1363 = vadd.f32 %v1177, %v1362
    %v1364 = vpop.f32.mrf.mxu0
    %v1365 = vadd.f32 %v1181, %v1364
    %1366 = vmatprep.mubr.bf16.mxu0 0
    %1367 = vmatmul.mubr.bf16.gmra.mxu0 %v1147
    %v1368 = vpop.f32.mrf.mxu0
    %v1369 = vadd.f32 %v1177, %v1368
    %v1370 = vpop.f32.mrf.mxu0
    %v1371 = vadd.f32 %v1181, %v1370
    %v1372 = vpop.f32.mrf.mxu0
    %v1373 = vadd.f32 %v1177, %v1372
    %v1374 = vpop.f32.mrf.mxu0
    %v1375 = vadd.f32 %v1181, %v1374
    %1376 = vmatprep.mubr.bf16.mxu0 0
    %1377 = vmatmul.mubr.bf16.gmra.mxu0 %v1148
    %v1378 = vpop.f32.mrf.mxu0
    %v1379 = vadd.f32 %v1177, %v1378
    %v1380 = vpop.f32.mrf.mxu0
    %v1381 = vadd.f32 %v1181, %v1380
    %v1382 = vpop.f32.mrf.mxu0
    %v1383 = vadd.f32 %v1177, %v1382
    %v1384 = vpop.f32.mrf.mxu0
    %v1385 = vadd.f32 %v1181, %v1384
    %1386 = vmatprep.mubr.bf16.mxu0 0
    %1387 = vmatmul.mubr.bf16.gmra.mxu0 %v1149
    %v1388 = vpop.f32.mrf.mxu0
    %v1389 = vadd.f32 %v1177, %v1388
    %v1390 = vpop.f32.mrf.mxu0
    %v1391 = vadd.f32 %v1181, %v1390
    %v1392 = vpop.f32.mrf.mxu0
    %v1393 = vadd.f32 %v1177, %v1392
    %v1394 = vpop.f32.mrf.mxu0
    %v1395 = vadd.f32 %v1181, %v1394
    %1396 = vmatprep.mubr.bf16.mxu0 0
    %1397 = vmatmul.mubr.bf16.gmra.mxu0 %v1150
    %v1398 = vpop.f32.mrf.mxu0
    %v1399 = vadd.f32 %v1177, %v1398
    %v1400 = vpop.f32.mrf.mxu0
    %v1401 = vadd.f32 %v1181, %v1400
    %v1402 = vpop.f32.mrf.mxu0
    %v1403 = vadd.f32 %v1177, %v1402
    %v1404 = vpop.f32.mrf.mxu0
    %v1405 = vadd.f32 %v1181, %v1404
    %1406 = vmatprep.mubr.bf16.mxu0 0
    %1407 = vmatmul.mubr.bf16.gmra.mxu0 %v1151
    %v1408 = vpop.f32.mrf.mxu0
    %v1409 = vadd.f32 %v1177, %v1408
    %v1410 = vpop.f32.mrf.mxu0
    %v1411 = vadd.f32 %v1181, %v1410
    %v1412 = vpop.f32.mrf.mxu0
    %v1413 = vadd.f32 %v1177, %v1412
    %v1414 = vpop.f32.mrf.mxu0
    %v1415 = vadd.f32 %v1181, %v1414
    %1416 = vmatprep.mubr.bf16.mxu0 0
    %1417 = vmatmul.mubr.bf16.gmra.mxu0 %v1152
    %v1418 = vpop.f32.mrf.mxu0
    %v1419 = vadd.f32 %v1177, %v1418
    %v1420 = vpop.f32.mrf.mxu0
    %v1421 = vadd.f32 %v1181, %v1420
    %v1422 = vpop.f32.mrf.mxu0
    %v1423 = vadd.f32 %v1177, %v1422
    %v1424 = vpop.f32.mrf.mxu0
    %v1425 = vadd.f32 %v1181, %v1424
    %1426 = vmatprep.mubr.bf16.mxu0 0
    %1427 = vmatmul.mubr.bf16.gmra.mxu0 %v1153
    %v1428 = vpop.f32.mrf.mxu0
    %v1429 = vadd.f32 %v1177, %v1428
    %v1430 = vpop.f32.mrf.mxu0
    %v1431 = vadd.f32 %v1181, %v1430
    %v1432 = vpop.f32.mrf.mxu0
    %v1433 = vadd.f32 %v1177, %v1432
    %v1434 = vpop.f32.mrf.mxu0
    %v1435 = vadd.f32 %v1181, %v1434
    %1436 = vmatprep.mubr.bf16.mxu0 0
    %1437 = vmatmul.mubr.bf16.gmra.mxu0 %v1154
    %v1438 = vpop.f32.mrf.mxu0
    %v1439 = vadd.f32 %v1177, %v1438
    %v1440 = vpop.f32.mrf.mxu0
    %v1441 = vadd.f32 %v1181, %v1440
    %v1442 = vpop.f32.mrf.mxu0
    %v1443 = vadd.f32 %v1177, %v1442
    %v1444 = vpop.f32.mrf.mxu0
    %v1445 = vadd.f32 %v1181, %v1444
    %1446 = vmatprep.mubr.bf16.mxu0 0
    %1447 = vmatmul.mubr.bf16.gmra.mxu0 %v1155
    %v1448 = vpop.f32.mrf.mxu0
    %v1449 = vadd.f32 %v1177, %v1448
    %v1450 = vpop.f32.mrf.mxu0
    %v1451 = vadd.f32 %v1181, %v1450
    %v1452 = vpop.f32.mrf.mxu0
    %v1453 = vadd.f32 %v1177, %v1452
    %v1454 = vpop.f32.mrf.mxu0
    %v1455 = vadd.f32 %v1181, %v1454
    %1456 = vdwg.mxu0
    %v1457 = vmax.f32 %v1299, 0.0
    %v1458 = vmax.f32 %v1301, 0.0
    %v1459 = vmax.f32 %v1303, 0.0
    %v1460 = vmax.f32 %v1305, 0.0
    %v1461 = vmax.f32 %v1309, 0.0
    %v1462 = vmax.f32 %v1311, 0.0
    %v1463 = vmax.f32 %v1313, 0.0
    %v1464 = vmax.f32 %v1315, 0.0
    %v1465 = vmax.f32 %v1319, 0.0
    %v1466 = vmax.f32 %v1321, 0.0
    %v1467 = vmax.f32 %v1323, 0.0
    %v1468 = vmax.f32 %v1325, 0.0
    %v1469 = vmax.f32 %v1329, 0.0
    %v1470 = vmax.f32 %v1331, 0.0
    %v1471 = vmax.f32 %v1333, 0.0
    %v1472 = vmax.f32 %v1335, 0.0
    %v1473 = vmax.f32 %v1339, 0.0
    %v1474 = vmax.f32 %v1341, 0.0
    %v1475 = vmax.f32 %v1343, 0.0
    %v1476 = vmax.f32 %v1345, 0.0
    %v1477 = vmax.f32 %v1349, 0.0
    %v1478 = vmax.f32 %v1351, 0.0
    %v1479 = vmax.f32 %v1353, 0.0
    %v1480 = vmax.f32 %v1355, 0.0
    %v1481 = vmax.f32 %v1359, 0.0
    %v1482 = vmax.f32 %v1361, 0.0
    %v1483 = vmax.f32 %v1363, 0.0
    %v1484 = vmax.f32 %v1365, 0.0
    %v1485 = vmax.f32 %v1369, 0.0
    %v1486 = vmax.f32 %v1371, 0.0
    %v1487 = vmax.f32 %v1373, 0.0
    %v1488 = vmax.f32 %v1375, 0.0
    %v1489 = vmax.f32 %v1379, 0.0
    %v1490 = vmax.f32 %v1381, 0.0
    %v1491 = vmax.f32 %v1383, 0.0
    %v1492 = vmax.f32 %v1385, 0.0
    %v1493 = vmax.f32 %v1389, 0.0
    %v1494 = vmax.f32 %v1391, 0.0
    %v1495 = vmax.f32 %v1393, 0.0
    %v1496 = vmax.f32 %v1395, 0.0
    %v1497 = vmax.f32 %v1399, 0.0
    %v1498 = vmax.f32 %v1401, 0.0
    %v1499 = vmax.f32 %v1403, 0.0
    %v1500 = vmax.f32 %v1405, 0.0
    %v1501 = vmax.f32 %v1409, 0.0
    %v1502 = vmax.f32 %v1411, 0.0
    %v1503 = vmax.f32 %v1413, 0.0
    %v1504 = vmax.f32 %v1415, 0.0
    %v1505 = vmax.f32 %v1419, 0.0
    %v1506 = vmax.f32 %v1421, 0.0
    %v1507 = vmax.f32 %v1423, 0.0
    %v1508 = vmax.f32 %v1425, 0.0
    %v1509 = vmax.f32 %v1429, 0.0
    %v1510 = vmax.f32 %v1431, 0.0
    %v1511 = vmax.f32 %v1433, 0.0
    %v1512 = vmax.f32 %v1435, 0.0
    %v1513 = vmax.f32 %v1439, 0.0
    %v1514 = vmax.f32 %v1441, 0.0
    %v1515 = vmax.f32 %v1443, 0.0
    %v1516 = vmax.f32 %v1445, 0.0
    %v1517 = vmax.f32 %v1449, 0.0
    %v1518 = vmax.f32 %v1451, 0.0
    %v1519 = vmax.f32 %v1453, 0.0
    %v1520 = vmax.f32 %v1455, 0.0
    %v1521 = vmax.f32 %v1457, %v1459
    %v1522 = vmax.f32 %v1521, %v1461
    %v1523 = vmax.f32 %v1522, %v1463
    %v1524 = vmax.f32 %v1523, %v1465
    %v1525 = vmax.f32 %v1524, %v1467
    %v1526 = vmax.f32 %v1525, %v1469
    %v1527 = vmax.f32 %v1526, %v1471
    %v1528 = vmax.f32 %v1527, %v1473
    %v1529 = vmax.f32 %v1528, %v1475
    %v1530 = vmax.f32 %v1529, %v1477
    %v1531 = vmax.f32 %v1530, %v1479
    %v1532 = vmax.f32 %v1531, %v1481
    %v1533 = vmax.f32 %v1532, %v1483
    %v1534 = vmax.f32 %v1533, %v1485
    %v1535 = vmax.f32 %v1534, %v1487
    %v1536 = vrot.slane %v1535, 4
    %v1537 = vmax.f32 %v1535, %v1536
    %v1538 = vrot.slane %v1537, 2
    %v1539 = vmax.f32 %v1537, %v1538
    %v1540 = vrot.slane %v1539, 1
    %v1541 = vmax.f32 %v1539, %v1540
    %v1542 = vmax.f32 %v1458, %v1460
    %v1543 = vmax.f32 %v1542, %v1462
    %v1544 = vmax.f32 %v1543, %v1464
    %v1545 = vmax.f32 %v1544, %v1466
    %v1546 = vmax.f32 %v1545, %v1468
    %v1547 = vmax.f32 %v1546, %v1470
    %v1548 = vmax.f32 %v1547, %v1472
    %v1549 = vmax.f32 %v1548, %v1474
    %v1550 = vmax.f32 %v1549, %v1476
    %v1551 = vmax.f32 %v1550, %v1478
    %v1552 = vmax.f32 %v1551, %v1480
    %v1553 = vmax.f32 %v1552, %v1482
    %v1554 = vmax.f32 %v1553, %v1484
    %v1555 = vmax.f32 %v1554, %v1486
    %v1556 = vmax.f32 %v1555, %v1488
    %v1557 = vrot.slane %v1556, 4
    %v1558 = vmax.f32 %v1556, %v1557
    %v1559 = vrot.slane %v1558, 2
    %v1560 = vmax.f32 %v1558, %v1559
    %v1561 = vrot.slane %v1560, 1
    %v1562 = vmax.f32 %v1560, %v1561
    %v1563 = vmax.f32 %v1489, %v1491
    %v1564 = vmax.f32 %v1563, %v1493
    %v1565 = vmax.f32 %v1564, %v1495
    %v1566 = vmax.f32 %v1565, %v1497
    %v1567 = vmax.f32 %v1566, %v1499
    %v1568 = vmax.f32 %v1567, %v1501
    %v1569 = vmax.f32 %v1568, %v1503
    %v1570 = vmax.f32 %v1569, %v1505
    %v1571 = vmax.f32 %v1570, %v1507
    %v1572 = vmax.f32 %v1571, %v1509
    %v1573 = vmax.f32 %v1572, %v1511
    %v1574 = vmax.f32 %v1573, %v1513
    %v1575 = vmax.f32 %v1574, %v1515
    %v1576 = vmax.f32 %v1575, %v1517
    %v1577 = vmax.f32 %v1576, %v1519
    %v1578 = vrot.slane %v1577, 4
    %v1579 = vmax.f32 %v1577, %v1578
    %v1580 = vrot.slane %v1579, 2
    %v1581 = vmax.f32 %v1579, %v1580
    %v1582 = vrot.slane %v1581, 1
    %v1583 = vmax.f32 %v1581, %v1582
    %v1584 = vmax.f32 %v1490, %v1492
    %v1585 = vmax.f32 %v1584, %v1494
    %v1586 = vmax.f32 %v1585, %v1496
    %v1587 = vmax.f32 %v1586, %v1498
    %v1588 = vmax.f32 %v1587, %v1500
    %v1589 = vmax.f32 %v1588, %v1502
    %v1590 = vmax.f32 %v1589, %v1504
    %v1591 = vmax.f32 %v1590, %v1506
    %v1592 = vmax.f32 %v1591, %v1508
    %v1593 = vmax.f32 %v1592, %v1510
    %v1594 = vmax.f32 %v1593, %v1512
    %v1595 = vmax.f32 %v1594, %v1514
    %v1596 = vmax.f32 %v1595, %v1516
    %v1597 = vmax.f32 %v1596, %v1518
    %v1598 = vmax.f32 %v1597, %v1520
    %v1599 = vrot.slane %v1598, 4
    %v1600 = vmax.f32 %v1598, %v1599
    %v1601 = vrot.slane %v1600, 2
    %v1602 = vmax.f32 %v1600, %v1601
    %v1603 = vrot.slane %v1602, 1
    %v1604 = vmax.f32 %v1602, %v1603
    %v1605 = vpack.c.bf16 %v1541, %v1541
    %v1606 = vpack.c.bf16 %v1562, %v1562
    %v1607 = vpack.c.bf16 %v1583, %v1583
    %v1608 = vpack.c.bf16 %v1604, %v1604
    %v1609 = vld [vmem:[#allocation7] sm:$0xf]
    %v1610 = vld [vmem:[#allocation7 + $0x4] sm:$0xf]
    %v1611 = vld [vmem:[#allocation7 + $0x8] sm:$0xf]
    %v1612 = vld [vmem:[#allocation7 + $0xc] sm:$0xf]
    %v1613 = vld [vmem:[#allocation7 + $0x10] sm:$0xf]
    %v1614 = vld [vmem:[#allocation7 + $0x14] sm:$0xf]
    %v1615 = vld [vmem:[#allocation7 + $0x18] sm:$0xf]
    %v1616 = vld [vmem:[#allocation7 + $0x1c] sm:$0xf]
    %v1617 = vld [vmem:[#allocation7 + $0x20] sm:$0xf]
    %v1618 = vld [vmem:[#allocation7 + $0x24] sm:$0xf]
    %v1619 = vld [vmem:[#allocation7 + $0x28] sm:$0xf]
    %v1620 = vld [vmem:[#allocation7 + $0x2c] sm:$0xf]
    %v1621 = vld [vmem:[#allocation7 + $0x30] sm:$0xf]
    %v1622 = vld [vmem:[#allocation7 + $0x34] sm:$0xf]
    %v1623 = vld [vmem:[#allocation7 + $0x38] sm:$0xf]
    %v1624 = vld [vmem:[#allocation7 + $0x3c] sm:$0xf]
    %v1625 = vld [vmem:[#allocation7 + $0x40] sm:$0xf]
    %v1626 = vld [vmem:[#allocation7 + $0x44] sm:$0xf]
    %v1627 = vld [vmem:[#allocation7 + $0x48] sm:$0xf]
    %v1628 = vld [vmem:[#allocation7 + $0x4c] sm:$0xf]
    %v1629 = vld [vmem:[#allocation7 + $0x50] sm:$0xf]
    %v1630 = vld [vmem:[#allocation7 + $0x54] sm:$0xf]
    %v1631 = vld [vmem:[#allocation7 + $0x58] sm:$0xf]
    %v1632 = vld [vmem:[#allocation7 + $0x5c] sm:$0xf]
    %v1633 = vld [vmem:[#allocation7 + $0x60] sm:$0xf]
    %v1634 = vld [vmem:[#allocation7 + $0x64] sm:$0xf]
    %v1635 = vld [vmem:[#allocation7 + $0x68] sm:$0xf]
    %v1636 = vld [vmem:[#allocation7 + $0x6c] sm:$0xf]
    %v1637 = vld [vmem:[#allocation7 + $0x70] sm:$0xf]
    %v1638 = vld [vmem:[#allocation7 + $0x74] sm:$0xf]
    %v1639 = vld [vmem:[#allocation7 + $0x78] sm:$0xf]
    %v1640 = vld [vmem:[#allocation7 + $0x7c] sm:$0xf]
    %v1641 = vld [vmem:[%s8] sm:$0x1]
    %v1643 = vlaneseq
    %v1644 = vshrl.u32 %v1643, 7
    %v1645 = vsub.s32 0, %v1644
    %v1646 = vrot.slane %v1641, %v1645
    %v1652 = vunpack.c.l.b16 %v1605
    %v1653 = vunpack.c.l.b16 %v1606
    %v1654 = vunpack.c.l.b16 %v1607
    %v1655 = vunpack.c.l.b16 %v1608
    %vm1656 = vcmask 1041409
    %v1657 = vsel %vm1656, %v1654, %v1652
    %v1658 = vsel %vm1656, %v1655, %v1653
    %v1659 = vpack.c.b16 %v1657, %v1657
    %v1660 = vpack.c.b16 %v1658, %v1658
    %v1695 = vunpack.c.l.b16 %v1609
    %v1696 = vunpack.c.l.b16 %v1610
    %v1697 = vunpack.c.l.b16 %v1611
    %v1698 = vunpack.c.l.b16 %v1612
    %v1699 = vunpack.c.l.b16 %v1613
    %v1700 = vunpack.c.l.b16 %v1614
    %v1701 = vunpack.c.l.b16 %v1615
    %v1702 = vunpack.c.l.b16 %v1616
    %v1703 = vunpack.c.l.b16 %v1617
    %v1704 = vunpack.c.l.b16 %v1618
    %v1705 = vunpack.c.l.b16 %v1619
    %v1706 = vunpack.c.l.b16 %v1620
    %v1707 = vunpack.c.l.b16 %v1621
    %v1708 = vunpack.c.l.b16 %v1622
    %v1709 = vunpack.c.l.b16 %v1623
    %v1710 = vunpack.c.l.b16 %v1624
    %v1711 = vunpack.c.l.b16 %v1625
    %v1712 = vunpack.c.l.b16 %v1626
    %v1713 = vunpack.c.l.b16 %v1627
    %v1714 = vunpack.c.l.b16 %v1628
    %v1715 = vunpack.c.l.b16 %v1629
    %v1716 = vunpack.c.l.b16 %v1630
    %v1717 = vunpack.c.l.b16 %v1631
    %v1718 = vunpack.c.l.b16 %v1632
    %v1719 = vunpack.c.l.b16 %v1633
    %v1720 = vunpack.c.l.b16 %v1634
    %v1721 = vunpack.c.l.b16 %v1635
    %v1722 = vunpack.c.l.b16 %v1636
    %v1723 = vunpack.c.l.b16 %v1637
    %v1724 = vunpack.c.l.b16 %v1638
    %v1725 = vunpack.c.l.b16 %v1639
    %v1726 = vunpack.c.l.b16 %v1640
    %v1727 = vpack.c.b16 %v1696, %v1695
    %v1728 = vpack.c.b16 %v1698, %v1697
    %v1729 = vpack.c.b16 %v1700, %v1699
    %v1730 = vpack.c.b16 %v1702, %v1701
    %v1731 = vpack.c.b16 %v1704, %v1703
    %v1732 = vpack.c.b16 %v1706, %v1705
    %v1733 = vpack.c.b16 %v1708, %v1707
    %v1734 = vpack.c.b16 %v1710, %v1709
    %v1735 = vpack.c.b16 %v1712, %v1711
    %v1736 = vpack.c.b16 %v1714, %v1713
    %v1737 = vpack.c.b16 %v1716, %v1715
    %v1738 = vpack.c.b16 %v1718, %v1717
    %v1739 = vpack.c.b16 %v1720, %v1719
    %v1740 = vpack.c.b16 %v1722, %v1721
    %v1741 = vpack.c.b16 %v1724, %v1723
    %v1742 = vpack.c.b16 %v1726, %v1725
    %1759 = vmatprep.subr.bf16.mxu0 0
    %1760 = vmatpush1.bf16.msra.mxu0 %v1734
    %1761 = vmatprep.subr.bf16.mxu0 0
    %1762 = vmatpush1.bf16.msra.mxu0 %v1733
    %1763 = vmatprep.subr.bf16.mxu0 0
    %1764 = vmatpush1.bf16.msra.mxu0 %v1732
    %1765 = vmatprep.subr.bf16.mxu0 0
    %1766 = vmatpush1.bf16.msra.mxu0 %v1731
    %1767 = vmatprep.subr.bf16.mxu0 0
    %1768 = vmatpush1.bf16.msra.mxu0 %v1730
    %1769 = vmatprep.subr.bf16.mxu0 0
    %1770 = vmatpush1.bf16.msra.mxu0 %v1729
    %1771 = vmatprep.subr.bf16.mxu0 0
    %1772 = vmatpush1.bf16.msra.mxu0 %v1728
    %1773 = vmatprep.subr.bf16.mxu0 0
    %1774 = vmatpush1.bf16.msra.mxu0 %v1727
    %1775 = vmatprep.subr.bf16.mxu0 0
    %1776 = vmatpush2.bf16.msra.mxu0 %v1742
    %1777 = vmatprep.subr.bf16.mxu0 0
    %1778 = vmatpush2.bf16.msra.mxu0 %v1741
    %1779 = vmatprep.subr.bf16.mxu0 0
    %1780 = vmatpush2.bf16.msra.mxu0 %v1740
    %1781 = vmatprep.subr.bf16.mxu0 0
    %1782 = vmatpush2.bf16.msra.mxu0 %v1739
    %1783 = vmatprep.subr.bf16.mxu0 0
    %1784 = vmatpush2.bf16.msra.mxu0 %v1738
    %1785 = vmatprep.subr.bf16.mxu0 0
    %1786 = vmatpush2.bf16.msra.mxu0 %v1737
    %1787 = vmatprep.subr.bf16.mxu0 0
    %1788 = vmatpush2.bf16.msra.mxu0 %v1736
    %1789 = vmatprep.subr.bf16.mxu0 0
    %1790 = vmatpush2.bf16.msra.mxu0 %v1735
    %1791 = vmatprep.mubr.bf16.mxu0 %v1660
    %1792 = vmatmul.mubr.bf16.gmra.mxu0 %v1659
    %v1793 = vpop.f32.mrf.mxu0
    %v1794 = vadd.f32 %v1646, %v1793
    %v1795 = vpop.f32.mrf.mxu0
    %v1796 = vpop.f32.mrf.mxu0
    %v1797 = vpop.f32.mrf.mxu0
    %1798 = vdwg.mxu0
    %v1799 = vmax.f32 %v1794, 0.0
    %v1800 = vpack.c.bf16 %v1799, %v1799
    %v1801 = vld [vmem:[#allocation8] sm:$0xf]
    %v1802 = vld [vmem:[#allocation8 + $0x4] sm:$0xf]
    %v1803 = vld [vmem:[#allocation8 + $0x8] sm:$0xf]
    %v1804 = vld [vmem:[#allocation8 + $0xc] sm:$0xf]
    %v1805 = vld [vmem:[#allocation8 + $0x10] sm:$0xf]
    %v1806 = vld [vmem:[#allocation8 + $0x14] sm:$0xf]
    %v1807 = vld [vmem:[#allocation8 + $0x18] sm:$0xf]
    %v1808 = vld [vmem:[#allocation8 + $0x1c] sm:$0xf]
    %v1809 = vld [vmem:[#allocation8 + $0x20] sm:$0xf]
    %v1810 = vld [vmem:[#allocation8 + $0x24] sm:$0xf]
    %v1811 = vld [vmem:[#allocation8 + $0x28] sm:$0xf]
    %v1812 = vld [vmem:[#allocation8 + $0x2c] sm:$0xf]
    %v1813 = vld [vmem:[#allocation8 + $0x30] sm:$0xf]
    %v1814 = vld [vmem:[#allocation8 + $0x34] sm:$0xf]
    %v1815 = vld [vmem:[#allocation8 + $0x38] sm:$0xf]
    %v1816 = vld [vmem:[#allocation8 + $0x3c] sm:$0xf]
    %v1817 = vld [vmem:[%s10] sm:$0x1]
    %v1819 = vlaneseq
    %v1820 = vshrl.u32 %v1819, 7
    %v1821 = vsub.s32 0, %v1820
    %v1822 = vrot.slane %v1817, %v1821
    %v1840 = vunpack.c.l.b16 %v1801
    %v1841 = vunpack.c.l.b16 %v1802
    %v1842 = vunpack.c.l.b16 %v1803
    %v1843 = vunpack.c.l.b16 %v1804
    %v1844 = vunpack.c.l.b16 %v1805
    %v1845 = vunpack.c.l.b16 %v1806
    %v1846 = vunpack.c.l.b16 %v1807
    %v1847 = vunpack.c.l.b16 %v1808
    %v1848 = vunpack.c.l.b16 %v1809
    %v1849 = vunpack.c.l.b16 %v1810
    %v1850 = vunpack.c.l.b16 %v1811
    %v1851 = vunpack.c.l.b16 %v1812
    %v1852 = vunpack.c.l.b16 %v1813
    %v1853 = vunpack.c.l.b16 %v1814
    %v1854 = vunpack.c.l.b16 %v1815
    %v1855 = vunpack.c.l.b16 %v1816
    %v1856 = vpack.c.b16 %v1841, %v1840
    %v1857 = vpack.c.b16 %v1843, %v1842
    %v1858 = vpack.c.b16 %v1845, %v1844
    %v1859 = vpack.c.b16 %v1847, %v1846
    %v1860 = vpack.c.b16 %v1849, %v1848
    %v1861 = vpack.c.b16 %v1851, %v1850
    %v1862 = vpack.c.b16 %v1853, %v1852
    %v1863 = vpack.c.b16 %v1855, %v1854
    %1872 = vmatprep.subr.bf16.mxu0 0
    %1873 = vmatpush1.bf16.msra.mxu0 %v1863
    %1874 = vmatprep.subr.bf16.mxu0 0
    %1875 = vmatpush1.bf16.msra.mxu0 %v1862
    %1876 = vmatprep.subr.bf16.mxu0 0
    %1877 = vmatpush1.bf16.msra.mxu0 %v1861
    %1878 = vmatprep.subr.bf16.mxu0 0
    %1879 = vmatpush1.bf16.msra.mxu0 %v1860
    %1880 = vmatprep.subr.bf16.mxu0 0
    %1881 = vmatpush1.bf16.msra.mxu0 %v1859
    %1882 = vmatprep.subr.bf16.mxu0 0
    %1883 = vmatpush1.bf16.msra.mxu0 %v1858
    %1884 = vmatprep.subr.bf16.mxu0 0
    %1885 = vmatpush1.bf16.msra.mxu0 %v1857
    %1886 = vmatprep.subr.bf16.mxu0 0
    %1887 = vmatpush1.bf16.msra.mxu0 %v1856
    %1888 = vmatprep.subr.bf16.mxu0 0
    %1889 = vmatpush2.bf16.msra.mxu0 0
    %1890 = vmatprep.subr.bf16.mxu0 0
    %1891 = vmatpush2.bf16.msra.mxu0 0
    %1892 = vmatprep.subr.bf16.mxu0 0
    %1893 = vmatpush2.bf16.msra.mxu0 0
    %1894 = vmatprep.subr.bf16.mxu0 0
    %1895 = vmatpush2.bf16.msra.mxu0 0
    %1896 = vmatprep.subr.bf16.mxu0 0
    %1897 = vmatpush2.bf16.msra.mxu0 0
    %1898 = vmatprep.subr.bf16.mxu0 0
    %1899 = vmatpush2.bf16.msra.mxu0 0
    %1900 = vmatprep.subr.bf16.mxu0 0
    %1901 = vmatpush2.bf16.msra.mxu0 0
    %1902 = vmatprep.subr.bf16.mxu0 0
    %1903 = vmatpush2.bf16.msra.mxu0 0
    %1904 = vmatprep.mubr.bf16.mxu0 0
    %1905 = vmatmul.mubr.bf16.gmra.mxu0 %v1800
    %v1906 = vpop.f32.mrf.mxu0
    %v1907 = vadd.f32 %v1822, %v1906
    %v1908 = vpop.f32.mrf.mxu0
    %v1909 = vpop.f32.mrf.mxu0
    %v1910 = vpop.f32.mrf.mxu0
    %1911 = vdwg.mxu0
    %v1912 = vmax.f32 %v1907, 0.0
    %v1913 = vld [vmem:[#allocation10] sm:$0xff]
    %v1914 = vld [vmem:[#allocation10 + $0x8] sm:$0xff]
    %v1915 = vld [vmem:[#allocation10 + $0x10] sm:$0xff]
    %v1916 = vld [vmem:[#allocation10 + $0x18] sm:$0xff]
    %v1917 = vld [vmem:[#allocation10 + $0x20] sm:$0xff]
    %v1918 = vld [vmem:[#allocation10 + $0x28] sm:$0xff]
    %v1919 = vld [vmem:[#allocation10 + $0x30] sm:$0xff]
    %v1920 = vld [vmem:[#allocation10 + $0x38] sm:$0xff]
    %v1921 = vld [vmem:[%s12] sm:$0x1]
    %v1923 = vlaneseq
    %v1924 = vshrl.u32 %v1923, 7
    %v1925 = vsub.s32 0, %v1924
    %v1926 = vrot.slane %v1921, %v1925
    %v1929 = vsel %vm898, %v1912, 0
    %1931 = vmatprep.subr.mxu0 0.0
    %1932 = vmatpush1.msra.mxu0 0.0
    %1933 = vmatprep.subr.mxu0 0.0
    %1934 = vmatpush1.msra.mxu0 0.0
    %1935 = vmatprep.subr.mxu0 0.0
    %1936 = vmatpush1.msra.mxu0 0.0
    %1937 = vmatprep.subr.mxu0 0.0
    %1938 = vmatpush1.msra.mxu0 0.0
    %1939 = vmatprep.subr.mxu0 0.0
    %1940 = vmatpush1.msra.mxu0 0.0
    %1941 = vmatprep.subr.mxu0 0.0
    %1942 = vmatpush1.msra.mxu0 0.0
    %1943 = vmatprep.subr.mxu0 0.0
    %1944 = vmatpush1.msra.mxu0 0.0
    %1945 = vmatprep.subr.mxu0 0.0
    %1946 = vmatpush1.msra.mxu0 0.0
    %1947 = vmatprep.subr.mxu0 0.0
    %1948 = vmatpush1.msra.mxu0 %v1920
    %1949 = vmatprep.subr.mxu0 0.0
    %1950 = vmatpush1.msra.mxu0 %v1919
    %1951 = vmatprep.subr.mxu0 0.0
    %1952 = vmatpush1.msra.mxu0 %v1918
    %1953 = vmatprep.subr.mxu0 0.0
    %1954 = vmatpush1.msra.mxu0 %v1917
    %1955 = vmatprep.subr.mxu0 0.0
    %1956 = vmatpush1.msra.mxu0 %v1916
    %1957 = vmatprep.subr.mxu0 0.0
    %1958 = vmatpush1.msra.mxu0 %v1915
    %1959 = vmatprep.subr.mxu0 0.0
    %1960 = vmatpush1.msra.mxu0 %v1914
    %1961 = vmatprep.subr.mxu0 0.0
    %1962 = vmatpush1.msra.mxu0 %v1913
    %1963 = vmatprep.subr.mxu0 0.0
    %1964 = vmatpush2.msra.mxu0 0.0
    %1965 = vmatprep.subr.mxu0 0.0
    %1966 = vmatpush2.msra.mxu0 0.0
    %1967 = vmatprep.subr.mxu0 0.0
    %1968 = vmatpush2.msra.mxu0 0.0
    %1969 = vmatprep.subr.mxu0 0.0
    %1970 = vmatpush2.msra.mxu0 0.0
    %1971 = vmatprep.subr.mxu0 0.0
    %1972 = vmatpush2.msra.mxu0 0.0
    %1973 = vmatprep.subr.mxu0 0.0
    %1974 = vmatpush2.msra.mxu0 0.0
    %1975 = vmatprep.subr.mxu0 0.0
    %1976 = vmatpush2.msra.mxu0 0.0
    %1977 = vmatprep.subr.mxu0 0.0
    %1978 = vmatpush2.msra.mxu0 0.0
    %1979 = vmatprep.subr.mxu0 0.0
    %1980 = vmatpush2.msra.mxu0 0.0
    %1981 = vmatprep.subr.mxu0 0.0
    %1982 = vmatpush2.msra.mxu0 0.0
    %1983 = vmatprep.subr.mxu0 0.0
    %1984 = vmatpush2.msra.mxu0 0.0
    %1985 = vmatprep.subr.mxu0 0.0
    %1986 = vmatpush2.msra.mxu0 0.0
    %1987 = vmatprep.subr.mxu0 0.0
    %1988 = vmatpush2.msra.mxu0 0.0
    %1989 = vmatprep.subr.mxu0 0.0
    %1990 = vmatpush2.msra.mxu0 0.0
    %1991 = vmatprep.subr.mxu0 0.0
    %1992 = vmatpush2.msra.mxu0 0.0
    %1993 = vmatprep.subr.mxu0 0.0
    %1994 = vmatpush2.msra.mxu0 0.0
    %1995 = vmatprep.mubr.f32.mxu0 0.0
    %1996 = vmatmul.mubr.f32.gmra.mxu0 %v1929
    %v1997 = vpop.f32.mrf.mxu0
    %v1998 = vadd.f32 %v1926, %v1997
    %v1999 = vpop.f32.mrf.mxu0
    %2000 = vdwg.mxu0
    %2001 = vst [vmem:[%s20] sm:$0x3] %v1998
    %v2002 = vld [vmem:[#allocation11] sm:$0xff]
    %v2003 = vld [vmem:[#allocation11 + $0x8] sm:$0xff]
    %v2004 = vld [vmem:[#allocation11 + $0x10] sm:$0xff]
    %v2005 = vld [vmem:[#allocation11 + $0x18] sm:$0xff]
    %v2006 = vld [vmem:[#allocation11 + $0x20] sm:$0xff]
    %v2007 = vld [vmem:[#allocation11 + $0x28] sm:$0xff]
    %v2008 = vld [vmem:[#allocation11 + $0x30] sm:$0xff]
    %v2009 = vld [vmem:[#allocation11 + $0x38] sm:$0xff]
    %v2010 = vld [vmem:[#allocation11 + $0x40] sm:$0xff]
    %v2011 = vld [vmem:[#allocation11 + $0x48] sm:$0xff]
    %v2012 = vld [vmem:[#allocation11 + $0x50] sm:$0xff]
    %v2013 = vld [vmem:[#allocation11 + $0x58] sm:$0xff]
    %v2014 = vld [vmem:[#allocation11 + $0x60] sm:$0xff]
    %v2015 = vld [vmem:[#allocation11 + $0x68] sm:$0xff]
    %v2016 = vld [vmem:[#allocation11 + $0x70] sm:$0xff]
    %v2017 = vld [vmem:[#allocation11 + $0x78] sm:$0xff]
    %v2018 = vld [vmem:[%s14] sm:$0x3]
    %v2020 = vlaneseq
    %v2021 = vshrl.u32 %v2020, 7
    %v2022 = vsub.s32 0, %v2021
    %v2023 = vrot.slane %v2018, %v2022
    %v2024 = vlaneseq
    %v2025 = vshrl.u32 %v2024, 7
    %v2026 = vsub.s32 1, %v2025
    %v2027 = vrot.slane %v2018, %v2026
    %2030 = vmatprep.subr.mxu0 0.0
    %2031 = vmatpush1.msra.mxu0 0.0
    %2032 = vmatprep.subr.mxu0 0.0
    %2033 = vmatpush1.msra.mxu0 0.0
    %2034 = vmatprep.subr.mxu0 0.0
    %2035 = vmatpush1.msra.mxu0 0.0
    %2036 = vmatprep.subr.mxu0 0.0
    %2037 = vmatpush1.msra.mxu0 0.0
    %2038 = vmatprep.subr.mxu0 0.0
    %2039 = vmatpush1.msra.mxu0 0.0
    %2040 = vmatprep.subr.mxu0 0.0
    %2041 = vmatpush1.msra.mxu0 0.0
    %2042 = vmatprep.subr.mxu0 0.0
    %2043 = vmatpush1.msra.mxu0 0.0
    %2044 = vmatprep.subr.mxu0 0.0
    %2045 = vmatpush1.msra.mxu0 0.0
    %2046 = vmatprep.subr.mxu0 %v2017
    %2047 = vmatpush1.msra.mxu0 %v2016
    %2048 = vmatprep.subr.mxu0 %v2015
    %2049 = vmatpush1.msra.mxu0 %v2014
    %2050 = vmatprep.subr.mxu0 %v2013
    %2051 = vmatpush1.msra.mxu0 %v2012
    %2052 = vmatprep.subr.mxu0 %v2011
    %2053 = vmatpush1.msra.mxu0 %v2010
    %2054 = vmatprep.subr.mxu0 %v2009
    %2055 = vmatpush1.msra.mxu0 %v2008
    %2056 = vmatprep.subr.mxu0 %v2007
    %2057 = vmatpush1.msra.mxu0 %v2006
    %2058 = vmatprep.subr.mxu0 %v2005
    %2059 = vmatpush1.msra.mxu0 %v2004
    %2060 = vmatprep.subr.mxu0 %v2003
    %2061 = vmatpush1.msra.mxu0 %v2002
    %2062 = vmatprep.subr.mxu0 0.0
    %2063 = vmatpush2.msra.mxu0 0.0
    %2064 = vmatprep.subr.mxu0 0.0
    %2065 = vmatpush2.msra.mxu0 0.0
    %2066 = vmatprep.subr.mxu0 0.0
    %2067 = vmatpush2.msra.mxu0 0.0
    %2068 = vmatprep.subr.mxu0 0.0
    %2069 = vmatpush2.msra.mxu0 0.0
    %2070 = vmatprep.subr.mxu0 0.0
    %2071 = vmatpush2.msra.mxu0 0.0
    %2072 = vmatprep.subr.mxu0 0.0
    %2073 = vmatpush2.msra.mxu0 0.0
    %2074 = vmatprep.subr.mxu0 0.0
    %2075 = vmatpush2.msra.mxu0 0.0
    %2076 = vmatprep.subr.mxu0 0.0
    %2077 = vmatpush2.msra.mxu0 0.0
    %2078 = vmatprep.subr.mxu0 0.0
    %2079 = vmatpush2.msra.mxu0 0.0
    %2080 = vmatprep.subr.mxu0 0.0
    %2081 = vmatpush2.msra.mxu0 0.0
    %2082 = vmatprep.subr.mxu0 0.0
    %2083 = vmatpush2.msra.mxu0 0.0
    %2084 = vmatprep.subr.mxu0 0.0
    %2085 = vmatpush2.msra.mxu0 0.0
    %2086 = vmatprep.subr.mxu0 0.0
    %2087 = vmatpush2.msra.mxu0 0.0
    %2088 = vmatprep.subr.mxu0 0.0
    %2089 = vmatpush2.msra.mxu0 0.0
    %2090 = vmatprep.subr.mxu0 0.0
    %2091 = vmatpush2.msra.mxu0 0.0
    %2092 = vmatprep.subr.mxu0 0.0
    %2093 = vmatpush2.msra.mxu0 0.0
    %2094 = vmatprep.mubr.f32.mxu0 0.0
    %2095 = vmatmul.mubr.f32.gmra.mxu0 %v1929
    %v2096 = vpop.f32.mrf.mxu0
    %v2097 = vadd.f32 %v2023, %v2096
    %v2098 = vpop.f32.mrf.mxu0
    %v2099 = vadd.f32 %v2027, %v2098
    %2100 = vdwg.mxu0
    %v2101 = vlaneseq
    %v2102 = vshrl.u32 %v2101, 7
    %v2103 = vsub.s32 0, %v2102
    %v2104 = vrot.slane %v2097, %v2103
    %v2105 = vmul.f32 %v203, %v2104
    %v2106 = vmul.f32 %v208, %v2104
    %v2107 = vmul.f32 %v213, %v2104
    %v2108 = vmul.f32 %v218, %v2104
    %v2109 = vmul.f32 %v223, %v2104
    %v2110 = vmul.f32 %v228, %v2104
    %v2111 = vmul.f32 %v233, %v2104
    %v2112 = vmul.f32 %v238, %v2104
    %v2113 = vmul.f32 %v243, %v2104
    %v2114 = vmul.f32 %v248, %v2104
    %v2115 = vmul.f32 %v253, %v2104
    %v2116 = vmul.f32 %v258, %v2104
    %v2117 = vmul.f32 %v263, %v2104
    %v2118 = vmul.f32 %v268, %v2104
    %v2119 = vmul.f32 %v273, %v2104
    %v2120 = vmul.f32 %v278, %v2104
    %v2121 = vmul.f32 %v302, %v2104
    %v2122 = vmul.f32 %v306, %v2104
    %v2123 = vmul.f32 %v310, %v2104
    %v2124 = vmul.f32 %v314, %v2104
    %v2125 = vmul.f32 %v318, %v2104
    %v2126 = vmul.f32 %v322, %v2104
    %v2127 = vmul.f32 %v326, %v2104
    %v2128 = vmul.f32 %v330, %v2104
    %v2129 = vmul.f32 %v334, %v2104
    %v2130 = vmul.f32 %v338, %v2104
    %v2131 = vmul.f32 %v342, %v2104
    %v2132 = vmul.f32 %v346, %v2104
    %v2133 = vmul.f32 %v350, %v2104
    %v2134 = vmul.f32 %v354, %v2104
    %v2135 = vmul.f32 %v358, %v2104
    %v2136 = vmul.f32 %v362, %v2104
    %2153 = vrot.lane.b32.xlu0 %v2121, 64
    %v2154 = vpop.permute.xlu0 %2153
    %2155 = vrot.lane.b32.xlu0 %v2122, 64
    %v2156 = vpop.permute.xlu0 %2155
    %2157 = vrot.lane.b32.xlu0 %v2123, 64
    %v2158 = vpop.permute.xlu0 %2157
    %2159 = vrot.lane.b32.xlu0 %v2124, 64
    %v2160 = vpop.permute.xlu0 %2159
    %2161 = vrot.lane.b32.xlu0 %v2125, 64
    %v2162 = vpop.permute.xlu0 %2161
    %2163 = vrot.lane.b32.xlu0 %v2126, 64
    %v2164 = vpop.permute.xlu0 %2163
    %2165 = vrot.lane.b32.xlu0 %v2127, 64
    %v2166 = vpop.permute.xlu0 %2165
    %2167 = vrot.lane.b32.xlu0 %v2128, 64
    %v2168 = vpop.permute.xlu0 %2167
    %2169 = vrot.lane.b32.xlu0 %v2129, 64
    %v2170 = vpop.permute.xlu0 %2169
    %2171 = vrot.lane.b32.xlu0 %v2130, 64
    %v2172 = vpop.permute.xlu0 %2171
    %2173 = vrot.lane.b32.xlu0 %v2131, 64
    %v2174 = vpop.permute.xlu0 %2173
    %2175 = vrot.lane.b32.xlu0 %v2132, 64
    %v2176 = vpop.permute.xlu0 %2175
    %2177 = vrot.lane.b32.xlu0 %v2133, 64
    %v2178 = vpop.permute.xlu0 %2177
    %2179 = vrot.lane.b32.xlu0 %v2134, 64
    %v2180 = vpop.permute.xlu0 %2179
    %2181 = vrot.lane.b32.xlu0 %v2135, 64
    %v2182 = vpop.permute.xlu0 %2181
    %2183 = vrot.lane.b32.xlu0 %v2136, 64
    %v2184 = vpop.permute.xlu0 %2183
    %v2201 = vadd.f32 %v2105, %v2154
    %v2202 = vadd.f32 %v2106, %v2156
    %v2203 = vadd.f32 %v2107, %v2158
    %v2204 = vadd.f32 %v2108, %v2160
    %v2205 = vadd.f32 %v2109, %v2162
    %v2206 = vadd.f32 %v2110, %v2164
    %v2207 = vadd.f32 %v2111, %v2166
    %v2208 = vadd.f32 %v2112, %v2168
    %v2209 = vadd.f32 %v2113, %v2170
    %v2210 = vadd.f32 %v2114, %v2172
    %v2211 = vadd.f32 %v2115, %v2174
    %v2212 = vadd.f32 %v2116, %v2176
    %v2213 = vadd.f32 %v2117, %v2178
    %v2214 = vadd.f32 %v2118, %v2180
    %v2215 = vadd.f32 %v2119, %v2182
    %v2216 = vadd.f32 %v2120, %v2184
    %v2217 = vlaneseq
    %v2218 = vshrl.u32 %v2217, 7
    %v2219 = vsub.s32 0, %v2218
    %v2220 = vrot.slane %v2099, %v2219
    %v2221 = vmul.f32 %v402, %v2220
    %v2222 = vmul.f32 %v406, %v2220
    %v2223 = vmul.f32 %v410, %v2220
    %v2224 = vmul.f32 %v414, %v2220
    %v2225 = vmul.f32 %v418, %v2220
    %v2226 = vmul.f32 %v422, %v2220
    %v2227 = vmul.f32 %v426, %v2220
    %v2228 = vmul.f32 %v430, %v2220
    %v2229 = vmul.f32 %v434, %v2220
    %v2230 = vmul.f32 %v438, %v2220
    %v2231 = vmul.f32 %v442, %v2220
    %v2232 = vmul.f32 %v446, %v2220
    %v2233 = vmul.f32 %v450, %v2220
    %v2234 = vmul.f32 %v454, %v2220
    %v2235 = vmul.f32 %v458, %v2220
    %v2236 = vmul.f32 %v462, %v2220
    %v2237 = vadd.f32 %v2201, %v2221
    %v2238 = vadd.f32 %v2202, %v2222
    %v2239 = vadd.f32 %v2203, %v2223
    %v2240 = vadd.f32 %v2204, %v2224
    %v2241 = vadd.f32 %v2205, %v2225
    %v2242 = vadd.f32 %v2206, %v2226
    %v2243 = vadd.f32 %v2207, %v2227
    %v2244 = vadd.f32 %v2208, %v2228
    %v2245 = vadd.f32 %v2209, %v2229
    %v2246 = vadd.f32 %v2210, %v2230
    %v2247 = vadd.f32 %v2211, %v2231
    %v2248 = vadd.f32 %v2212, %v2232
    %v2249 = vadd.f32 %v2213, %v2233
    %v2250 = vadd.f32 %v2214, %v2234
    %v2251 = vadd.f32 %v2215, %v2235
    %v2252 = vadd.f32 %v2216, %v2236
    %v2253 = vlaneseq
    %v2254 = vshrl.u32 %v2253, 7
    %v2255 = vsub.s32 1, %v2254
    %v2256 = vrot.slane %v2097, %v2255
    %v2257 = vmul.f32 %v502, %v2256
    %v2258 = vmul.f32 %v506, %v2256
    %v2259 = vmul.f32 %v510, %v2256
    %v2260 = vmul.f32 %v514, %v2256
    %v2261 = vmul.f32 %v518, %v2256
    %v2262 = vmul.f32 %v522, %v2256
    %v2263 = vmul.f32 %v526, %v2256
    %v2264 = vmul.f32 %v530, %v2256
    %v2265 = vmul.f32 %v534, %v2256
    %v2266 = vmul.f32 %v538, %v2256
    %v2267 = vmul.f32 %v542, %v2256
    %v2268 = vmul.f32 %v546, %v2256
    %v2269 = vmul.f32 %v550, %v2256
    %v2270 = vmul.f32 %v554, %v2256
    %v2271 = vmul.f32 %v558, %v2256
    %v2272 = vmul.f32 %v562, %v2256
    %v2273 = vmul.f32 %v582, %v2256
    %v2274 = vmul.f32 %v586, %v2256
    %v2275 = vmul.f32 %v590, %v2256
    %v2276 = vmul.f32 %v594, %v2256
    %v2277 = vmul.f32 %v598, %v2256
    %v2278 = vmul.f32 %v602, %v2256
    %v2279 = vmul.f32 %v606, %v2256
    %v2280 = vmul.f32 %v610, %v2256
    %v2281 = vmul.f32 %v614, %v2256
    %v2282 = vmul.f32 %v618, %v2256
    %v2283 = vmul.f32 %v622, %v2256
    %v2284 = vmul.f32 %v626, %v2256
    %v2285 = vmul.f32 %v630, %v2256
    %v2286 = vmul.f32 %v634, %v2256
    %v2287 = vmul.f32 %v638, %v2256
    %v2288 = vmul.f32 %v642, %v2256
    %2305 = vrot.lane.b32.xlu0 %v2273, 64
    %v2306 = vpop.permute.xlu0 %2305
    %2307 = vrot.lane.b32.xlu0 %v2274, 64
    %v2308 = vpop.permute.xlu0 %2307
    %2309 = vrot.lane.b32.xlu0 %v2275, 64
    %v2310 = vpop.permute.xlu0 %2309
    %2311 = vrot.lane.b32.xlu0 %v2276, 64
    %v2312 = vpop.permute.xlu0 %2311
    %2313 = vrot.lane.b32.xlu0 %v2277, 64
    %v2314 = vpop.permute.xlu0 %2313
    %2315 = vrot.lane.b32.xlu0 %v2278, 64
    %v2316 = vpop.permute.xlu0 %2315
    %2317 = vrot.lane.b32.xlu0 %v2279, 64
    %v2318 = vpop.permute.xlu0 %2317
    %2319 = vrot.lane.b32.xlu0 %v2280, 64
    %v2320 = vpop.permute.xlu0 %2319
    %2321 = vrot.lane.b32.xlu0 %v2281, 64
    %v2322 = vpop.permute.xlu0 %2321
    %2323 = vrot.lane.b32.xlu0 %v2282, 64
    %v2324 = vpop.permute.xlu0 %2323
    %2325 = vrot.lane.b32.xlu0 %v2283, 64
    %v2326 = vpop.permute.xlu0 %2325
    %2327 = vrot.lane.b32.xlu0 %v2284, 64
    %v2328 = vpop.permute.xlu0 %2327
    %2329 = vrot.lane.b32.xlu0 %v2285, 64
    %v2330 = vpop.permute.xlu0 %2329
    %2331 = vrot.lane.b32.xlu0 %v2286, 64
    %v2332 = vpop.permute.xlu0 %2331
    %2333 = vrot.lane.b32.xlu0 %v2287, 64
    %v2334 = vpop.permute.xlu0 %2333
    %2335 = vrot.lane.b32.xlu0 %v2288, 64
    %v2336 = vpop.permute.xlu0 %2335
    %v2353 = vadd.f32 %v2257, %v2306
    %v2354 = vadd.f32 %v2258, %v2308
    %v2355 = vadd.f32 %v2259, %v2310
    %v2356 = vadd.f32 %v2260, %v2312
    %v2357 = vadd.f32 %v2261, %v2314
    %v2358 = vadd.f32 %v2262, %v2316
    %v2359 = vadd.f32 %v2263, %v2318
    %v2360 = vadd.f32 %v2264, %v2320
    %v2361 = vadd.f32 %v2265, %v2322
    %v2362 = vadd.f32 %v2266, %v2324
    %v2363 = vadd.f32 %v2267, %v2326
    %v2364 = vadd.f32 %v2268, %v2328
    %v2365 = vadd.f32 %v2269, %v2330
    %v2366 = vadd.f32 %v2270, %v2332
    %v2367 = vadd.f32 %v2271, %v2334
    %v2368 = vadd.f32 %v2272, %v2336
    %v2369 = vlaneseq
    %v2370 = vshrl.u32 %v2369, 7
    %v2371 = vsub.s32 1, %v2370
    %v2372 = vrot.slane %v2099, %v2371
    %v2373 = vmul.f32 %v678, %v2372
    %v2374 = vmul.f32 %v682, %v2372
    %v2375 = vmul.f32 %v686, %v2372
    %v2376 = vmul.f32 %v690, %v2372
    %v2377 = vmul.f32 %v694, %v2372
    %v2378 = vmul.f32 %v698, %v2372
    %v2379 = vmul.f32 %v702, %v2372
    %v2380 = vmul.f32 %v706, %v2372
    %v2381 = vmul.f32 %v710, %v2372
    %v2382 = vmul.f32 %v714, %v2372
    %v2383 = vmul.f32 %v718, %v2372
    %v2384 = vmul.f32 %v722, %v2372
    %v2385 = vmul.f32 %v726, %v2372
    %v2386 = vmul.f32 %v730, %v2372
    %v2387 = vmul.f32 %v734, %v2372
    %v2388 = vmul.f32 %v738, %v2372
    %v2389 = vadd.f32 %v2353, %v2373
    %v2390 = vadd.f32 %v2354, %v2374
    %v2391 = vadd.f32 %v2355, %v2375
    %v2392 = vadd.f32 %v2356, %v2376
    %v2393 = vadd.f32 %v2357, %v2377
    %v2394 = vadd.f32 %v2358, %v2378
    %v2395 = vadd.f32 %v2359, %v2379
    %v2396 = vadd.f32 %v2360, %v2380
    %v2397 = vadd.f32 %v2361, %v2381
    %v2398 = vadd.f32 %v2362, %v2382
    %v2399 = vadd.f32 %v2363, %v2383
    %v2400 = vadd.f32 %v2364, %v2384
    %v2401 = vadd.f32 %v2365, %v2385
    %v2402 = vadd.f32 %v2366, %v2386
    %v2403 = vadd.f32 %v2367, %v2387
    %v2404 = vadd.f32 %v2368, %v2388
    %v2405 = vld [vmem:[%s15] sm:$0x1]
    %v2407 = vlaneseq
    %v2408 = vshrl.u32 %v2407, 7
    %v2409 = vsub.s32 0, %v2408
    %v2410 = vrot.slane %v2405, %v2409
    %v2412 = vadd.f32 %v2237, %v2410
    %v2413 = vadd.f32 %v2238, %v2410
    %v2414 = vadd.f32 %v2239, %v2410
    %v2415 = vadd.f32 %v2240, %v2410
    %v2416 = vadd.f32 %v2241, %v2410
    %v2417 = vadd.f32 %v2242, %v2410
    %v2418 = vadd.f32 %v2243, %v2410
    %v2419 = vadd.f32 %v2244, %v2410
    %v2420 = vadd.f32 %v2245, %v2410
    %v2421 = vadd.f32 %v2246, %v2410
    %v2422 = vadd.f32 %v2247, %v2410
    %v2423 = vadd.f32 %v2248, %v2410
    %v2424 = vadd.f32 %v2249, %v2410
    %v2425 = vadd.f32 %v2250, %v2410
    %v2426 = vadd.f32 %v2251, %v2410
    %v2427 = vadd.f32 %v2252, %v2410
    %v2428 = vadd.f32 %v2389, %v2410
    %v2429 = vadd.f32 %v2390, %v2410
    %v2430 = vadd.f32 %v2391, %v2410
    %v2431 = vadd.f32 %v2392, %v2410
    %v2432 = vadd.f32 %v2393, %v2410
    %v2433 = vadd.f32 %v2394, %v2410
    %v2434 = vadd.f32 %v2395, %v2410
    %v2435 = vadd.f32 %v2396, %v2410
    %v2436 = vadd.f32 %v2397, %v2410
    %v2437 = vadd.f32 %v2398, %v2410
    %v2438 = vadd.f32 %v2399, %v2410
    %v2439 = vadd.f32 %v2400, %v2410
    %v2440 = vadd.f32 %v2401, %v2410
    %v2441 = vadd.f32 %v2402, %v2410
    %v2442 = vadd.f32 %v2403, %v2410
    %v2443 = vadd.f32 %v2404, %v2410
    %v2444 = vmax.f32 %v2412, 0.0
    %v2445 = vmax.f32 %v2413, 0.0
    %v2446 = vmax.f32 %v2414, 0.0
    %v2447 = vmax.f32 %v2415, 0.0
    %v2448 = vmax.f32 %v2416, 0.0
    %v2449 = vmax.f32 %v2417, 0.0
    %v2450 = vmax.f32 %v2418, 0.0
    %v2451 = vmax.f32 %v2419, 0.0
    %v2452 = vmax.f32 %v2420, 0.0
    %v2453 = vmax.f32 %v2421, 0.0
    %v2454 = vmax.f32 %v2422, 0.0
    %v2455 = vmax.f32 %v2423, 0.0
    %v2456 = vmax.f32 %v2424, 0.0
    %v2457 = vmax.f32 %v2425, 0.0
    %v2458 = vmax.f32 %v2426, 0.0
    %v2459 = vmax.f32 %v2427, 0.0
    %v2460 = vmax.f32 %v2428, 0.0
    %v2461 = vmax.f32 %v2429, 0.0
    %v2462 = vmax.f32 %v2430, 0.0
    %v2463 = vmax.f32 %v2431, 0.0
    %v2464 = vmax.f32 %v2432, 0.0
    %v2465 = vmax.f32 %v2433, 0.0
    %v2466 = vmax.f32 %v2434, 0.0
    %v2467 = vmax.f32 %v2435, 0.0
    %v2468 = vmax.f32 %v2436, 0.0
    %v2469 = vmax.f32 %v2437, 0.0
    %v2470 = vmax.f32 %v2438, 0.0
    %v2471 = vmax.f32 %v2439, 0.0
    %v2472 = vmax.f32 %v2440, 0.0
    %v2473 = vmax.f32 %v2441, 0.0
    %v2474 = vmax.f32 %v2442, 0.0
    %v2475 = vmax.f32 %v2443, 0.0
    %v2476 = vpack.c.bf16 %v2445, %v2444
    %v2477 = vpack.c.bf16 %v2447, %v2446
    %v2478 = vpack.c.bf16 %v2449, %v2448
    %v2479 = vpack.c.bf16 %v2451, %v2450
    %v2480 = vpack.c.bf16 %v2453, %v2452
    %v2481 = vpack.c.bf16 %v2455, %v2454
    %v2482 = vpack.c.bf16 %v2457, %v2456
    %v2483 = vpack.c.bf16 %v2459, %v2458
    %v2484 = vpack.c.bf16 %v2461, %v2460
    %v2485 = vpack.c.bf16 %v2463, %v2462
    %v2486 = vpack.c.bf16 %v2465, %v2464
    %v2487 = vpack.c.bf16 %v2467, %v2466
    %v2488 = vpack.c.bf16 %v2469, %v2468
    %v2489 = vpack.c.bf16 %v2471, %v2470
    %v2490 = vpack.c.bf16 %v2473, %v2472
    %v2491 = vpack.c.bf16 %v2475, %v2474
    %v2492 = vld [vmem:[%s16] sm:$0xf]
    %v2493 = vld [vmem:[%s16 + $0x4] sm:$0xf]
    %v2494 = vld [vmem:[%s16 + $0x8] sm:$0xf]
    %v2495 = vld [vmem:[%s16 + $0xc] sm:$0xf]
    %v2496 = vld [vmem:[%s16 + $0x10] sm:$0xf]
    %v2497 = vld [vmem:[%s16 + $0x14] sm:$0xf]
    %v2498 = vld [vmem:[%s16 + $0x18] sm:$0xf]
    %v2499 = vld [vmem:[%s16 + $0x1c] sm:$0xf]
    %v2500 = vld [vmem:[%s17] sm:$0x1]
    %v2502 = vlaneseq
    %v2503 = vshrl.u32 %v2502, 7
    %v2504 = vsub.s32 0, %v2503
    %v2505 = vrot.slane %v2500, %v2504
    %v2515 = vunpack.c.l.b16 %v2492
    %v2516 = vunpack.c.l.b16 %v2493
    %v2517 = vunpack.c.l.b16 %v2494
    %v2518 = vunpack.c.l.b16 %v2495
    %v2519 = vunpack.c.l.b16 %v2496
    %v2520 = vunpack.c.l.b16 %v2497
    %v2521 = vunpack.c.l.b16 %v2498
    %v2522 = vunpack.c.l.b16 %v2499
    %v2523 = vpack.c.b16 %v2516, %v2515
    %v2524 = vpack.c.b16 %v2518, %v2517
    %v2525 = vpack.c.b16 %v2520, %v2519
    %v2526 = vpack.c.b16 %v2522, %v2521
    %v2532 = vsel %vm898, %v2476, 0
    %v2535 = vsel %vm898, %v2477, 0
    %v2538 = vsel %vm898, %v2478, 0
    %v2541 = vsel %vm898, %v2479, 0
    %v2544 = vsel %vm898, %v2480, 0
    %v2547 = vsel %vm898, %v2481, 0
    %v2550 = vsel %vm898, %v2482, 0
    %v2553 = vsel %vm898, %v2483, 0
    %v2556 = vsel %vm898, %v2484, 0
    %v2559 = vsel %vm898, %v2485, 0
    %v2562 = vsel %vm898, %v2486, 0
    %v2565 = vsel %vm898, %v2487, 0
    %v2568 = vsel %vm898, %v2488, 0
    %v2571 = vsel %vm898, %v2489, 0
    %v2574 = vsel %vm898, %v2490, 0
    %v2577 = vsel %vm898, %v2491, 0
    %2579 = vmatprep.subr.bf16.mxu0 0
    %2580 = vmatpush1.bf16.msra.mxu0 0
    %2581 = vmatprep.subr.bf16.mxu0 0
    %2582 = vmatpush1.bf16.msra.mxu0 0
    %2583 = vmatprep.subr.bf16.mxu0 0
    %2584 = vmatpush1.bf16.msra.mxu0 0
    %2585 = vmatprep.subr.bf16.mxu0 0
    %2586 = vmatpush1.bf16.msra.mxu0 0
    %2587 = vmatprep.subr.bf16.mxu0 0
    %2588 = vmatpush1.bf16.msra.mxu0 %v2526
    %2589 = vmatprep.subr.bf16.mxu0 0
    %2590 = vmatpush1.bf16.msra.mxu0 %v2525
    %2591 = vmatprep.subr.bf16.mxu0 0
    %2592 = vmatpush1.bf16.msra.mxu0 %v2524
    %2593 = vmatprep.subr.bf16.mxu0 0
    %2594 = vmatpush1.bf16.msra.mxu0 %v2523
    %2595 = vmatprep.subr.bf16.mxu0 0
    %2596 = vmatpush2.bf16.msra.mxu0 0
    %2597 = vmatprep.subr.bf16.mxu0 0
    %2598 = vmatpush2.bf16.msra.mxu0 0
    %2599 = vmatprep.subr.bf16.mxu0 0
    %2600 = vmatpush2.bf16.msra.mxu0 0
    %2601 = vmatprep.subr.bf16.mxu0 0
    %2602 = vmatpush2.bf16.msra.mxu0 0
    %2603 = vmatprep.subr.bf16.mxu0 0
    %2604 = vmatpush2.bf16.msra.mxu0 0
    %2605 = vmatprep.subr.bf16.mxu0 0
    %2606 = vmatpush2.bf16.msra.mxu0 0
    %2607 = vmatprep.subr.bf16.mxu0 0
    %2608 = vmatpush2.bf16.msra.mxu0 0
    %2609 = vmatprep.subr.bf16.mxu0 0
    %2610 = vmatpush2.bf16.msra.mxu0 0
    %2611 = vmatprep.mubr.bf16.mxu0 0
    %2612 = vmatmul.mubr.bf16.gmra.mxu0 %v2532
    %v2613 = vpop.f32.mrf.mxu0
    %v2614 = vadd.f32 %v2505, %v2613
    %v2615 = vpop.f32.mrf.mxu0
    %v2616 = vpop.f32.mrf.mxu0
    %v2617 = vadd.f32 %v2505, %v2616
    %v2618 = vpop.f32.mrf.mxu0
    %2619 = vmatprep.mubr.bf16.mxu0 0
    %2620 = vmatmul.mubr.bf16.gmra.mxu0 %v2535
    %v2621 = vpop.f32.mrf.mxu0
    %v2622 = vadd.f32 %v2505, %v2621
    %v2623 = vpop.f32.mrf.mxu0
    %v2624 = vpop.f32.mrf.mxu0
    %v2625 = vadd.f32 %v2505, %v2624
    %v2626 = vpop.f32.mrf.mxu0
    %2627 = vmatprep.mubr.bf16.mxu0 0
    %2628 = vmatmul.mubr.bf16.gmra.mxu0 %v2538
    %v2629 = vpop.f32.mrf.mxu0
    %v2630 = vadd.f32 %v2505, %v2629
    %v2631 = vpop.f32.mrf.mxu0
    %v2632 = vpop.f32.mrf.mxu0
    %v2633 = vadd.f32 %v2505, %v2632
    %v2634 = vpop.f32.mrf.mxu0
    %2635 = vmatprep.mubr.bf16.mxu0 0
    %2636 = vmatmul.mubr.bf16.gmra.mxu0 %v2541
    %v2637 = vpop.f32.mrf.mxu0
    %v2638 = vadd.f32 %v2505, %v2637
    %v2639 = vpop.f32.mrf.mxu0
    %v2640 = vpop.f32.mrf.mxu0
    %v2641 = vadd.f32 %v2505, %v2640
    %v2642 = vpop.f32.mrf.mxu0
    %2643 = vmatprep.mubr.bf16.mxu0 0
    %2644 = vmatmul.mubr.bf16.gmra.mxu0 %v2544
    %v2645 = vpop.f32.mrf.mxu0
    %v2646 = vadd.f32 %v2505, %v2645
    %v2647 = vpop.f32.mrf.mxu0
    %v2648 = vpop.f32.mrf.mxu0
    %v2649 = vadd.f32 %v2505, %v2648
    %v2650 = vpop.f32.mrf.mxu0
    %2651 = vmatprep.mubr.bf16.mxu0 0
    %2652 = vmatmul.mubr.bf16.gmra.mxu0 %v2547
    %v2653 = vpop.f32.mrf.mxu0
    %v2654 = vadd.f32 %v2505, %v2653
    %v2655 = vpop.f32.mrf.mxu0
    %v2656 = vpop.f32.mrf.mxu0
    %v2657 = vadd.f32 %v2505, %v2656
    %v2658 = vpop.f32.mrf.mxu0
    %2659 = vmatprep.mubr.bf16.mxu0 0
    %2660 = vmatmul.mubr.bf16.gmra.mxu0 %v2550
    %v2661 = vpop.f32.mrf.mxu0
    %v2662 = vadd.f32 %v2505, %v2661
    %v2663 = vpop.f32.mrf.mxu0
    %v2664 = vpop.f32.mrf.mxu0
    %v2665 = vadd.f32 %v2505, %v2664
    %v2666 = vpop.f32.mrf.mxu0
    %2667 = vmatprep.mubr.bf16.mxu0 0
    %2668 = vmatmul.mubr.bf16.gmra.mxu0 %v2553
    %v2669 = vpop.f32.mrf.mxu0
    %v2670 = vadd.f32 %v2505, %v2669
    %v2671 = vpop.f32.mrf.mxu0
    %v2672 = vpop.f32.mrf.mxu0
    %v2673 = vadd.f32 %v2505, %v2672
    %v2674 = vpop.f32.mrf.mxu0
    %2675 = vmatprep.mubr.bf16.mxu0 0
    %2676 = vmatmul.mubr.bf16.gmra.mxu0 %v2556
    %v2677 = vpop.f32.mrf.mxu0
    %v2678 = vadd.f32 %v2505, %v2677
    %v2679 = vpop.f32.mrf.mxu0
    %v2680 = vpop.f32.mrf.mxu0
    %v2681 = vadd.f32 %v2505, %v2680
    %v2682 = vpop.f32.mrf.mxu0
    %2683 = vmatprep.mubr.bf16.mxu0 0
    %2684 = vmatmul.mubr.bf16.gmra.mxu0 %v2559
    %v2685 = vpop.f32.mrf.mxu0
    %v2686 = vadd.f32 %v2505, %v2685
    %v2687 = vpop.f32.mrf.mxu0
    %v2688 = vpop.f32.mrf.mxu0
    %v2689 = vadd.f32 %v2505, %v2688
    %v2690 = vpop.f32.mrf.mxu0
    %2691 = vmatprep.mubr.bf16.mxu0 0
    %2692 = vmatmul.mubr.bf16.gmra.mxu0 %v2562
    %v2693 = vpop.f32.mrf.mxu0
    %v2694 = vadd.f32 %v2505, %v2693
    %v2695 = vpop.f32.mrf.mxu0
    %v2696 = vpop.f32.mrf.mxu0
    %v2697 = vadd.f32 %v2505, %v2696
    %v2698 = vpop.f32.mrf.mxu0
    %2699 = vmatprep.mubr.bf16.mxu0 0
    %2700 = vmatmul.mubr.bf16.gmra.mxu0 %v2565
    %v2701 = vpop.f32.mrf.mxu0
    %v2702 = vadd.f32 %v2505, %v2701
    %v2703 = vpop.f32.mrf.mxu0
    %v2704 = vpop.f32.mrf.mxu0
    %v2705 = vadd.f32 %v2505, %v2704
    %v2706 = vpop.f32.mrf.mxu0
    %2707 = vmatprep.mubr.bf16.mxu0 0
    %2708 = vmatmul.mubr.bf16.gmra.mxu0 %v2568
    %v2709 = vpop.f32.mrf.mxu0
    %v2710 = vadd.f32 %v2505, %v2709
    %v2711 = vpop.f32.mrf.mxu0
    %v2712 = vpop.f32.mrf.mxu0
    %v2713 = vadd.f32 %v2505, %v2712
    %v2714 = vpop.f32.mrf.mxu0
    %2715 = vmatprep.mubr.bf16.mxu0 0
    %2716 = vmatmul.mubr.bf16.gmra.mxu0 %v2571
    %v2717 = vpop.f32.mrf.mxu0
    %v2718 = vadd.f32 %v2505, %v2717
    %v2719 = vpop.f32.mrf.mxu0
    %v2720 = vpop.f32.mrf.mxu0
    %v2721 = vadd.f32 %v2505, %v2720
    %v2722 = vpop.f32.mrf.mxu0
    %2723 = vmatprep.mubr.bf16.mxu0 0
    %2724 = vmatmul.mubr.bf16.gmra.mxu0 %v2574
    %v2725 = vpop.f32.mrf.mxu0
    %v2726 = vadd.f32 %v2505, %v2725
    %v2727 = vpop.f32.mrf.mxu0
    %v2728 = vpop.f32.mrf.mxu0
    %v2729 = vadd.f32 %v2505, %v2728
    %v2730 = vpop.f32.mrf.mxu0
    %2731 = vmatprep.mubr.bf16.mxu0 0
    %2732 = vmatmul.mubr.bf16.gmra.mxu0 %v2577
    %v2733 = vpop.f32.mrf.mxu0
    %v2734 = vadd.f32 %v2505, %v2733
    %v2735 = vpop.f32.mrf.mxu0
    %v2736 = vpop.f32.mrf.mxu0
    %v2737 = vadd.f32 %v2505, %v2736
    %v2738 = vpop.f32.mrf.mxu0
    %2739 = vdwg.mxu0
    %v2740 = vmax.f32 %v2614, 0.0
    %v2741 = vmax.f32 %v2617, 0.0
    %v2742 = vmax.f32 %v2622, 0.0
    %v2743 = vmax.f32 %v2625, 0.0
    %v2744 = vmax.f32 %v2630, 0.0
    %v2745 = vmax.f32 %v2633, 0.0
    %v2746 = vmax.f32 %v2638, 0.0
    %v2747 = vmax.f32 %v2641, 0.0
    %v2748 = vmax.f32 %v2646, 0.0
    %v2749 = vmax.f32 %v2649, 0.0
    %v2750 = vmax.f32 %v2654, 0.0
    %v2751 = vmax.f32 %v2657, 0.0
    %v2752 = vmax.f32 %v2662, 0.0
    %v2753 = vmax.f32 %v2665, 0.0
    %v2754 = vmax.f32 %v2670, 0.0
    %v2755 = vmax.f32 %v2673, 0.0
    %v2756 = vmax.f32 %v2678, 0.0
    %v2757 = vmax.f32 %v2681, 0.0
    %v2758 = vmax.f32 %v2686, 0.0
    %v2759 = vmax.f32 %v2689, 0.0
    %v2760 = vmax.f32 %v2694, 0.0
    %v2761 = vmax.f32 %v2697, 0.0
    %v2762 = vmax.f32 %v2702, 0.0
    %v2763 = vmax.f32 %v2705, 0.0
    %v2764 = vmax.f32 %v2710, 0.0
    %v2765 = vmax.f32 %v2713, 0.0
    %v2766 = vmax.f32 %v2718, 0.0
    %v2767 = vmax.f32 %v2721, 0.0
    %v2768 = vmax.f32 %v2726, 0.0
    %v2769 = vmax.f32 %v2729, 0.0
    %v2770 = vmax.f32 %v2734, 0.0
    %v2771 = vmax.f32 %v2737, 0.0
    %v2772 = vpack.c.bf16 %v2741, %v2740
    %v2773 = vpack.c.bf16 %v2743, %v2742
    %v2774 = vpack.c.bf16 %v2745, %v2744
    %v2775 = vpack.c.bf16 %v2747, %v2746
    %v2776 = vpack.c.bf16 %v2749, %v2748
    %v2777 = vpack.c.bf16 %v2751, %v2750
    %v2778 = vpack.c.bf16 %v2753, %v2752
    %v2779 = vpack.c.bf16 %v2755, %v2754
    %v2780 = vpack.c.bf16 %v2757, %v2756
    %v2781 = vpack.c.bf16 %v2759, %v2758
    %v2782 = vpack.c.bf16 %v2761, %v2760
    %v2783 = vpack.c.bf16 %v2763, %v2762
    %v2784 = vpack.c.bf16 %v2765, %v2764
    %v2785 = vpack.c.bf16 %v2767, %v2766
    %v2786 = vpack.c.bf16 %v2769, %v2768
    %v2787 = vpack.c.bf16 %v2771, %v2770
    %v2788 = vld [vmem:[#allocation13] sm:$0xff]
    %v2789 = vld [vmem:[#allocation13 + $0x8] sm:$0xff]
    %v2790 = vld [vmem:[#allocation13 + $0x10] sm:$0xff]
    %v2791 = vld [vmem:[#allocation13 + $0x18] sm:$0xff]
    %v2792 = vld [vmem:[#allocation13 + $0x20] sm:$0xff]
    %v2793 = vld [vmem:[#allocation13 + $0x28] sm:$0xff]
    %v2794 = vld [vmem:[#allocation13 + $0x30] sm:$0xff]
    %v2795 = vld [vmem:[#allocation13 + $0x38] sm:$0xff]
    %v2796 = vld [vmem:[#allocation13 + $0x40] sm:$0xff]
    %v2797 = vld [vmem:[#allocation13 + $0x48] sm:$0xff]
    %v2798 = vld [vmem:[#allocation13 + $0x50] sm:$0xff]
    %v2799 = vld [vmem:[#allocation13 + $0x58] sm:$0xff]
    %v2800 = vld [vmem:[#allocation13 + $0x60] sm:$0xff]
    %v2801 = vld [vmem:[#allocation13 + $0x68] sm:$0xff]
    %v2802 = vld [vmem:[#allocation13 + $0x70] sm:$0xff]
    %v2803 = vld [vmem:[#allocation13 + $0x78] sm:$0xff]
    %v2804 = vld [vmem:[%s19] sm:$0x3]
    %v2806 = vlaneseq
    %v2807 = vshrl.u32 %v2806, 7
    %v2808 = vsub.s32 0, %v2807
    %v2809 = vrot.slane %v2804, %v2808
    %v2810 = vlaneseq
    %v2811 = vshrl.u32 %v2810, 7
    %v2812 = vsub.s32 1, %v2811
    %v2813 = vrot.slane %v2804, %v2812
    %v2832 = vunpack.c.l.b16 %v2788
    %v2833 = vunpack.c.h.b16 %v2788
    %v2834 = vunpack.c.l.b16 %v2789
    %v2835 = vunpack.c.h.b16 %v2789
    %v2836 = vunpack.c.l.b16 %v2790
    %v2837 = vunpack.c.h.b16 %v2790
    %v2838 = vunpack.c.l.b16 %v2791
    %v2839 = vunpack.c.h.b16 %v2791
    %v2840 = vunpack.c.l.b16 %v2792
    %v2841 = vunpack.c.h.b16 %v2792
    %v2842 = vunpack.c.l.b16 %v2793
    %v2843 = vunpack.c.h.b16 %v2793
    %v2844 = vunpack.c.l.b16 %v2794
    %v2845 = vunpack.c.h.b16 %v2794
    %v2846 = vunpack.c.l.b16 %v2795
    %v2847 = vunpack.c.h.b16 %v2795
    %v2848 = vunpack.c.l.b16 %v2796
    %v2849 = vunpack.c.h.b16 %v2796
    %v2850 = vunpack.c.l.b16 %v2797
    %v2851 = vunpack.c.h.b16 %v2797
    %v2852 = vunpack.c.l.b16 %v2798
    %v2853 = vunpack.c.h.b16 %v2798
    %v2854 = vunpack.c.l.b16 %v2799
    %v2855 = vunpack.c.h.b16 %v2799
    %v2856 = vunpack.c.l.b16 %v2800
    %v2857 = vunpack.c.h.b16 %v2800
    %v2858 = vunpack.c.l.b16 %v2801
    %v2859 = vunpack.c.h.b16 %v2801
    %v2860 = vunpack.c.l.b16 %v2802
    %v2861 = vunpack.c.h.b16 %v2802
    %v2862 = vunpack.c.l.b16 %v2803
    %v2863 = vunpack.c.h.b16 %v2803
    %v2864 = vpack.c.b16 %v2834, %v2832
    %v2865 = vpack.c.b16 %v2835, %v2833
    %v2866 = vpack.c.b16 %v2838, %v2836
    %v2867 = vpack.c.b16 %v2839, %v2837
    %v2868 = vpack.c.b16 %v2842, %v2840
    %v2869 = vpack.c.b16 %v2843, %v2841
    %v2870 = vpack.c.b16 %v2846, %v2844
    %v2871 = vpack.c.b16 %v2847, %v2845
    %v2872 = vpack.c.b16 %v2850, %v2848
    %v2873 = vpack.c.b16 %v2851, %v2849
    %v2874 = vpack.c.b16 %v2854, %v2852
    %v2875 = vpack.c.b16 %v2855, %v2853
    %v2876 = vpack.c.b16 %v2858, %v2856
    %v2877 = vpack.c.b16 %v2859, %v2857
    %v2878 = vpack.c.b16 %v2862, %v2860
    %v2879 = vpack.c.b16 %v2863, %v2861
    %2896 = vmatprep.subr.bf16.mxu0 %v2879
    %2897 = vmatpush1.bf16.msra.mxu0 %v2878
    %2898 = vmatprep.subr.bf16.mxu0 %v2877
    %2899 = vmatpush1.bf16.msra.mxu0 %v2876
    %2900 = vmatprep.subr.bf16.mxu0 %v2875
    %2901 = vmatpush1.bf16.msra.mxu0 %v2874
    %2902 = vmatprep.subr.bf16.mxu0 %v2873
    %2903 = vmatpush1.bf16.msra.mxu0 %v2872
    %2904 = vmatprep.subr.bf16.mxu0 %v2871
    %2905 = vmatpush1.bf16.msra.mxu0 %v2870
    %2906 = vmatprep.subr.bf16.mxu0 %v2869
    %2907 = vmatpush1.bf16.msra.mxu0 %v2868
    %2908 = vmatprep.subr.bf16.mxu0 %v2867
    %2909 = vmatpush1.bf16.msra.mxu0 %v2866
    %2910 = vmatprep.subr.bf16.mxu0 %v2865
    %2911 = vmatpush1.bf16.msra.mxu0 %v2864
    %2912 = vmatprep.subr.bf16.mxu0 0
    %2913 = vmatpush2.bf16.msra.mxu0 0
    %2914 = vmatprep.subr.bf16.mxu0 0
    %2915 = vmatpush2.bf16.msra.mxu0 0
    %2916 = vmatprep.subr.bf16.mxu0 0
    %2917 = vmatpush2.bf16.msra.mxu0 0
    %2918 = vmatprep.subr.bf16.mxu0 0
    %2919 = vmatpush2.bf16.msra.mxu0 0
    %2920 = vmatprep.subr.bf16.mxu0 0
    %2921 = vmatpush2.bf16.msra.mxu0 0
    %2922 = vmatprep.subr.bf16.mxu0 0
    %2923 = vmatpush2.bf16.msra.mxu0 0
    %2924 = vmatprep.subr.bf16.mxu0 0
    %2925 = vmatpush2.bf16.msra.mxu0 0
    %2926 = vmatprep.subr.bf16.mxu0 0
    %2927 = vmatpush2.bf16.msra.mxu0 0
    %2928 = vmatprep.mubr.bf16.mxu0 0
    %2929 = vmatmul.mubr.bf16.gmra.mxu0 %v2772
    %v2930 = vpop.f32.mrf.mxu0
    %v2931 = vadd.f32 %v2809, %v2930
    %v2932 = vpop.f32.mrf.mxu0
    %v2933 = vadd.f32 %v2813, %v2932
    %v2934 = vpop.f32.mrf.mxu0
    %v2935 = vadd.f32 %v2809, %v2934
    %v2936 = vpop.f32.mrf.mxu0
    %v2937 = vadd.f32 %v2813, %v2936
    %2938 = vmatprep.mubr.bf16.mxu0 0
    %2939 = vmatmul.mubr.bf16.gmra.mxu0 %v2773
    %v2940 = vpop.f32.mrf.mxu0
    %v2941 = vadd.f32 %v2809, %v2940
    %v2942 = vpop.f32.mrf.mxu0
    %v2943 = vadd.f32 %v2813, %v2942
    %v2944 = vpop.f32.mrf.mxu0
    %v2945 = vadd.f32 %v2809, %v2944
    %v2946 = vpop.f32.mrf.mxu0
    %v2947 = vadd.f32 %v2813, %v2946
    %2948 = vmatprep.mubr.bf16.mxu0 0
    %2949 = vmatmul.mubr.bf16.gmra.mxu0 %v2774
    %v2950 = vpop.f32.mrf.mxu0
    %v2951 = vadd.f32 %v2809, %v2950
    %v2952 = vpop.f32.mrf.mxu0
    %v2953 = vadd.f32 %v2813, %v2952
    %v2954 = vpop.f32.mrf.mxu0
    %v2955 = vadd.f32 %v2809, %v2954
    %v2956 = vpop.f32.mrf.mxu0
    %v2957 = vadd.f32 %v2813, %v2956
    %2958 = vmatprep.mubr.bf16.mxu0 0
    %2959 = vmatmul.mubr.bf16.gmra.mxu0 %v2775
    %v2960 = vpop.f32.mrf.mxu0
    %v2961 = vadd.f32 %v2809, %v2960
    %v2962 = vpop.f32.mrf.mxu0
    %v2963 = vadd.f32 %v2813, %v2962
    %v2964 = vpop.f32.mrf.mxu0
    %v2965 = vadd.f32 %v2809, %v2964
    %v2966 = vpop.f32.mrf.mxu0
    %v2967 = vadd.f32 %v2813, %v2966
    %2968 = vmatprep.mubr.bf16.mxu0 0
    %2969 = vmatmul.mubr.bf16.gmra.mxu0 %v2776
    %v2970 = vpop.f32.mrf.mxu0
    %v2971 = vadd.f32 %v2809, %v2970
    %v2972 = vpop.f32.mrf.mxu0
    %v2973 = vadd.f32 %v2813, %v2972
    %v2974 = vpop.f32.mrf.mxu0
    %v2975 = vadd.f32 %v2809, %v2974
    %v2976 = vpop.f32.mrf.mxu0
    %v2977 = vadd.f32 %v2813, %v2976
    %2978 = vmatprep.mubr.bf16.mxu0 0
    %2979 = vmatmul.mubr.bf16.gmra.mxu0 %v2777
    %v2980 = vpop.f32.mrf.mxu0
    %v2981 = vadd.f32 %v2809, %v2980
    %v2982 = vpop.f32.mrf.mxu0
    %v2983 = vadd.f32 %v2813, %v2982
    %v2984 = vpop.f32.mrf.mxu0
    %v2985 = vadd.f32 %v2809, %v2984
    %v2986 = vpop.f32.mrf.mxu0
    %v2987 = vadd.f32 %v2813, %v2986
    %2988 = vmatprep.mubr.bf16.mxu0 0
    %2989 = vmatmul.mubr.bf16.gmra.mxu0 %v2778
    %v2990 = vpop.f32.mrf.mxu0
    %v2991 = vadd.f32 %v2809, %v2990
    %v2992 = vpop.f32.mrf.mxu0
    %v2993 = vadd.f32 %v2813, %v2992
    %v2994 = vpop.f32.mrf.mxu0
    %v2995 = vadd.f32 %v2809, %v2994
    %v2996 = vpop.f32.mrf.mxu0
    %v2997 = vadd.f32 %v2813, %v2996
    %2998 = vmatprep.mubr.bf16.mxu0 0
    %2999 = vmatmul.mubr.bf16.gmra.mxu0 %v2779
    %v3000 = vpop.f32.mrf.mxu0
    %v3001 = vadd.f32 %v2809, %v3000
    %v3002 = vpop.f32.mrf.mxu0
    %v3003 = vadd.f32 %v2813, %v3002
    %v3004 = vpop.f32.mrf.mxu0
    %v3005 = vadd.f32 %v2809, %v3004
    %v3006 = vpop.f32.mrf.mxu0
    %v3007 = vadd.f32 %v2813, %v3006
    %3008 = vmatprep.mubr.bf16.mxu0 0
    %3009 = vmatmul.mubr.bf16.gmra.mxu0 %v2780
    %v3010 = vpop.f32.mrf.mxu0
    %v3011 = vadd.f32 %v2809, %v3010
    %v3012 = vpop.f32.mrf.mxu0
    %v3013 = vadd.f32 %v2813, %v3012
    %v3014 = vpop.f32.mrf.mxu0
    %v3015 = vadd.f32 %v2809, %v3014
    %v3016 = vpop.f32.mrf.mxu0
    %v3017 = vadd.f32 %v2813, %v3016
    %3018 = vmatprep.mubr.bf16.mxu0 0
    %3019 = vmatmul.mubr.bf16.gmra.mxu0 %v2781
    %v3020 = vpop.f32.mrf.mxu0
    %v3021 = vadd.f32 %v2809, %v3020
    %v3022 = vpop.f32.mrf.mxu0
    %v3023 = vadd.f32 %v2813, %v3022
    %v3024 = vpop.f32.mrf.mxu0
    %v3025 = vadd.f32 %v2809, %v3024
    %v3026 = vpop.f32.mrf.mxu0
    %v3027 = vadd.f32 %v2813, %v3026
    %3028 = vmatprep.mubr.bf16.mxu0 0
    %3029 = vmatmul.mubr.bf16.gmra.mxu0 %v2782
    %v3030 = vpop.f32.mrf.mxu0
    %v3031 = vadd.f32 %v2809, %v3030
    %v3032 = vpop.f32.mrf.mxu0
    %v3033 = vadd.f32 %v2813, %v3032
    %v3034 = vpop.f32.mrf.mxu0
    %v3035 = vadd.f32 %v2809, %v3034
    %v3036 = vpop.f32.mrf.mxu0
    %v3037 = vadd.f32 %v2813, %v3036
    %3038 = vmatprep.mubr.bf16.mxu0 0
    %3039 = vmatmul.mubr.bf16.gmra.mxu0 %v2783
    %v3040 = vpop.f32.mrf.mxu0
    %v3041 = vadd.f32 %v2809, %v3040
    %v3042 = vpop.f32.mrf.mxu0
    %v3043 = vadd.f32 %v2813, %v3042
    %v3044 = vpop.f32.mrf.mxu0
    %v3045 = vadd.f32 %v2809, %v3044
    %v3046 = vpop.f32.mrf.mxu0
    %v3047 = vadd.f32 %v2813, %v3046
    %3048 = vmatprep.mubr.bf16.mxu0 0
    %3049 = vmatmul.mubr.bf16.gmra.mxu0 %v2784
    %v3050 = vpop.f32.mrf.mxu0
    %v3051 = vadd.f32 %v2809, %v3050
    %v3052 = vpop.f32.mrf.mxu0
    %v3053 = vadd.f32 %v2813, %v3052
    %v3054 = vpop.f32.mrf.mxu0
    %v3055 = vadd.f32 %v2809, %v3054
    %v3056 = vpop.f32.mrf.mxu0
    %v3057 = vadd.f32 %v2813, %v3056
    %3058 = vmatprep.mubr.bf16.mxu0 0
    %3059 = vmatmul.mubr.bf16.gmra.mxu0 %v2785
    %v3060 = vpop.f32.mrf.mxu0
    %v3061 = vadd.f32 %v2809, %v3060
    %v3062 = vpop.f32.mrf.mxu0
    %v3063 = vadd.f32 %v2813, %v3062
    %v3064 = vpop.f32.mrf.mxu0
    %v3065 = vadd.f32 %v2809, %v3064
    %v3066 = vpop.f32.mrf.mxu0
    %v3067 = vadd.f32 %v2813, %v3066
    %3068 = vmatprep.mubr.bf16.mxu0 0
    %3069 = vmatmul.mubr.bf16.gmra.mxu0 %v2786
    %v3070 = vpop.f32.mrf.mxu0
    %v3071 = vadd.f32 %v2809, %v3070
    %v3072 = vpop.f32.mrf.mxu0
    %v3073 = vadd.f32 %v2813, %v3072
    %v3074 = vpop.f32.mrf.mxu0
    %v3075 = vadd.f32 %v2809, %v3074
    %v3076 = vpop.f32.mrf.mxu0
    %v3077 = vadd.f32 %v2813, %v3076
    %3078 = vmatprep.mubr.bf16.mxu0 0
    %3079 = vmatmul.mubr.bf16.gmra.mxu0 %v2787
    %v3080 = vpop.f32.mrf.mxu0
    %v3081 = vadd.f32 %v2809, %v3080
    %v3082 = vpop.f32.mrf.mxu0
    %v3083 = vadd.f32 %v2813, %v3082
    %v3084 = vpop.f32.mrf.mxu0
    %v3085 = vadd.f32 %v2809, %v3084
    %v3086 = vpop.f32.mrf.mxu0
    %v3087 = vadd.f32 %v2813, %v3086
    %3088 = vdwg.mxu0
    %v3089 = vmax.f32 %v2931, %v2935
    %v3090 = vmax.f32 %v3089, %v2941
    %v3091 = vmax.f32 %v3090, %v2945
    %v3092 = vmax.f32 %v3091, %v2951
    %v3093 = vmax.f32 %v3092, %v2955
    %v3094 = vmax.f32 %v3093, %v2961
    %v3095 = vmax.f32 %v3094, %v2965
    %v3096 = vmax.f32 %v3095, %v2971
    %v3097 = vmax.f32 %v3096, %v2975
    %v3098 = vmax.f32 %v3097, %v2981
    %v3099 = vmax.f32 %v3098, %v2985
    %v3100 = vmax.f32 %v3099, %v2991
    %v3101 = vmax.f32 %v3100, %v2995
    %v3102 = vmax.f32 %v3101, %v3001
    %v3103 = vmax.f32 %v3102, %v3005
    %v3104 = vrot.slane %v3103, 4
    %v3105 = vmax.f32 %v3103, %v3104
    %v3106 = vrot.slane %v3105, 2
    %v3107 = vmax.f32 %v3105, %v3106
    %v3108 = vrot.slane %v3107, 1
    %v3109 = vmax.f32 %v3107, %v3108
    %v3110 = vmax.f32 %v2933, %v2937
    %v3111 = vmax.f32 %v3110, %v2943
    %v3112 = vmax.f32 %v3111, %v2947
    %v3113 = vmax.f32 %v3112, %v2953
    %v3114 = vmax.f32 %v3113, %v2957
    %v3115 = vmax.f32 %v3114, %v2963
    %v3116 = vmax.f32 %v3115, %v2967
    %v3117 = vmax.f32 %v3116, %v2973
    %v3118 = vmax.f32 %v3117, %v2977
    %v3119 = vmax.f32 %v3118, %v2983
    %v3120 = vmax.f32 %v3119, %v2987
    %v3121 = vmax.f32 %v3120, %v2993
    %v3122 = vmax.f32 %v3121, %v2997
    %v3123 = vmax.f32 %v3122, %v3003
    %v3124 = vmax.f32 %v3123, %v3007
    %v3125 = vrot.slane %v3124, 4
    %v3126 = vmax.f32 %v3124, %v3125
    %v3127 = vrot.slane %v3126, 2
    %v3128 = vmax.f32 %v3126, %v3127
    %v3129 = vrot.slane %v3128, 1
    %v3130 = vmax.f32 %v3128, %v3129
    %v3131 = vmax.f32 %v3011, %v3015
    %v3132 = vmax.f32 %v3131, %v3021
    %v3133 = vmax.f32 %v3132, %v3025
    %v3134 = vmax.f32 %v3133, %v3031
    %v3135 = vmax.f32 %v3134, %v3035
    %v3136 = vmax.f32 %v3135, %v3041
    %v3137 = vmax.f32 %v3136, %v3045
    %v3138 = vmax.f32 %v3137, %v3051
    %v3139 = vmax.f32 %v3138, %v3055
    %v3140 = vmax.f32 %v3139, %v3061
    %v3141 = vmax.f32 %v3140, %v3065
    %v3142 = vmax.f32 %v3141, %v3071
    %v3143 = vmax.f32 %v3142, %v3075
    %v3144 = vmax.f32 %v3143, %v3081
    %v3145 = vmax.f32 %v3144, %v3085
    %v3146 = vrot.slane %v3145, 4
    %v3147 = vmax.f32 %v3145, %v3146
    %v3148 = vrot.slane %v3147, 2
    %v3149 = vmax.f32 %v3147, %v3148
    %v3150 = vrot.slane %v3149, 1
    %v3151 = vmax.f32 %v3149, %v3150
    %v3152 = vmax.f32 %v3013, %v3017
    %v3153 = vmax.f32 %v3152, %v3023
    %v3154 = vmax.f32 %v3153, %v3027
    %v3155 = vmax.f32 %v3154, %v3033
    %v3156 = vmax.f32 %v3155, %v3037
    %v3157 = vmax.f32 %v3156, %v3043
    %v3158 = vmax.f32 %v3157, %v3047
    %v3159 = vmax.f32 %v3158, %v3053
    %v3160 = vmax.f32 %v3159, %v3057
    %v3161 = vmax.f32 %v3160, %v3063
    %v3162 = vmax.f32 %v3161, %v3067
    %v3163 = vmax.f32 %v3162, %v3073
    %v3164 = vmax.f32 %v3163, %v3077
    %v3165 = vmax.f32 %v3164, %v3083
    %v3166 = vmax.f32 %v3165, %v3087
    %v3167 = vrot.slane %v3166, 4
    %v3168 = vmax.f32 %v3166, %v3167
    %v3169 = vrot.slane %v3168, 2
    %v3170 = vmax.f32 %v3168, %v3169
    %v3171 = vrot.slane %v3170, 1
    %v3172 = vmax.f32 %v3170, %v3171
    %v3177 = vcombine.low %v3109, %v3130
    %v3179 = vunpack.c.l.s4 1983009808
    %v3180 = vunpack.c.0.s8 %v3179
    %v3181 = vlaneseq
    %v3182 = vshrl.u32 %v3181, 7
    %v3183 = vsub.s32 %v3180, %v3182
    %v3184 = vrot.slane %v3177, %v3183
    %v3185 = vcombine.low %v3151, %v3172
    %v3187 = vunpack.c.l.s4 1983009808
    %v3188 = vunpack.c.0.s8 %v3187
    %v3189 = vlaneseq
    %v3190 = vshrl.u32 %v3189, 7
    %v3191 = vsub.s32 %v3188, %v3190
    %v3192 = vrot.slane %v3185, %v3191
    %vm3193 = vcmask 1044484
    %v3194 = vsel %vm3193, %v3184, %v3184
    %vm3195 = vcmask 1046534
    %v3196 = vsel %vm3195, %v3184, %v3194
    %v3197 = vrot.slane %v3192, 7
    %v3198 = vsel %vm1656, %v3197, %v3196
    %vm3199 = vcmask 1043459
    %v3200 = vsel %vm3199, %v3197, %v3198
    %vm3201 = vcmask 1045509
    %v3202 = vsel %vm3201, %v3197, %v3200
    %vm3203 = vcmask 1047559
    %v3204 = vsel %vm3203, %v3197, %v3202
    %3206 = vst [vmem:[#allocation14] sm:$0xf] %v3204
    // Predicated region
    $region110: #{pointnetfeat_forward.1} parent=1 // pred_check
      _
    $region111: #{pointnetfeat_forward.1} parent=1 // pred_check_branch
      %3208 = sbr.rel (0) target = $region113
    $region112: #{pointnetfeat_forward.1} parent=1 // pred_region
      _
    $region113: #{pointnetfeat_forward.1} parent=1 // pred_fallthru
      _
    // Predicated region
    $region114: #{pointnetfeat_forward.1} parent=1 // pred_check
      _
    $region115: #{pointnetfeat_forward.1} parent=1 // pred_check_branch
      %3210 = sbr.rel (0) target = $region117
    $region116: #{pointnetfeat_forward.1} parent=1 // pred_region
      %s3212 = ssub.s32 64, 64
      %3213 = vsyncadd [#allocation4], %s3212
      %s3215 = sshll.u32 [#allocation14], 4
      %s3216 = int_to_ptr.vmem [resolvable:$true] %s3215
      %3218 = dma.vmem_to_hbm [thread:$0]  %s3216, 64, %s21, [#allocation4]
    $region117: #{pointnetfeat_forward.1} parent=1 // pred_fallthru
      _
    // Predicated region
    $region118: #{pointnetfeat_forward.1} parent=1 // pred_check
      _
    $region119: #{pointnetfeat_forward.1} parent=1 // pred_check_branch
      %3220 = sbr.rel (0) target = $region121
    $region120: #{pointnetfeat_forward.1} parent=1 // pred_region
      _
    $region121: #{pointnetfeat_forward.1} parent=1 // pred_fallthru
      _
    // Predicated region
    $region122: #{pointnetfeat_forward.1} parent=1 // pred_check
      _
    $region123: #{pointnetfeat_forward.1} parent=1 // pred_check_branch
      %3222 = sbr.rel (0) target = $region125
    $region124: #{pointnetfeat_forward.1} parent=1 // pred_region
      %3223 = dma.done [#allocation4], 64
    $region125: #{pointnetfeat_forward.1} parent=1 // pred_fallthru
      _
    %3224 = vsyncpa [#allocation3], 1
    %3225 = vsyncpa [#allocation6], 1
    %3226 = vsyncpa [#allocation9], 1
    %3227 = vsyncpa [#allocation12], 1
    %3228 = vsyncpa [#allocation4], 1

</llo_original>
